<compile_context>
chip_gen: v7x
topology: tpu7x:2x2x1
jax: 0.10.0
libtpu: 0.0.40
codegen_flags: <defaults>
</compile_context>

<pallas_src>
import functools

import jax
import jax.numpy as jnp
from jax import lax
from jax.experimental import pallas as pl
from jax.experimental.pallas import tpu as pltpu

_LANE = 128
_SUBLANE = 8


def _round_up(x, m):
    return (x + m - 1) // m * m


def _cdiv(a, b):
    return (a + b - 1) // b


def _conv_bn_relu_kernel(x_ref, w_ref, b_ref, o_ref, *scratch, kh_size, kw_size,
                         dilation, th, w_out_pad, tcin, n_ci, slice_cin):
    """One (batch, cout-tile, h-tile, cin-tile) grid step.

    x_ref:  (1, TH_in, W_in, TCin)    halo'd input row slab (compute dtype)
    w_ref:  (KH, KW, Cin_blk, TCo)    BN-scale-folded conv weights; Cin_blk is either
                                      TCin (streamed) or the full padded Cin (resident,
                                      sliced per-ci with pl.ds when slice_cin=True)
    b_ref:  (1, TCo)                  folded BN bias (f32)
    o_ref:  (1, TH, W_out_pad, TCo)   output tile
    scratch: optional (TH*W_out_pad, TCo) f32 accumulator (only when n_ci > 1)
    """
    ci = pl.program_id(3)

    # Statically-unrolled loop over kernel taps; each tap is a
    # (TH*W_out_pad, TCin) x (TCin, TCo) matmul on the MXU, summed locally in f32.
    acc = None
    for kh in range(kh_size):
        for kw in range(kw_size):
            # w_out_pad is a multiple of 8 -> merge-reshape is layout preserving.
            patch = x_ref[0,
                          kh * dilation: kh * dilation + th,
                          kw * dilation: kw * dilation + w_out_pad, :]
            lhs = patch.reshape(th * w_out_pad, tcin)
            if slice_cin:
                start = pl.multiple_of(ci * tcin, tcin)
                w_tap = w_ref[kh, kw, pl.ds(start, tcin), :]
            else:
                w_tap = w_ref[kh, kw]
            tap = jnp.dot(lhs, w_tap, preferred_element_type=jnp.float32)
            acc = tap if acc is None else acc + tap

    def _epilogue(total):
        y = jnp.maximum(total + b_ref[...], 0.0)          # folded BN bias + ReLU
        o_ref[0] = y.reshape(th, w_out_pad, -1).astype(o_ref.dtype)

    if n_ci == 1:
        # No Cin reduction across grid steps: write the output directly, no scratch.
        _epilogue(acc)
    else:
        acc_ref = scratch[0]

        @pl.when(ci == 0)
        def _():
            acc_ref[...] = acc                            # first tile writes (no zero-init)

        @pl.when(jnp.logical_and(ci > 0, ci < n_ci - 1))
        def _():
            acc_ref[...] = acc_ref[...] + acc             # single RMW per grid step

        @pl.when(ci == n_ci - 1)
        def _():
            _epilogue(acc_ref[...] + acc)


def _vmem_capacity_bytes():
    try:
        info = pltpu.get_tpu_info()
        return int(getattr(info, "vmem_capacity_bytes", 128 * 1024 * 1024))
    except Exception:
        return 128 * 1024 * 1024


def basic_conv2d(x_nchw, weight, bn_gamma, bn_beta, bn_mean, bn_var, *,
                 stride=1, padding=0, dilation=1, eps=1e-5,
                 compute_dtype=jnp.bfloat16):
    """Forward pass of BasicConv2d (eval-mode BatchNorm).

    x_nchw: (N, Cin, H, W);  weight: (Cout, Cin, KH, KW);  bn_*: (Cout,)
    Returns (N, Cout, H_out, W_out) in x's dtype.
    """
    if stride != 1:
        # TODO(synk): stride > 1 not implemented (ASPP's BasicConv2d uses stride=1).
        raise NotImplementedError("stride must be 1")

    n, c_in, h, w = x_nchw.shape
    c_out, _, kh_size, kw_size = weight.shape
    out_dtype = x_nchw.dtype

    halo_h = dilation * (kh_size - 1)
    halo_w = dilation * (kw_size - 1)
    h_out = h + 2 * padding - halo_h
    w_out = w + 2 * padding - halo_w
    assert h_out > 0 and w_out > 0, "invalid conv geometry"

    # ---- tile selection: lane-dense channel tiles, sublane-aligned output width ----
    c_in_pad = _round_up(c_in, _LANE)
    c_out_pad = _round_up(c_out, _LANE)
    tcin = 256 if c_in_pad % 256 == 0 else _LANE
    tco = 256 if c_out_pad % 256 == 0 else _LANE
    n_ci = c_in_pad // tcin
    n_co = c_out_pad // tco

    w_out_pad = _round_up(w_out, _SUBLANE)     # free merge-reshape in the kernel
    w_in_full = w_out_pad + halo_w             # slab width incl. halo

    cbytes = jnp.dtype(compute_dtype).itemsize
    obytes = jnp.dtype(out_dtype).itemsize

    # ---- generation-aware VMEM budget, weight residency, row-slab height ----
    vmem_cap = _vmem_capacity_bytes()
    vmem_limit = int(vmem_cap * 0.75)          # headroom for double-buffering / compiler scratch
    usable = int(vmem_limit * 0.70)            # tile-sizing budget

    w_full_bytes = kh_size * kw_size * c_in_pad * tco * cbytes
    weights_resident = (2 * w_full_bytes) <= (usable // 3)
    w_cin_blk = c_in_pad if weights_resident else tcin

    def step_bytes(th_):
        th_in_ = th_ + halo_h
        xb = 2 * th_in_ * w_in_full * tcin * cbytes                       # x slab, 2 bufs
        wb = 2 * kh_size * kw_size * w_cin_blk * tco * cbytes             # weights, 2 bufs
        ob = 2 * th_ * w_out_pad * tco * obytes                           # output, 2 bufs
        accb = th_ * w_out_pad * tco * 4 * (3 if n_ci > 1 else 2)         # local acc/temps (+scratch)
        return xb + wb + ob + accb + (128 << 10)

    n_ht = 1
    while True:
        th = _cdiv(h_out, n_ht)
        if step_bytes(th) <= usable or th == 1:
            break
        n_ht += 1
    # v7x (<=64 MiB VMEM, 2 TensorCores): keep the parallel grid extent even so both
    # cores get balanced work.  No effect on 1-TC generations (cap > 64 MiB).
    if vmem_cap <= 64 * 1024 * 1024 and (n * n_co * n_ht) % 2 == 1 and n_ht < h_out:
        n_ht += 1
        th = _cdiv(h_out, n_ht)
    h_out_pad = n_ht * th
    th_in = th + halo_h

    # ---- host-side prep: BN folding, layout, channel/width padding, halo'd slabs ----
    inv_std = lax.rsqrt(bn_var.astype(jnp.float32) + eps)
    scale = bn_gamma.astype(jnp.float32) * inv_std                        # (Cout,)
    bias = bn_beta.astype(jnp.float32) - bn_mean.astype(jnp.float32) * scale

    # Fold BN scale into the conv weights once (f32) -> kernel epilogue is `+bias, ReLU`.
    w_hwio = jnp.transpose(weight, (2, 3, 1, 0)).astype(jnp.float32)      # (KH,KW,Cin,Cout)
    w_hwio = w_hwio * scale[None, None, None, :]
    w_p = jnp.pad(w_hwio, ((0, 0), (0, 0),
                           (0, c_in_pad - c_in), (0, c_out_pad - c_out)))
    w_p = w_p.astype(compute_dtype)
    bias_p = jnp.pad(bias, (0, c_out_pad - c_out)).reshape(1, c_out_pad)

    # TODO(synk): these transpose/pad/slab-gather passes are wrapper-side HBM traffic;
    # fold them into the kernel (overlapping-window BlockSpec or manual DMA) eventually.
    x_nhwc = jnp.transpose(x_nchw, (0, 2, 3, 1)).astype(compute_dtype)    # NCHW -> NHWC
    x_p = jnp.pad(x_nhwc, ((0, 0),
                           (padding, padding + (h_out_pad - h_out)),
                           (padding, padding + (w_out_pad - w_out)),
                           (0, c_in_pad - c_in)))
    # Halo'd row slabs: h-tile `hi` needs padded rows [hi*TH, hi*TH + TH_in).
    row_idx = jnp.arange(n_ht)[:, None] * th + jnp.arange(th_in)[None, :]
    x_slab = x_p[:, row_idx].reshape(n * n_ht, th_in, w_in_full, c_in_pad)

    slice_cin = w_cin_blk > tcin
    kernel = functools.partial(
        _conv_bn_relu_kernel,
        kh_size=kh_size, kw_size=kw_size, dilation=dilation,
        th=th, w_out_pad=w_out_pad, tcin=tcin, n_ci=n_ci, slice_cin=slice_cin)

    if weights_resident:
        # Weight block index depends only on the cout tile -> DMA'd once per (b, co),
        # skipped across all h-tile / cin-tile steps.
        w_spec = pl.BlockSpec((kh_size, kw_size, c_in_pad, tco),
                              lambda b, co, hi, ci: (0, 0, 0, co))
    else:
        w_spec = pl.BlockSpec((kh_size, kw_size, tcin, tco),
                              lambda b, co, hi, ci: (0, 0, ci, co))

    scratch_shapes = ([pltpu.VMEM((th * w_out_pad, tco), jnp.float32)]
                      if n_ci > 1 else [])

    out_full = pl.pallas_call(
        kernel,
        out_shape=jax.ShapeDtypeStruct((n, h_out_pad, w_out_pad, c_out_pad), out_dtype),
        grid_spec=pltpu.PrefetchScalarGridSpec(
            num_scalar_prefetch=0,
            grid=(n, n_co, n_ht, n_ci),
            in_specs=[
                pl.BlockSpec((1, th_in, w_in_full, tcin),
                             lambda b, co, hi, ci: (b * n_ht + hi, 0, 0, ci)),
                w_spec,
                pl.BlockSpec((1, tco),
                             lambda b, co, hi, ci: (0, co)),
            ],
            out_specs=pl.BlockSpec((1, th, w_out_pad, tco),
                                   lambda b, co, hi, ci: (b, hi, 0, co)),
            scratch_shapes=scratch_shapes,
        ),
        compiler_params=pltpu.CompilerParams(
            # batch / cout-tile / h-tile are independent (megacore-shardable);
            # the Cin axis is the reduction and stays "arbitrary" (innermost).
            dimension_semantics=("parallel", "parallel", "parallel", "arbitrary"),
            vmem_limit_bytes=vmem_limit,
        ),
    )(x_slab, w_p, bias_p)

    out = out_full[:, :h_out, :w_out, :c_out]     # drop spatial/channel padding
    return jnp.transpose(out, (0, 3, 1, 2))       # NHWC -> NCHW


# ------------------------------- references -------------------------------

def _reference_f32(x, weight, gamma, beta, mean, var, *, stride, padding,
                   dilation, eps=1e-5):
    """Exact (f32) semantics of the PyTorch module in eval mode."""
    y = lax.conv_general_dilated(
        x, weight, window_strides=(stride, stride),
        padding=[(padding, padding), (padding, padding)],
        rhs_dilation=(dilation, dilation),
        dimension_numbers=("NCHW", "OIHW", "NCHW"),
        precision=lax.Precision.HIGHEST)
    inv_std = lax.rsqrt(var + eps)
    scale = (gamma * inv_std).reshape(1, -1, 1, 1)
    bias = (beta - mean * gamma * inv_std).reshape(1, -1, 1, 1)
    return jnp.maximum(y * scale + bias, 0.0)


def _reference_matched(x, weight, gamma, beta, mean, var, *, stride, padding,
                       dilation, eps=1e-5, compute_dtype=jnp.bfloat16):
    """Same math as the kernel's fast path: BN scale folded into weights in f32,
    operands cast to compute_dtype, conv accumulated in f32, + bias, ReLU."""
    inv_std = lax.rsqrt(var + eps)
    scale = gamma * inv_std
    bias = (beta - mean * scale).reshape(1, -1, 1, 1)
    w_folded = (weight * scale[:, None, None, None]).astype(compute_dtype)
    y = lax.conv_general_dilated(
        x.astype(compute_dtype), w_folded,
        window_strides=(stride, stride),
        padding=[(padding, padding), (padding, padding)],
        rhs_dilation=(dilation, dilation),
        dimension_numbers=("NCHW", "OIHW", "NCHW"),
        preferred_element_type=jnp.float32)
    return jnp.maximum(y + bias, 0.0)


if __name__ == "__main__":
    # BasicConv2d(in_planes=4, out_planes=8, kernel_size=3, padding=1, dilation=1)
    N, C_IN, H, W = 2, 4, 16, 16
    C_OUT, K = 8, 3
    PAD, DIL, STRIDE = 1, 1, 1

    key = jax.random.PRNGKey(0)
    kx, kw, kg, kb, km, kv = jax.random.split(key, 6)

    x = jax.random.normal(kx, (N, C_IN, H, W), dtype=jnp.float32)
    weight = jax.random.normal(kw, (C_OUT, C_IN, K, K), dtype=jnp.float32) * 0.1
    gamma = 1.0 + 0.1 * jax.random.normal(kg, (C_OUT,), dtype=jnp.float32)
    beta = 0.1 * jax.random.normal(kb, (C_OUT,), dtype=jnp.float32)
    run_mean = 0.05 * jax.random.normal(km, (C_OUT,), dtype=jnp.float32)
    run_var = jnp.abs(1.0 + 0.1 * jax.random.normal(kv, (C_OUT,), dtype=jnp.float32))

    # 1) f32-operand path vs the module's exact semantics (tolerance covers the
    #    MXU's default f32-matmul precision).
    out_f32 = basic_conv2d(x, weight, gamma, beta, run_mean, run_var,
                           stride=STRIDE, padding=PAD, dilation=DIL,
                           compute_dtype=jnp.float32)
    out_f32 = jax.block_until_ready(out_f32)
    ref_f32 = _reference_f32(x, weight, gamma, beta, run_mean, run_var,
                             stride=STRIDE, padding=PAD, dilation=DIL)
    assert out_f32.shape == (N, C_OUT, H, W)
    assert jnp.allclose(out_f32, ref_f32, atol=3e-2, rtol=3e-2), "f32 mismatch vs reference"

    # 2) Fast path (bf16 MXU operands, f32 accumulation) vs a matched-precision reference.
    out_bf16 = basic_conv2d(x, weight, gamma, beta, run_mean, run_var,
                            stride=STRIDE, padding=PAD, dilation=DIL,
                            compute_dtype=jnp.bfloat16)
    out_bf16 = jax.block_until_ready(out_bf16)
    ref_bf16 = _reference_matched(x, weight, gamma, beta, run_mean, run_var,
                                  stride=STRIDE, padding=PAD, dilation=DIL,
                                  compute_dtype=jnp.bfloat16)
    assert out_bf16.shape == (N, C_OUT, H, W)
    assert jnp.allclose(out_bf16, ref_bf16, atol=2e-3, rtol=2e-3), "bf16 mismatch vs matched reference"

    print("KERNEL_OK")
</pallas_src>

<mosaic_0001>
module attributes {stable_mosaic.version = 11 : i64} {
  func.func @_conv_bn_relu_kernel(%arg0: i32, %arg1: i32, %arg2: i32, %arg3: i32, %arg4: memref<1x18x18x128xf32, #tpu.memory_space<vmem>>, %arg5: memref<3x3x128x128xf32, #tpu.memory_space<vmem>>, %arg6: memref<1x128xf32, #tpu.memory_space<vmem>>, %arg7: memref<1x16x16x128xf32, #tpu.memory_space<vmem>>) attributes {dimension_semantics = [#tpu.dimension_semantics<parallel>, #tpu.dimension_semantics<parallel>, #tpu.dimension_semantics<parallel>, #tpu.dimension_semantics<arbitrary>], iteration_bounds = array<i64: 2, 1, 1, 1>, scalar_prefetch = 0 : i64, scratch_operands = 0 : i64, tpu.core_type = #tpu.core_type<tc>, window_params = [{transform_indices = @transform_0, window_bounds = array<i64: 1, 18, 18, 128>}, {transform_indices = @transform_1, window_bounds = array<i64: 3, 3, 128, 128>}, {transform_indices = @transform_2, window_bounds = array<i64: 1, 128>}, {transform_indices = @transform_3, window_bounds = array<i64: 1, 16, 16, 128>}]} {
    %c0 = arith.constant 0 : index
    %c0_0 = arith.constant 0 : index
    %c0_1 = arith.constant 0 : index
    %c0_2 = arith.constant 0 : index
    %0 = vector.load %arg4[%c0, %c0_0, %c0_1, %c0_2] : memref<1x18x18x128xf32, #tpu.memory_space<vmem>>, vector<1x16x16x128xf32>
    %1 = vector.shape_cast %0 : vector<1x16x16x128xf32> to vector<16x16x128xf32>
    %2 = vector.shape_cast %1 : vector<16x16x128xf32> to vector<256x128xf32>
    %c0_3 = arith.constant 0 : index
    %c0_4 = arith.constant 0 : index
    %c0_5 = arith.constant 0 : index
    %c0_6 = arith.constant 0 : index
    %3 = vector.load %arg5[%c0_3, %c0_4, %c0_5, %c0_6] : memref<3x3x128x128xf32, #tpu.memory_space<vmem>>, vector<1x1x128x128xf32>
    %4 = vector.shape_cast %3 : vector<1x1x128x128xf32> to vector<128x128xf32>
    %cst = arith.constant dense<0.000000e+00> : vector<256x128xf32>
    %5 = tpu.matmul %2, %4, %cst {dimension_numbers = #tpu.dot_dimension_numbers<[1], [0], [0], [1], [0, 0, 1, 1], [], []>} : vector<256x128xf32>, vector<128x128xf32>, vector<256x128xf32> -> vector<256x128xf32>
    %c0_7 = arith.constant 0 : index
    %c0_8 = arith.constant 0 : index
    %c1 = arith.constant 1 : index
    %c0_9 = arith.constant 0 : index
    %6 = vector.load %arg4[%c0_7, %c0_8, %c1, %c0_9] : memref<1x18x18x128xf32, #tpu.memory_space<vmem>>, vector<1x16x16x128xf32>
    %7 = vector.shape_cast %6 : vector<1x16x16x128xf32> to vector<16x16x128xf32>
    %8 = vector.shape_cast %7 : vector<16x16x128xf32> to vector<256x128xf32>
    %c0_10 = arith.constant 0 : index
    %c1_11 = arith.constant 1 : index
    %c0_12 = arith.constant 0 : index
    %c0_13 = arith.constant 0 : index
    %9 = vector.load %arg5[%c0_10, %c1_11, %c0_12, %c0_13] : memref<3x3x128x128xf32, #tpu.memory_space<vmem>>, vector<1x1x128x128xf32>
    %10 = vector.shape_cast %9 : vector<1x1x128x128xf32> to vector<128x128xf32>
    %cst_14 = arith.constant dense<0.000000e+00> : vector<256x128xf32>
    %11 = tpu.matmul %8, %10, %cst_14 {dimension_numbers = #tpu.dot_dimension_numbers<[1], [0], [0], [1], [0, 0, 1, 1], [], []>} : vector<256x128xf32>, vector<128x128xf32>, vector<256x128xf32> -> vector<256x128xf32>
    %12 = arith.addf %5, %11 : vector<256x128xf32>
    %c0_15 = arith.constant 0 : index
    %c0_16 = arith.constant 0 : index
    %c2 = arith.constant 2 : index
    %c0_17 = arith.constant 0 : index
    %13 = vector.load %arg4[%c0_15, %c0_16, %c2, %c0_17] : memref<1x18x18x128xf32, #tpu.memory_space<vmem>>, vector<1x16x16x128xf32>
    %14 = vector.shape_cast %13 : vector<1x16x16x128xf32> to vector<16x16x128xf32>
    %15 = vector.shape_cast %14 : vector<16x16x128xf32> to vector<256x128xf32>
    %c0_18 = arith.constant 0 : index
    %c2_19 = arith.constant 2 : index
    %c0_20 = arith.constant 0 : index
    %c0_21 = arith.constant 0 : index
    %16 = vector.load %arg5[%c0_18, %c2_19, %c0_20, %c0_21] : memref<3x3x128x128xf32, #tpu.memory_space<vmem>>, vector<1x1x128x128xf32>
    %17 = vector.shape_cast %16 : vector<1x1x128x128xf32> to vector<128x128xf32>
    %cst_22 = arith.constant dense<0.000000e+00> : vector<256x128xf32>
    %18 = tpu.matmul %15, %17, %cst_22 {dimension_numbers = #tpu.dot_dimension_numbers<[1], [0], [0], [1], [0, 0, 1, 1], [], []>} : vector<256x128xf32>, vector<128x128xf32>, vector<256x128xf32> -> vector<256x128xf32>
    %19 = arith.addf %12, %18 : vector<256x128xf32>
    %c0_23 = arith.constant 0 : index
    %c1_24 = arith.constant 1 : index
    %c0_25 = arith.constant 0 : index
    %c0_26 = arith.constant 0 : index
    %20 = vector.load %arg4[%c0_23, %c1_24, %c0_25, %c0_26] : memref<1x18x18x128xf32, #tpu.memory_space<vmem>>, vector<1x16x16x128xf32>
    %21 = vector.shape_cast %20 : vector<1x16x16x128xf32> to vector<16x16x128xf32>
    %22 = vector.shape_cast %21 : vector<16x16x128xf32> to vector<256x128xf32>
    %c1_27 = arith.constant 1 : index
    %c0_28 = arith.constant 0 : index
    %c0_29 = arith.constant 0 : index
    %c0_30 = arith.constant 0 : index
    %23 = vector.load %arg5[%c1_27, %c0_28, %c0_29, %c0_30] : memref<3x3x128x128xf32, #tpu.memory_space<vmem>>, vector<1x1x128x128xf32>
    %24 = vector.shape_cast %23 : vector<1x1x128x128xf32> to vector<128x128xf32>
    %cst_31 = arith.constant dense<0.000000e+00> : vector<256x128xf32>
    %25 = tpu.matmul %22, %24, %cst_31 {dimension_numbers = #tpu.dot_dimension_numbers<[1], [0], [0], [1], [0, 0, 1, 1], [], []>} : vector<256x128xf32>, vector<128x128xf32>, vector<256x128xf32> -> vector<256x128xf32>
    %26 = arith.addf %19, %25 : vector<256x128xf32>
    %c0_32 = arith.constant 0 : index
    %c1_33 = arith.constant 1 : index
    %c1_34 = arith.constant 1 : index
    %c0_35 = arith.constant 0 : index
    %27 = vector.load %arg4[%c0_32, %c1_33, %c1_34, %c0_35] : memref<1x18x18x128xf32, #tpu.memory_space<vmem>>, vector<1x16x16x128xf32>
    %28 = vector.shape_cast %27 : vector<1x16x16x128xf32> to vector<16x16x128xf32>
    %29 = vector.shape_cast %28 : vector<16x16x128xf32> to vector<256x128xf32>
    %c1_36 = arith.constant 1 : index
    %c1_37 = arith.constant 1 : index
    %c0_38 = arith.constant 0 : index
    %c0_39 = arith.constant 0 : index
    %30 = vector.load %arg5[%c1_36, %c1_37, %c0_38, %c0_39] : memref<3x3x128x128xf32, #tpu.memory_space<vmem>>, vector<1x1x128x128xf32>
    %31 = vector.shape_cast %30 : vector<1x1x128x128xf32> to vector<128x128xf32>
    %cst_40 = arith.constant dense<0.000000e+00> : vector<256x128xf32>
    %32 = tpu.matmul %29, %31, %cst_40 {dimension_numbers = #tpu.dot_dimension_numbers<[1], [0], [0], [1], [0, 0, 1, 1], [], []>} : vector<256x128xf32>, vector<128x128xf32>, vector<256x128xf32> -> vector<256x128xf32>
    %33 = arith.addf %26, %32 : vector<256x128xf32>
    %c0_41 = arith.constant 0 : index
    %c1_42 = arith.constant 1 : index
    %c2_43 = arith.constant 2 : index
    %c0_44 = arith.constant 0 : index
    %34 = vector.load %arg4[%c0_41, %c1_42, %c2_43, %c0_44] : memref<1x18x18x128xf32, #tpu.memory_space<vmem>>, vector<1x16x16x128xf32>
    %35 = vector.shape_cast %34 : vector<1x16x16x128xf32> to vector<16x16x128xf32>
    %36 = vector.shape_cast %35 : vector<16x16x128xf32> to vector<256x128xf32>
    %c1_45 = arith.constant 1 : index
    %c2_46 = arith.constant 2 : index
    %c0_47 = arith.constant 0 : index
    %c0_48 = arith.constant 0 : index
    %37 = vector.load %arg5[%c1_45, %c2_46, %c0_47, %c0_48] : memref<3x3x128x128xf32, #tpu.memory_space<vmem>>, vector<1x1x128x128xf32>
    %38 = vector.shape_cast %37 : vector<1x1x128x128xf32> to vector<128x128xf32>
    %cst_49 = arith.constant dense<0.000000e+00> : vector<256x128xf32>
    %39 = tpu.matmul %36, %38, %cst_49 {dimension_numbers = #tpu.dot_dimension_numbers<[1], [0], [0], [1], [0, 0, 1, 1], [], []>} : vector<256x128xf32>, vector<128x128xf32>, vector<256x128xf32> -> vector<256x128xf32>
    %40 = arith.addf %33, %39 : vector<256x128xf32>
    %c0_50 = arith.constant 0 : index
    %c2_51 = arith.constant 2 : index
    %c0_52 = arith.constant 0 : index
    %c0_53 = arith.constant 0 : index
    %41 = vector.load %arg4[%c0_50, %c2_51, %c0_52, %c0_53] : memref<1x18x18x128xf32, #tpu.memory_space<vmem>>, vector<1x16x16x128xf32>
    %42 = vector.shape_cast %41 : vector<1x16x16x128xf32> to vector<16x16x128xf32>
    %43 = vector.shape_cast %42 : vector<16x16x128xf32> to vector<256x128xf32>
    %c2_54 = arith.constant 2 : index
    %c0_55 = arith.constant 0 : index
    %c0_56 = arith.constant 0 : index
    %c0_57 = arith.constant 0 : index
    %44 = vector.load %arg5[%c2_54, %c0_55, %c0_56, %c0_57] : memref<3x3x128x128xf32, #tpu.memory_space<vmem>>, vector<1x1x128x128xf32>
    %45 = vector.shape_cast %44 : vector<1x1x128x128xf32> to vector<128x128xf32>
    %cst_58 = arith.constant dense<0.000000e+00> : vector<256x128xf32>
    %46 = tpu.matmul %43, %45, %cst_58 {dimension_numbers = #tpu.dot_dimension_numbers<[1], [0], [0], [1], [0, 0, 1, 1], [], []>} : vector<256x128xf32>, vector<128x128xf32>, vector<256x128xf32> -> vector<256x128xf32>
    %47 = arith.addf %40, %46 : vector<256x128xf32>
    %c0_59 = arith.constant 0 : index
    %c2_60 = arith.constant 2 : index
    %c1_61 = arith.constant 1 : index
    %c0_62 = arith.constant 0 : index
    %48 = vector.load %arg4[%c0_59, %c2_60, %c1_61, %c0_62] : memref<1x18x18x128xf32, #tpu.memory_space<vmem>>, vector<1x16x16x128xf32>
    %49 = vector.shape_cast %48 : vector<1x16x16x128xf32> to vector<16x16x128xf32>
    %50 = vector.shape_cast %49 : vector<16x16x128xf32> to vector<256x128xf32>
    %c2_63 = arith.constant 2 : index
    %c1_64 = arith.constant 1 : index
    %c0_65 = arith.constant 0 : index
    %c0_66 = arith.constant 0 : index
    %51 = vector.load %arg5[%c2_63, %c1_64, %c0_65, %c0_66] : memref<3x3x128x128xf32, #tpu.memory_space<vmem>>, vector<1x1x128x128xf32>
    %52 = vector.shape_cast %51 : vector<1x1x128x128xf32> to vector<128x128xf32>
    %cst_67 = arith.constant dense<0.000000e+00> : vector<256x128xf32>
    %53 = tpu.matmul %50, %52, %cst_67 {dimension_numbers = #tpu.dot_dimension_numbers<[1], [0], [0], [1], [0, 0, 1, 1], [], []>} : vector<256x128xf32>, vector<128x128xf32>, vector<256x128xf32> -> vector<256x128xf32>
    %54 = arith.addf %47, %53 : vector<256x128xf32>
    %c0_68 = arith.constant 0 : index
    %c2_69 = arith.constant 2 : index
    %c2_70 = arith.constant 2 : index
    %c0_71 = arith.constant 0 : index
    %55 = vector.load %arg4[%c0_68, %c2_69, %c2_70, %c0_71] : memref<1x18x18x128xf32, #tpu.memory_space<vmem>>, vector<1x16x16x128xf32>
    %56 = vector.shape_cast %55 : vector<1x16x16x128xf32> to vector<16x16x128xf32>
    %57 = vector.shape_cast %56 : vector<16x16x128xf32> to vector<256x128xf32>
    %c2_72 = arith.constant 2 : index
    %c2_73 = arith.constant 2 : index
    %c0_74 = arith.constant 0 : index
    %c0_75 = arith.constant 0 : index
    %58 = vector.load %arg5[%c2_72, %c2_73, %c0_74, %c0_75] : memref<3x3x128x128xf32, #tpu.memory_space<vmem>>, vector<1x1x128x128xf32>
    %59 = vector.shape_cast %58 : vector<1x1x128x128xf32> to vector<128x128xf32>
    %cst_76 = arith.constant dense<0.000000e+00> : vector<256x128xf32>
    %60 = tpu.matmul %57, %59, %cst_76 {dimension_numbers = #tpu.dot_dimension_numbers<[1], [0], [0], [1], [0, 0, 1, 1], [], []>} : vector<256x128xf32>, vector<128x128xf32>, vector<256x128xf32> -> vector<256x128xf32>
    %61 = arith.addf %54, %60 : vector<256x128xf32>
    %c0_77 = arith.constant 0 : index
    %c0_78 = arith.constant 0 : index
    %62 = vector.load %arg6[%c0_77, %c0_78] : memref<1x128xf32, #tpu.memory_space<vmem>>, vector<1x128xf32>
    %63 = vector.broadcast %62 : vector<1x128xf32> to vector<256x128xf32>
    %64 = arith.addf %61, %63 : vector<256x128xf32>
    %cst_79 = arith.constant 0.000000e+00 : f32
    %65 = vector.broadcast %cst_79 : f32 to vector<256x128xf32>
    %66 = arith.maximumf %64, %65 : vector<256x128xf32>
    %67 = vector.shape_cast %66 : vector<256x128xf32> to vector<16x16x128xf32>
    %c0_80 = arith.constant 0 : index
    %c0_81 = arith.constant 0 : index
    %c0_82 = arith.constant 0 : index
    %c0_83 = arith.constant 0 : index
    %68 = vector.load %arg7[%c0_80, %c0_81, %c0_82, %c0_83] : memref<1x16x16x128xf32, #tpu.memory_space<vmem>>, vector<1x16x16x128xf32>
    %69 = vector.shape_cast %68 : vector<1x16x16x128xf32> to vector<16x16x128xf32>
    %70 = vector.shape_cast %67 : vector<16x16x128xf32> to vector<1x16x16x128xf32>
    tpu.vector_store %arg7[%c0_80, %c0_81, %c0_82, %c0_83], %70 {strides = array<i32>} : memref<1x16x16x128xf32, #tpu.memory_space<vmem>>, vector<1x16x16x128xf32>,
    return
  }
  func.func @transform_0(%arg0: i32, %arg1: i32, %arg2: i32, %arg3: i32) -> (i32, i32, i32, i32) {
    %c1_i32 = arith.constant 1 : i32
    %0 = arith.muli %arg0, %c1_i32 : i32
    %1 = arith.addi %0, %arg2 : i32
    %c0_i32 = arith.constant 0 : i32
    %c0_i32_0 = arith.constant 0 : i32
    %c0_i32_1 = arith.constant 0 : i32
    return %1, %c0_i32, %c0_i32_0, %arg3 : i32, i32, i32, i32
  }
  func.func @transform_1(%arg0: i32, %arg1: i32, %arg2: i32, %arg3: i32) -> (i32, i32, i32, i32) {
    %c0_i32 = arith.constant 0 : i32
    %c0_i32_0 = arith.constant 0 : i32
    %c0_i32_1 = arith.constant 0 : i32
    %c0_i32_2 = arith.constant 0 : i32
    return %c0_i32, %c0_i32_0, %c0_i32_1, %arg1 : i32, i32, i32, i32
  }
  func.func @transform_2(%arg0: i32, %arg1: i32, %arg2: i32, %arg3: i32) -> (i32, i32) {
    %c0_i32 = arith.constant 0 : i32
    %c0_i32_0 = arith.constant 0 : i32
    return %c0_i32, %arg1 : i32, i32
  }
  func.func @transform_3(%arg0: i32, %arg1: i32, %arg2: i32, %arg3: i32) -> (i32, i32, i32, i32) {
    %c0_i32 = arith.constant 0 : i32
    %c0_i32_0 = arith.constant 0 : i32
    return %arg0, %arg2, %c0_i32, %arg1 : i32, i32, i32, i32
  }
}

</mosaic_0001>

<llo_original>
// kernel: tpu_custom_call.1
$region0: #{tpu_custom_call.1}
  #allocation0 [shape = 'u32[]', space=smem, size = 0x4, offset = 0x4, fixed_abs, tag = 'smem constant byte address 0x4 - core index']
  #allocation1 [shape = 'u32[144,128]{1,0:T(1,128)}', space=vmem, size = 0x12000, scoped, tag = 'internal scratch']
  %s0 = inlined_call_operand.hbm [shape: f32[2,18,18,128], index: 0, kind: input, shape index: {}]
  %s1 = inlined_call_operand.hbm [shape: f32[3,3,128,128], index: 1, kind: input, shape index: {}]
  %s2 = inlined_call_operand.hbm [shape: f32[1,128], index: 2, kind: input, shape index: {}]
  %s3 = inlined_call_operand.hbm [shape: f32[2,16,16,128], index: 3, kind: output, shape index: {}]
  %s4 = sld [smem:[#allocation0]]
  $region57: #{tpu_custom_call.1} parent=0
    _
  %s6 = ssub.s32 1, %s4
  %s7 = scalar_select 0, %s6, %s4
  $region1: #{tpu_custom_call.1} parent=0
    #allocation2 [shape = 'u8[442368]{0}', space=vmem, size = 0x6c000, scoped, tag = 'input window, operand 0']
    #allocation3 [shape = 's32[2]{0}', space=sflag, size = 0x8, scoped, tag = 'scoped memory for tpu_custom_call.1']
    #allocation4 [shape = 's32[2]{0}', space=sflag, size = 0x8, scoped, tag = 'scoped memory for tpu_custom_call.1']
    #allocation5 [shape = 'u8[589824]{0}', space=vmem, size = 0x90000, scoped, tag = 'input window, operand 1, single buffered']
    #allocation6 [shape = 's32[1]{0}', space=sflag, size = 0x4, scoped, tag = 'scoped memory for tpu_custom_call.1']
    #allocation7 [shape = 'u8[512]{0}', space=vmem, size = 0x400, scoped, tag = 'input window, operand 2, single buffered']
    #allocation8 [shape = 'u8[262144]{0}', space=vmem, size = 0x40000, scoped, tag = 'output window, operand 0']
    %8 = vsyncpa [#allocation3], 0
    %s9 = scalar_lea.sflag [#allocation3], 1
    %10 = vsyncpa %s9, 0
    %11 = vsyncpa [#allocation6], 0
    %12 = vsyncpa [#allocation4], 0
    %s13 = scalar_lea.sflag [#allocation4], 1
    %14 = vsyncpa %s13, 0
    loop: start=0, step=1, limit=4
    $region2: #{tpu_custom_call.1} parent=1 // loop_pre_header
      _
    $region3: #{tpu_custom_call.1} parent=1 // loop_header
      %s16 = sphi 0, %s20
      %p17 = scmp.ge.s32.totalorder %s16, 4
      %s23 = sphi 0, %s49
      %s24 = sphi 0, %s45
      %s25 = sphi 0, %s41
      %s26 = sphi 0, %s37
      %s27 = sphi 0, %s23
      %s28 = sphi 0, %s24
      %s29 = sphi 0, %s25
      %s30 = sphi 0, %s26
      %s31 = sphi 0, %s27
      %s32 = sphi 0, %s28
      %s33 = sphi 0, %s29
      %s34 = sphi 0, %s30
      %s56 = sphi 0, %s58
      %s59 = sphi 0, %s56
      %s60 = sphi 0, %s59
      %s76 = sphi 0, %s60
      %s82 = sphi 0, %s84
      %s85 = sphi 0, %s82
      %s86 = sphi 0, %s85
      %s102 = sphi 0, %s86
      %s108 = sphi 0, %s110
      %s111 = sphi 0, %s108
      %s112 = sphi 0, %s111
      %s128 = sphi 0, %s112
      %s138 = sphi 0, %s140
      %s141 = sphi 0, %s138
      %s142 = sphi 0, %s141
      %s158 = sphi 0, %s142
    $region4: #{tpu_custom_call.1} parent=1 // loop_header_branch
      %19 = sbr.rel (%p17) target = $region8
    $region5: #{tpu_custom_call.1} parent=1 // loop_body
      %s21 = ssub.s32 %s16, 1
      %s22 = ssub.s32 %s16, 2
      %s35 = sadd.s32 1, %s26
      %p36 = scmp.ge.s32.totalorder %s35, 1
      %s37 = scalar_select %p36, 0, %s35
      %s38 = sadd.s32 1, %s25
      %s39 = scalar_select %p36, %s38, %s25
      %p40 = scmp.ge.s32.totalorder %s39, 1
      %s41 = scalar_select %p40, 0, %s39
      %s42 = sadd.s32 1, %s24
      %s43 = scalar_select %p40, %s42, %s24
      %p44 = scmp.ge.s32.totalorder %s43, 1
      %s45 = scalar_select %p44, 0, %s43
      %s46 = sadd.s32 1, %s23
      %s47 = scalar_select %p44, %s46, %s23
      %p48 = scmp.ge.s32.totalorder %s47, 2
      %s49 = scalar_select %p48, 0, %s47
      %s50 = sadd.s32 %s23, %s25
      %s51 = sadd.s32 %s49, %s41
      %s52 = ssub.s32 %s50, %s51
      %s53 = ssub.s32 %s26, %s37
      %s54 = sor.u32 %s52, %s53
      %p55 = scmp.eq.s32.totalorder %s54, 0
      %s57 = sadd.s32 %s56, 1
      %s58 = scalar_select %p55, %s56, %s57
      %p61 = pneg %p55
      %p62 = scmp.eq.s32.totalorder %s16, 1
      %p63 = por %p61, %p62
      %p64 = scmp.ne.s32.totalorder %s56, %s59
      %p65 = scmp.eq.s32.totalorder %s16, 0
      %p66 = por %p64, %p65
      %p67 = scmp.ne.s32.totalorder %s56, %s59
      %p68 = scmp.eq.s32.totalorder %s21, 1
      %p69 = por %p67, %p68
      %p70 = scmp.ne.s32.totalorder %s59, %s60
      %p71 = scmp.eq.s32.totalorder %s21, 0
      %p72 = por %p70, %p71
      %p73 = scmp.ne.s32.totalorder %s59, %s60
      %p74 = scmp.eq.s32.totalorder %s22, 1
      %p75 = por %p73, %p74
      %p77 = scmp.ne.s32.totalorder %s60, %s76
      %p78 = scmp.eq.s32.totalorder %s22, 0
      %p79 = por %p77, %p78
      %s80 = ssub.s32 %s24, %s45
      %p81 = scmp.eq.s32.totalorder %s80, 0
      %s83 = sadd.s32 %s82, 1
      %s84 = scalar_select %p81, %s82, %s83
      %p87 = pneg %p81
      %p88 = scmp.eq.s32.totalorder %s16, 1
      %p89 = por %p87, %p88
      %p90 = scmp.ne.s32.totalorder %s82, %s85
      %p91 = scmp.eq.s32.totalorder %s16, 0
      %p92 = por %p90, %p91
      %p93 = scmp.ne.s32.totalorder %s82, %s85
      %p94 = scmp.eq.s32.totalorder %s21, 1
      %p95 = por %p93, %p94
      %p96 = scmp.ne.s32.totalorder %s85, %s86
      %p97 = scmp.eq.s32.totalorder %s21, 0
      %p98 = por %p96, %p97
      %p99 = scmp.ne.s32.totalorder %s85, %s86
      %p100 = scmp.eq.s32.totalorder %s22, 1
      %p101 = por %p99, %p100
      %p103 = scmp.ne.s32.totalorder %s86, %s102
      %p104 = scmp.eq.s32.totalorder %s22, 0
      %p105 = por %p103, %p104
      %s106 = ssub.s32 %s24, %s45
      %p107 = scmp.eq.s32.totalorder %s106, 0
      %s109 = sadd.s32 %s108, 1
      %s110 = scalar_select %p107, %s108, %s109
      %p113 = pneg %p107
      %p114 = scmp.eq.s32.totalorder %s16, 1
      %p115 = por %p113, %p114
      %p116 = scmp.ne.s32.totalorder %s108, %s111
      %p117 = scmp.eq.s32.totalorder %s16, 0
      %p118 = por %p116, %p117
      %p119 = scmp.ne.s32.totalorder %s108, %s111
      %p120 = scmp.eq.s32.totalorder %s21, 1
      %p121 = por %p119, %p120
      %p122 = scmp.ne.s32.totalorder %s111, %s112
      %p123 = scmp.eq.s32.totalorder %s21, 0
      %p124 = por %p122, %p123
      %p125 = scmp.ne.s32.totalorder %s111, %s112
      %p126 = scmp.eq.s32.totalorder %s22, 1
      %p127 = por %p125, %p126
      %p129 = scmp.ne.s32.totalorder %s112, %s128
      %p130 = scmp.eq.s32.totalorder %s22, 0
      %p131 = por %p129, %p130
      %s132 = ssub.s32 %s23, %s49
      %s133 = ssub.s32 %s25, %s41
      %s134 = sor.u32 %s132, %s133
      %s135 = ssub.s32 %s24, %s45
      %s136 = sor.u32 %s134, %s135
      %p137 = scmp.eq.s32.totalorder %s136, 0
      %s139 = sadd.s32 %s138, 1
      %s140 = scalar_select %p137, %s138, %s139
      %p143 = pneg %p137
      %p144 = scmp.eq.s32.totalorder %s16, 1
      %p145 = por %p143, %p144
      %p146 = scmp.ne.s32.totalorder %s138, %s141
      %p147 = scmp.eq.s32.totalorder %s16, 0
      %p148 = por %p146, %p147
      %p149 = scmp.ne.s32.totalorder %s138, %s141
      %p150 = scmp.eq.s32.totalorder %s21, 1
      %p151 = por %p149, %p150
      %p152 = scmp.ne.s32.totalorder %s141, %s142
      %p153 = scmp.eq.s32.totalorder %s21, 0
      %p154 = por %p152, %p153
      %p155 = scmp.ne.s32.totalorder %s141, %s142
      %p156 = scmp.eq.s32.totalorder %s22, 1
      %p157 = por %p155, %p156
      %p159 = scmp.ne.s32.totalorder %s142, %s158
      %p160 = scmp.eq.s32.totalorder %s22, 0
      %p161 = por %p159, %p160
      %p162 = scmp.le.s32.totalorder 1, %s16
      %p163 = scmp.lt.s32.totalorder %s16, 3
      %p164 = pnand %p162, %p163
      %p165 = pneg %p164
      // Predicated region
      $region9: #{tpu_custom_call.1} parent=5 // pred_check
        _
      $region10: #{tpu_custom_call.1} parent=5 // pred_check_branch
        %167 = sbr.rel (%p164) target = $region12
      $region11: #{tpu_custom_call.1} parent=5 // pred_region
        %s168 = ssub.s32 %s16, 1
        // Predicated region
        $region13: #{tpu_custom_call.1} parent=11 // pred_check
          %p169 = pneg %p98
        $region14: #{tpu_custom_call.1} parent=11 // pred_check_branch
          %171 = sbr.rel (%p169) target = $region16
        $region15: #{tpu_custom_call.1} parent=11 // pred_region
          %s173 = ssub.s32 18432, 18432
          %174 = vsyncadd [#allocation6], %s173
          %s175 = smul.addr %s28, 128
          %s176 = scalar_lea.hbm %s1, %s175
          %s177 = sshll.u32 [#allocation5], 4
          %s178 = int_to_ptr.vmem [resolvable:$true] %s177
          %183 = dma.hbm_to_vmem [thread:$0]  %s176, 18432, %s178, [#allocation6], 128, 128, 8
        $region16: #{tpu_custom_call.1} parent=11 // pred_fallthru
          _
        // Predicated region
        $region17: #{tpu_custom_call.1} parent=11 // pred_check
          %p184 = pneg %p124
        $region18: #{tpu_custom_call.1} parent=11 // pred_check_branch
          %186 = sbr.rel (%p184) target = $region20
        $region19: #{tpu_custom_call.1} parent=11 // pred_region
          %s188 = ssub.s32 16, 16
          %189 = vsyncadd [#allocation6], %s188
          %s190 = smul.addr %s28, 16
          %s191 = scalar_lea.hbm %s2, %s190
          %s193 = sshll.u32 [#allocation7], 4
          %s194 = int_to_ptr.vmem [resolvable:$true] %s193
          %196 = dma.hbm_to_vmem [thread:$0]  %s191, 16, %s194, [#allocation6]
        $region20: #{tpu_custom_call.1} parent=11 // pred_fallthru
          _
      $region12: #{tpu_custom_call.1} parent=5 // pred_fallthru
        _
      %p197 = scmp.lt.s32.totalorder %s16, 2
      // Predicated region
      $region21: #{tpu_custom_call.1} parent=5 // pred_check
        %p198 = pneg %p197
      $region22: #{tpu_custom_call.1} parent=5 // pred_check_branch
        %200 = sbr.rel (%p198) target = $region24
      $region23: #{tpu_custom_call.1} parent=5 // pred_region
        // Predicated region
        $region25: #{tpu_custom_call.1} parent=23 // pred_check
          %p201 = pneg %p66
        $region26: #{tpu_custom_call.1} parent=23 // pred_check_branch
          %203 = sbr.rel (%p201) target = $region28
        $region27: #{tpu_custom_call.1} parent=23 // pred_region
          %s204 = sand.u32 %s56, 1
          %s205 = scalar_lea.sflag [#allocation3], %s204
          %s206 = sand.u32 %s56, 1
          %s207 = smul.addr %s206, 432
          %s208 = scalar_lea.vmem [#allocation2], %s207
          %s209 = sadd.s32 %s23, %s25
          %s211 = ssub.s32 6912, 6912
          %212 = vsyncadd %s205, %s211
          %s213 = smul.addr %s209, 54
          %s214 = sadd.s32 %s26, %s213
          %s215 = smul.addr %s214, 128
          %s216 = scalar_lea.hbm %s0, %s215
          %s217 = sshll.u32 %s208, 4
          %s218 = int_to_ptr.vmem [resolvable:$true] %s217
          %223 = dma.hbm_to_vmem [thread:$0]  %s216, 6912, %s218, %s205, 128, 128, 8
        $region28: #{tpu_custom_call.1} parent=23 // pred_fallthru
          _
      $region24: #{tpu_custom_call.1} parent=5 // pred_fallthru
        _
      %p224 = scmp.le.s32.totalorder 1, %s16
      %p225 = scmp.lt.s32.totalorder %s16, 3
      %p226 = pnand %p224, %p225
      %p227 = pneg %p226
      // Predicated region
      $region29: #{tpu_custom_call.1} parent=5 // pred_check
        _
      $region30: #{tpu_custom_call.1} parent=5 // pred_check_branch
        %229 = sbr.rel (%p226) target = $region32
      $region31: #{tpu_custom_call.1} parent=5 // pred_region
        %s230 = ssub.s32 %s16, 1
        %s231 = sand.u32 %s59, 1
        %s232 = scalar_lea.sflag [#allocation3], %s231
        %s233 = sand.u32 %s59, 1
        %s234 = smul.addr %s233, 432
        %s235 = scalar_lea.vmem [#allocation2], %s234
        // Predicated region
        $region33: #{tpu_custom_call.1} parent=31 // pred_check
          %p236 = pneg %p72
        $region34: #{tpu_custom_call.1} parent=31 // pred_check_branch
          %238 = sbr.rel (%p236) target = $region36
        $region35: #{tpu_custom_call.1} parent=31 // pred_region
          %239 = dma.done %s232, 6912
        $region36: #{tpu_custom_call.1} parent=31 // pred_fallthru
          _
        // Predicated region
        $region37: #{tpu_custom_call.1} parent=31 // pred_check
          %p240 = pneg %p98
        $region38: #{tpu_custom_call.1} parent=31 // pred_check_branch
          %242 = sbr.rel (%p240) target = $region40
        $region39: #{tpu_custom_call.1} parent=31 // pred_region
          %243 = dma.done [#allocation6], 18432
        $region40: #{tpu_custom_call.1} parent=31 // pred_fallthru
          _
        // Predicated region
        $region41: #{tpu_custom_call.1} parent=31 // pred_check
          %p244 = pneg %p124
        $region42: #{tpu_custom_call.1} parent=31 // pred_check_branch
          %246 = sbr.rel (%p244) target = $region44
        $region43: #{tpu_custom_call.1} parent=31 // pred_region
          %247 = dma.done [#allocation6], 16
        $region44: #{tpu_custom_call.1} parent=31 // pred_fallthru
          _
        %s248 = sand.u32 %s59, 1
        %s249 = scalar_lea.sflag [#allocation3], %s248
        %s250 = sand.u32 %s59, 1
        %s251 = smul.addr %s250, 432
        %s252 = scalar_lea.vmem [#allocation2], %s251
        %p253 = pneg %p72
        %p254 = pneg %p69
        %p255 = pneg %p98
        %p256 = pneg %p95
        %p257 = pneg %p124
        %p258 = pneg %p121
        %p259 = pneg %p154
        %p260 = pneg %p151
        %s261 = sand.u32 %s141, 1
        %s262 = scalar_lea.sflag [#allocation4], %s261
        %s263 = sand.u32 %s141, 1
        %s264 = smul.addr %s263, 256
        %s265 = scalar_lea.vmem [#allocation8], %s264
        %s266 = sadd.s32 %s27, %s29
        %s267 = smul.u32 16, %s29
        %v268 = vld [vmem:[%s235] sm:$0xff]
        %v269 = vld [vmem:[%s235 + $0x8] sm:$0xff]
        %v270 = vld [vmem:[%s235 + $0x18] sm:$0xff]
        %v271 = vld [vmem:[%s235 + $0x20] sm:$0xff]
        %v272 = vld [vmem:[%s235 + $0x30] sm:$0xff]
        %v273 = vld [vmem:[%s235 + $0x38] sm:$0xff]
        %v274 = vld [vmem:[%s235 + $0x48] sm:$0xff]
        %v275 = vld [vmem:[%s235 + $0x50] sm:$0xff]
        %v276 = vld [vmem:[%s235 + $0x60] sm:$0xff]
        %v277 = vld [vmem:[%s235 + $0x68] sm:$0xff]
        %v278 = vld [vmem:[%s235 + $0x78] sm:$0xff]
        %v279 = vld [vmem:[%s235 + $0x80] sm:$0xff]
        %v280 = vld [vmem:[%s235 + $0x90] sm:$0xff]
        %v281 = vld [vmem:[%s235 + $0x98] sm:$0xff]
        %v282 = vld [vmem:[%s235 + $0xa8] sm:$0xff]
        %v283 = vld [vmem:[%s235 + $0xb0] sm:$0xff]
        %v284 = vld [vmem:[%s235 + $0xc0] sm:$0xff]
        %v285 = vld [vmem:[%s235 + $0xc8] sm:$0xff]
        %v286 = vld [vmem:[%s235 + $0xd8] sm:$0xff]
        %v287 = vld [vmem:[%s235 + $0xe0] sm:$0xff]
        %v288 = vld [vmem:[%s235 + $0xf0] sm:$0xff]
        %v289 = vld [vmem:[%s235 + $0xf8] sm:$0xff]
        %v290 = vld [vmem:[%s235 + $0x108] sm:$0xff]
        %v291 = vld [vmem:[%s235 + $0x110] sm:$0xff]
        %v292 = vld [vmem:[%s235 + $0x120] sm:$0xff]
        %v293 = vld [vmem:[%s235 + $0x128] sm:$0xff]
        %v294 = vld [vmem:[%s235 + $0x138] sm:$0xff]
        %v295 = vld [vmem:[%s235 + $0x140] sm:$0xff]
        %v296 = vld [vmem:[%s235 + $0x150] sm:$0xff]
        %v297 = vld [vmem:[%s235 + $0x158] sm:$0xff]
        %v298 = vld [vmem:[%s235 + $0x168] sm:$0xff]
        %v299 = vld [vmem:[%s235 + $0x170] sm:$0xff]
        %v300 = vld [vmem:[#allocation5] sm:$0xff]
        %v301 = vld [vmem:[#allocation5 + $0x8] sm:$0xff]
        %v302 = vld [vmem:[#allocation5 + $0x10] sm:$0xff]
        %v303 = vld [vmem:[#allocation5 + $0x18] sm:$0xff]
        %v304 = vld [vmem:[#allocation5 + $0x20] sm:$0xff]
        %v305 = vld [vmem:[#allocation5 + $0x28] sm:$0xff]
        %v306 = vld [vmem:[#allocation5 + $0x30] sm:$0xff]
        %v307 = vld [vmem:[#allocation5 + $0x38] sm:$0xff]
        %v308 = vld [vmem:[#allocation5 + $0x40] sm:$0xff]
        %v309 = vld [vmem:[#allocation5 + $0x48] sm:$0xff]
        %v310 = vld [vmem:[#allocation5 + $0x50] sm:$0xff]
        %v311 = vld [vmem:[#allocation5 + $0x58] sm:$0xff]
        %v312 = vld [vmem:[#allocation5 + $0x60] sm:$0xff]
        %v313 = vld [vmem:[#allocation5 + $0x68] sm:$0xff]
        %v314 = vld [vmem:[#allocation5 + $0x70] sm:$0xff]
        %v315 = vld [vmem:[#allocation5 + $0x78] sm:$0xff]
        %v316 = vld [vmem:[%s235 + $0x1] sm:$0xff]
        %v317 = vld [vmem:[%s235 + $0x9] sm:$0xff]
        %v318 = vld [vmem:[%s235 + $0x19] sm:$0xff]
        %v319 = vld [vmem:[%s235 + $0x21] sm:$0xff]
        %v320 = vld [vmem:[%s235 + $0x31] sm:$0xff]
        %v321 = vld [vmem:[%s235 + $0x39] sm:$0xff]
        %v322 = vld [vmem:[%s235 + $0x49] sm:$0xff]
        %v323 = vld [vmem:[%s235 + $0x51] sm:$0xff]
        %v324 = vld [vmem:[%s235 + $0x61] sm:$0xff]
        %v325 = vld [vmem:[%s235 + $0x69] sm:$0xff]
        %v326 = vld [vmem:[%s235 + $0x79] sm:$0xff]
        %v327 = vld [vmem:[%s235 + $0x81] sm:$0xff]
        %v328 = vld [vmem:[%s235 + $0x91] sm:$0xff]
        %v329 = vld [vmem:[%s235 + $0x99] sm:$0xff]
        %v330 = vld [vmem:[%s235 + $0xa9] sm:$0xff]
        %v331 = vld [vmem:[%s235 + $0xb1] sm:$0xff]
        %v332 = vld [vmem:[%s235 + $0xc1] sm:$0xff]
        %v333 = vld [vmem:[%s235 + $0xc9] sm:$0xff]
        %v334 = vld [vmem:[%s235 + $0xd9] sm:$0xff]
        %v335 = vld [vmem:[%s235 + $0xe1] sm:$0xff]
        %v336 = vld [vmem:[%s235 + $0xf1] sm:$0xff]
        %v337 = vld [vmem:[%s235 + $0xf9] sm:$0xff]
        %v338 = vld [vmem:[%s235 + $0x109] sm:$0xff]
        %v339 = vld [vmem:[%s235 + $0x111] sm:$0xff]
        %v340 = vld [vmem:[%s235 + $0x121] sm:$0xff]
        %v341 = vld [vmem:[%s235 + $0x129] sm:$0xff]
        %v342 = vld [vmem:[%s235 + $0x139] sm:$0xff]
        %v343 = vld [vmem:[%s235 + $0x141] sm:$0xff]
        %v344 = vld [vmem:[%s235 + $0x151] sm:$0xff]
        %v345 = vld [vmem:[%s235 + $0x159] sm:$0xff]
        %v346 = vld [vmem:[%s235 + $0x169] sm:$0xff]
        %v347 = vld [vmem:[%s235 + $0x171] sm:$0xff]
        %s348 = scalar_lea.vmem [#allocation5], 128
        %v349 = vld [vmem:[%s348] sm:$0xff]
        %v350 = vld [vmem:[%s348 + $0x8] sm:$0xff]
        %v351 = vld [vmem:[%s348 + $0x10] sm:$0xff]
        %v352 = vld [vmem:[%s348 + $0x18] sm:$0xff]
        %v353 = vld [vmem:[%s348 + $0x20] sm:$0xff]
        %v354 = vld [vmem:[%s348 + $0x28] sm:$0xff]
        %v355 = vld [vmem:[%s348 + $0x30] sm:$0xff]
        %v356 = vld [vmem:[%s348 + $0x38] sm:$0xff]
        %v357 = vld [vmem:[%s348 + $0x40] sm:$0xff]
        %v358 = vld [vmem:[%s348 + $0x48] sm:$0xff]
        %v359 = vld [vmem:[%s348 + $0x50] sm:$0xff]
        %v360 = vld [vmem:[%s348 + $0x58] sm:$0xff]
        %v361 = vld [vmem:[%s348 + $0x60] sm:$0xff]
        %v362 = vld [vmem:[%s348 + $0x68] sm:$0xff]
        %v363 = vld [vmem:[%s348 + $0x70] sm:$0xff]
        %v364 = vld [vmem:[%s348 + $0x78] sm:$0xff]
        %365 = vmatprep.subr.mxu0 0.0
        %366 = vmatpush1.msra.mxu0 %v349
        %367 = vmatprep.subr.mxu0 0.0
        %368 = vmatpush1.msra.mxu0 %v350
        %369 = vmatprep.subr.mxu0 0.0
        %370 = vmatpush1.msra.mxu0 %v351
        %371 = vmatprep.subr.mxu0 0.0
        %372 = vmatpush1.msra.mxu0 %v352
        %373 = vmatprep.subr.mxu0 0.0
        %374 = vmatpush1.msra.mxu0 %v353
        %375 = vmatprep.subr.mxu0 0.0
        %376 = vmatpush1.msra.mxu0 %v354
        %377 = vmatprep.subr.mxu0 0.0
        %378 = vmatpush1.msra.mxu0 %v355
        %379 = vmatprep.subr.mxu0 0.0
        %380 = vmatpush1.msra.mxu0 %v356
        %381 = vmatprep.subr.mxu0 0.0
        %382 = vmatpush1.msra.mxu0 %v357
        %383 = vmatprep.subr.mxu0 0.0
        %384 = vmatpush1.msra.mxu0 %v358
        %385 = vmatprep.subr.mxu0 0.0
        %386 = vmatpush1.msra.mxu0 %v359
        %387 = vmatprep.subr.mxu0 0.0
        %388 = vmatpush1.msra.mxu0 %v360
        %389 = vmatprep.subr.mxu0 0.0
        %390 = vmatpush1.msra.mxu0 %v361
        %391 = vmatprep.subr.mxu0 0.0
        %392 = vmatpush1.msra.mxu0 %v362
        %393 = vmatprep.subr.mxu0 0.0
        %394 = vmatpush1.msra.mxu0 %v363
        %395 = vmatprep.subr.mxu0 0.0
        %396 = vmatpush1.msra.mxu0 %v364
        %397 = vmatprep.subr.mxu0 0.0
        %398 = vmatpush1.msra.mxu0 0.0
        %399 = vmatprep.subr.mxu0 0.0
        %400 = vmatpush1.msra.mxu0 0.0
        %401 = vmatprep.subr.mxu0 0.0
        %402 = vmatpush1.msra.mxu0 0.0
        %403 = vmatprep.subr.mxu0 0.0
        %404 = vmatpush1.msra.mxu0 0.0
        %405 = vmatprep.subr.mxu0 0.0
        %406 = vmatpush1.msra.mxu0 0.0
        %407 = vmatprep.subr.mxu0 0.0
        %408 = vmatpush1.msra.mxu0 0.0
        %409 = vmatprep.subr.mxu0 0.0
        %410 = vmatpush1.msra.mxu0 0.0
        %411 = vmatprep.subr.mxu0 0.0
        %412 = vmatpush1.msra.mxu0 0.0
        %413 = vmatprep.subr.mxu0 0.0
        %414 = vmatpush1.msra.mxu0 0.0
        %415 = vmatprep.subr.mxu0 0.0
        %416 = vmatpush1.msra.mxu0 0.0
        %417 = vmatprep.subr.mxu0 0.0
        %418 = vmatpush1.msra.mxu0 0.0
        %419 = vmatprep.subr.mxu0 0.0
        %420 = vmatpush1.msra.mxu0 0.0
        %421 = vmatprep.subr.mxu0 0.0
        %422 = vmatpush1.msra.mxu0 0.0
        %423 = vmatprep.subr.mxu0 0.0
        %424 = vmatpush1.msra.mxu0 0.0
        %425 = vmatprep.subr.mxu0 0.0
        %426 = vmatpush1.msra.mxu0 0.0
        %427 = vmatprep.subr.mxu0 0.0
        %428 = vmatpush1.msra.mxu0 0.0
        %429 = vmatprep.mubr.f32.mxu0 0.0
        %430 = vmatmul.mubr.f32.gmra.mrb[0].mxu0 %v316
        %v431 = vpop.f32.mrb[0].mxu0
        %v432 = vadd.f32 0.0, %v431
        %v433 = vpop.f32.mrb[0].mxu0
        %434 = vmatprep.mubr.f32.mxu0 0.0
        %435 = vmatmul.mubr.f32.gmra.mrb[0].mxu0 %v317
        %v436 = vpop.f32.mrb[0].mxu0
        %v437 = vadd.f32 0.0, %v436
        %v438 = vpop.f32.mrb[0].mxu0
        %439 = vmatprep.mubr.f32.mxu0 0.0
        %440 = vmatmul.mubr.f32.gmra.mrb[0].mxu0 %v318
        %v441 = vpop.f32.mrb[0].mxu0
        %v442 = vadd.f32 0.0, %v441
        %v443 = vpop.f32.mrb[0].mxu0
        %444 = vmatprep.mubr.f32.mxu0 0.0
        %445 = vmatmul.mubr.f32.gmra.mrb[0].mxu0 %v319
        %v446 = vpop.f32.mrb[0].mxu0
        %v447 = vadd.f32 0.0, %v446
        %v448 = vpop.f32.mrb[0].mxu0
        %449 = vmatprep.mubr.f32.mxu0 0.0
        %450 = vmatmul.mubr.f32.gmra.mrb[0].mxu0 %v320
        %v451 = vpop.f32.mrb[0].mxu0
        %v452 = vadd.f32 0.0, %v451
        %v453 = vpop.f32.mrb[0].mxu0
        %454 = vmatprep.mubr.f32.mxu0 0.0
        %455 = vmatmul.mubr.f32.gmra.mrb[0].mxu0 %v321
        %v456 = vpop.f32.mrb[0].mxu0
        %v457 = vadd.f32 0.0, %v456
        %v458 = vpop.f32.mrb[0].mxu0
        %459 = vmatprep.mubr.f32.mxu0 0.0
        %460 = vmatmul.mubr.f32.gmra.mrb[0].mxu0 %v322
        %v461 = vpop.f32.mrb[0].mxu0
        %v462 = vadd.f32 0.0, %v461
        %v463 = vpop.f32.mrb[0].mxu0
        %464 = vmatprep.mubr.f32.mxu0 0.0
        %465 = vmatmul.mubr.f32.gmra.mrb[0].mxu0 %v323
        %v466 = vpop.f32.mrb[0].mxu0
        %v467 = vadd.f32 0.0, %v466
        %v468 = vpop.f32.mrb[0].mxu0
        %469 = vmatprep.mubr.f32.mxu0 0.0
        %470 = vmatmul.mubr.f32.gmra.mrb[0].mxu0 %v324
        %v471 = vpop.f32.mrb[0].mxu0
        %v472 = vadd.f32 0.0, %v471
        %v473 = vpop.f32.mrb[0].mxu0
        %474 = vmatprep.mubr.f32.mxu0 0.0
        %475 = vmatmul.mubr.f32.gmra.mrb[0].mxu0 %v325
        %v476 = vpop.f32.mrb[0].mxu0
        %v477 = vadd.f32 0.0, %v476
        %v478 = vpop.f32.mrb[0].mxu0
        %479 = vmatprep.mubr.f32.mxu0 0.0
        %480 = vmatmul.mubr.f32.gmra.mrb[0].mxu0 %v326
        %v481 = vpop.f32.mrb[0].mxu0
        %v482 = vadd.f32 0.0, %v481
        %v483 = vpop.f32.mrb[0].mxu0
        %484 = vmatprep.mubr.f32.mxu0 0.0
        %485 = vmatmul.mubr.f32.gmra.mrb[0].mxu0 %v327
        %v486 = vpop.f32.mrb[0].mxu0
        %v487 = vadd.f32 0.0, %v486
        %v488 = vpop.f32.mrb[0].mxu0
        %489 = vmatprep.mubr.f32.mxu0 0.0
        %490 = vmatmul.mubr.f32.gmra.mrb[0].mxu0 %v328
        %v491 = vpop.f32.mrb[0].mxu0
        %v492 = vadd.f32 0.0, %v491
        %v493 = vpop.f32.mrb[0].mxu0
        %494 = vmatprep.mubr.f32.mxu0 0.0
        %495 = vmatmul.mubr.f32.gmra.mrb[0].mxu0 %v329
        %v496 = vpop.f32.mrb[0].mxu0
        %v497 = vadd.f32 0.0, %v496
        %v498 = vpop.f32.mrb[0].mxu0
        %499 = vmatprep.mubr.f32.mxu0 0.0
        %500 = vmatmul.mubr.f32.gmra.mrb[0].mxu0 %v330
        %v501 = vpop.f32.mrb[0].mxu0
        %v502 = vadd.f32 0.0, %v501
        %v503 = vpop.f32.mrb[0].mxu0
        %504 = vmatprep.mubr.f32.mxu0 0.0
        %505 = vmatmul.mubr.f32.gmra.mrb[0].mxu0 %v331
        %v506 = vpop.f32.mrb[0].mxu0
        %v507 = vadd.f32 0.0, %v506
        %v508 = vpop.f32.mrb[0].mxu0
        %509 = vmatprep.mubr.f32.mxu0 0.0
        %510 = vmatmul.mubr.f32.gmra.mrb[0].mxu0 %v332
        %v511 = vpop.f32.mrb[0].mxu0
        %v512 = vadd.f32 0.0, %v511
        %v513 = vpop.f32.mrb[0].mxu0
        %514 = vmatprep.mubr.f32.mxu0 0.0
        %515 = vmatmul.mubr.f32.gmra.mrb[0].mxu0 %v333
        %v516 = vpop.f32.mrb[0].mxu0
        %v517 = vadd.f32 0.0, %v516
        %v518 = vpop.f32.mrb[0].mxu0
        %519 = vmatprep.mubr.f32.mxu0 0.0
        %520 = vmatmul.mubr.f32.gmra.mrb[0].mxu0 %v334
        %v521 = vpop.f32.mrb[0].mxu0
        %v522 = vadd.f32 0.0, %v521
        %v523 = vpop.f32.mrb[0].mxu0
        %524 = vmatprep.mubr.f32.mxu0 0.0
        %525 = vmatmul.mubr.f32.gmra.mrb[0].mxu0 %v335
        %v526 = vpop.f32.mrb[0].mxu0
        %v527 = vadd.f32 0.0, %v526
        %v528 = vpop.f32.mrb[0].mxu0
        %529 = vmatprep.mubr.f32.mxu0 0.0
        %530 = vmatmul.mubr.f32.gmra.mrb[0].mxu0 %v336
        %v531 = vpop.f32.mrb[0].mxu0
        %v532 = vadd.f32 0.0, %v531
        %v533 = vpop.f32.mrb[0].mxu0
        %534 = vmatprep.mubr.f32.mxu0 0.0
        %535 = vmatmul.mubr.f32.gmra.mrb[0].mxu0 %v337
        %v536 = vpop.f32.mrb[0].mxu0
        %v537 = vadd.f32 0.0, %v536
        %v538 = vpop.f32.mrb[0].mxu0
        %539 = vmatprep.mubr.f32.mxu0 0.0
        %540 = vmatmul.mubr.f32.gmra.mrb[0].mxu0 %v338
        %v541 = vpop.f32.mrb[0].mxu0
        %v542 = vadd.f32 0.0, %v541
        %v543 = vpop.f32.mrb[0].mxu0
        %544 = vmatprep.mubr.f32.mxu0 0.0
        %545 = vmatmul.mubr.f32.gmra.mrb[0].mxu0 %v339
        %v546 = vpop.f32.mrb[0].mxu0
        %v547 = vadd.f32 0.0, %v546
        %v548 = vpop.f32.mrb[0].mxu0
        %549 = vmatprep.mubr.f32.mxu0 0.0
        %550 = vmatmul.mubr.f32.gmra.mrb[0].mxu0 %v340
        %v551 = vpop.f32.mrb[0].mxu0
        %v552 = vadd.f32 0.0, %v551
        %v553 = vpop.f32.mrb[0].mxu0
        %554 = vmatprep.mubr.f32.mxu0 0.0
        %555 = vmatmul.mubr.f32.gmra.mrb[0].mxu0 %v341
        %v556 = vpop.f32.mrb[0].mxu0
        %v557 = vadd.f32 0.0, %v556
        %v558 = vpop.f32.mrb[0].mxu0
        %559 = vmatprep.mubr.f32.mxu0 0.0
        %560 = vmatmul.mubr.f32.gmra.mrb[0].mxu0 %v342
        %v561 = vpop.f32.mrb[0].mxu0
        %v562 = vadd.f32 0.0, %v561
        %v563 = vpop.f32.mrb[0].mxu0
        %564 = vmatprep.mubr.f32.mxu0 0.0
        %565 = vmatmul.mubr.f32.gmra.mrb[0].mxu0 %v343
        %v566 = vpop.f32.mrb[0].mxu0
        %v567 = vadd.f32 0.0, %v566
        %v568 = vpop.f32.mrb[0].mxu0
        %569 = vmatprep.mubr.f32.mxu0 0.0
        %570 = vmatmul.mubr.f32.gmra.mrb[0].mxu0 %v344
        %v571 = vpop.f32.mrb[0].mxu0
        %v572 = vadd.f32 0.0, %v571
        %v573 = vpop.f32.mrb[0].mxu0
        %574 = vmatprep.mubr.f32.mxu0 0.0
        %575 = vmatmul.mubr.f32.gmra.mrb[0].mxu0 %v345
        %v576 = vpop.f32.mrb[0].mxu0
        %v577 = vadd.f32 0.0, %v576
        %v578 = vpop.f32.mrb[0].mxu0
        %579 = vmatprep.mubr.f32.mxu0 0.0
        %580 = vmatmul.mubr.f32.gmra.mrb[0].mxu0 %v346
        %v581 = vpop.f32.mrb[0].mxu0
        %v582 = vadd.f32 0.0, %v581
        %v583 = vpop.f32.mrb[0].mxu0
        %584 = vmatprep.mubr.f32.mxu0 0.0
        %585 = vmatmul.mubr.f32.gmra.mrb[0].mxu0 %v347
        %v586 = vpop.f32.mrb[0].mxu0
        %v587 = vadd.f32 0.0, %v586
        %v588 = vpop.f32.mrb[0].mxu0
        %589 = vdwg.mxu0
        %590 = vmatprep.subr.mxu0 0.0
        %591 = vmatpush1.msra.mxu0 %v300
        %592 = vmatprep.subr.mxu0 0.0
        %593 = vmatpush1.msra.mxu0 %v301
        %594 = vmatprep.subr.mxu0 0.0
        %595 = vmatpush1.msra.mxu0 %v302
        %596 = vmatprep.subr.mxu0 0.0
        %597 = vmatpush1.msra.mxu0 %v303
        %598 = vmatprep.subr.mxu0 0.0
        %599 = vmatpush1.msra.mxu0 %v304
        %600 = vmatprep.subr.mxu0 0.0
        %601 = vmatpush1.msra.mxu0 %v305
        %602 = vmatprep.subr.mxu0 0.0
        %603 = vmatpush1.msra.mxu0 %v306
        %604 = vmatprep.subr.mxu0 0.0
        %605 = vmatpush1.msra.mxu0 %v307
        %606 = vmatprep.subr.mxu0 0.0
        %607 = vmatpush1.msra.mxu0 %v308
        %608 = vmatprep.subr.mxu0 0.0
        %609 = vmatpush1.msra.mxu0 %v309
        %610 = vmatprep.subr.mxu0 0.0
        %611 = vmatpush1.msra.mxu0 %v310
        %612 = vmatprep.subr.mxu0 0.0
        %613 = vmatpush1.msra.mxu0 %v311
        %614 = vmatprep.subr.mxu0 0.0
        %615 = vmatpush1.msra.mxu0 %v312
        %616 = vmatprep.subr.mxu0 0.0
        %617 = vmatpush1.msra.mxu0 %v313
        %618 = vmatprep.subr.mxu0 0.0
        %619 = vmatpush1.msra.mxu0 %v314
        %620 = vmatprep.subr.mxu0 0.0
        %621 = vmatpush1.msra.mxu0 %v315
        %622 = vmatprep.subr.mxu0 0.0
        %623 = vmatpush1.msra.mxu0 0.0
        %624 = vmatprep.subr.mxu0 0.0
        %625 = vmatpush1.msra.mxu0 0.0
        %626 = vmatprep.subr.mxu0 0.0
        %627 = vmatpush1.msra.mxu0 0.0
        %628 = vmatprep.subr.mxu0 0.0
        %629 = vmatpush1.msra.mxu0 0.0
        %630 = vmatprep.subr.mxu0 0.0
        %631 = vmatpush1.msra.mxu0 0.0
        %632 = vmatprep.subr.mxu0 0.0
        %633 = vmatpush1.msra.mxu0 0.0
        %634 = vmatprep.subr.mxu0 0.0
        %635 = vmatpush1.msra.mxu0 0.0
        %636 = vmatprep.subr.mxu0 0.0
        %637 = vmatpush1.msra.mxu0 0.0
        %638 = vmatprep.subr.mxu0 0.0
        %639 = vmatpush1.msra.mxu0 0.0
        %640 = vmatprep.subr.mxu0 0.0
        %641 = vmatpush1.msra.mxu0 0.0
        %642 = vmatprep.subr.mxu0 0.0
        %643 = vmatpush1.msra.mxu0 0.0
        %644 = vmatprep.subr.mxu0 0.0
        %645 = vmatpush1.msra.mxu0 0.0
        %646 = vmatprep.subr.mxu0 0.0
        %647 = vmatpush1.msra.mxu0 0.0
        %648 = vmatprep.subr.mxu0 0.0
        %649 = vmatpush1.msra.mxu0 0.0
        %650 = vmatprep.subr.mxu0 0.0
        %651 = vmatpush1.msra.mxu0 0.0
        %652 = vmatprep.subr.mxu0 0.0
        %653 = vmatpush1.msra.mxu0 0.0
        %654 = vmatprep.mubr.f32.mxu0 0.0
        %655 = vmatmul.mubr.f32.gmra.mrb[0].mxu0 %v268
        %v656 = vpop.f32.mrb[0].mxu0
        %v657 = vadd.f32 %v432, %v656
        %v658 = vpop.f32.mrb[0].mxu0
        %659 = vmatprep.mubr.f32.mxu0 0.0
        %660 = vmatmul.mubr.f32.gmra.mrb[0].mxu0 %v269
        %v661 = vpop.f32.mrb[0].mxu0
        %v662 = vadd.f32 %v437, %v661
        %v663 = vpop.f32.mrb[0].mxu0
        %664 = vmatprep.mubr.f32.mxu0 0.0
        %665 = vmatmul.mubr.f32.gmra.mrb[0].mxu0 %v270
        %v666 = vpop.f32.mrb[0].mxu0
        %v667 = vadd.f32 %v442, %v666
        %v668 = vpop.f32.mrb[0].mxu0
        %669 = vmatprep.mubr.f32.mxu0 0.0
        %670 = vmatmul.mubr.f32.gmra.mrb[0].mxu0 %v271
        %v671 = vpop.f32.mrb[0].mxu0
        %v672 = vadd.f32 %v447, %v671
        %v673 = vpop.f32.mrb[0].mxu0
        %674 = vmatprep.mubr.f32.mxu0 0.0
        %675 = vmatmul.mubr.f32.gmra.mrb[0].mxu0 %v272
        %v676 = vpop.f32.mrb[0].mxu0
        %v677 = vadd.f32 %v452, %v676
        %v678 = vpop.f32.mrb[0].mxu0
        %679 = vmatprep.mubr.f32.mxu0 0.0
        %680 = vmatmul.mubr.f32.gmra.mrb[0].mxu0 %v273
        %v681 = vpop.f32.mrb[0].mxu0
        %v682 = vadd.f32 %v457, %v681
        %v683 = vpop.f32.mrb[0].mxu0
        %684 = vmatprep.mubr.f32.mxu0 0.0
        %685 = vmatmul.mubr.f32.gmra.mrb[0].mxu0 %v274
        %v686 = vpop.f32.mrb[0].mxu0
        %v687 = vadd.f32 %v462, %v686
        %v688 = vpop.f32.mrb[0].mxu0
        %689 = vmatprep.mubr.f32.mxu0 0.0
        %690 = vmatmul.mubr.f32.gmra.mrb[0].mxu0 %v275
        %v691 = vpop.f32.mrb[0].mxu0
        %v692 = vadd.f32 %v467, %v691
        %v693 = vpop.f32.mrb[0].mxu0
        %694 = vmatprep.mubr.f32.mxu0 0.0
        %695 = vmatmul.mubr.f32.gmra.mrb[0].mxu0 %v276
        %v696 = vpop.f32.mrb[0].mxu0
        %v697 = vadd.f32 %v472, %v696
        %v698 = vpop.f32.mrb[0].mxu0
        %699 = vmatprep.mubr.f32.mxu0 0.0
        %700 = vmatmul.mubr.f32.gmra.mrb[0].mxu0 %v277
        %v701 = vpop.f32.mrb[0].mxu0
        %v702 = vadd.f32 %v477, %v701
        %v703 = vpop.f32.mrb[0].mxu0
        %704 = vmatprep.mubr.f32.mxu0 0.0
        %705 = vmatmul.mubr.f32.gmra.mrb[0].mxu0 %v278
        %v706 = vpop.f32.mrb[0].mxu0
        %v707 = vadd.f32 %v482, %v706
        %v708 = vpop.f32.mrb[0].mxu0
        %709 = vmatprep.mubr.f32.mxu0 0.0
        %710 = vmatmul.mubr.f32.gmra.mrb[0].mxu0 %v279
        %v711 = vpop.f32.mrb[0].mxu0
        %v712 = vadd.f32 %v487, %v711
        %v713 = vpop.f32.mrb[0].mxu0
        %714 = vmatprep.mubr.f32.mxu0 0.0
        %715 = vmatmul.mubr.f32.gmra.mrb[0].mxu0 %v280
        %v716 = vpop.f32.mrb[0].mxu0
        %v717 = vadd.f32 %v492, %v716
        %v718 = vpop.f32.mrb[0].mxu0
        %719 = vmatprep.mubr.f32.mxu0 0.0
        %720 = vmatmul.mubr.f32.gmra.mrb[0].mxu0 %v281
        %v721 = vpop.f32.mrb[0].mxu0
        %v722 = vadd.f32 %v497, %v721
        %v723 = vpop.f32.mrb[0].mxu0
        %724 = vmatprep.mubr.f32.mxu0 0.0
        %725 = vmatmul.mubr.f32.gmra.mrb[0].mxu0 %v282
        %v726 = vpop.f32.mrb[0].mxu0
        %v727 = vadd.f32 %v502, %v726
        %v728 = vpop.f32.mrb[0].mxu0
        %729 = vmatprep.mubr.f32.mxu0 0.0
        %730 = vmatmul.mubr.f32.gmra.mrb[0].mxu0 %v283
        %v731 = vpop.f32.mrb[0].mxu0
        %v732 = vadd.f32 %v507, %v731
        %v733 = vpop.f32.mrb[0].mxu0
        %734 = vmatprep.mubr.f32.mxu0 0.0
        %735 = vmatmul.mubr.f32.gmra.mrb[0].mxu0 %v284
        %v736 = vpop.f32.mrb[0].mxu0
        %v737 = vadd.f32 %v512, %v736
        %v738 = vpop.f32.mrb[0].mxu0
        %739 = vmatprep.mubr.f32.mxu0 0.0
        %740 = vmatmul.mubr.f32.gmra.mrb[0].mxu0 %v285
        %v741 = vpop.f32.mrb[0].mxu0
        %v742 = vadd.f32 %v517, %v741
        %v743 = vpop.f32.mrb[0].mxu0
        %744 = vmatprep.mubr.f32.mxu0 0.0
        %745 = vmatmul.mubr.f32.gmra.mrb[0].mxu0 %v286
        %v746 = vpop.f32.mrb[0].mxu0
        %v747 = vadd.f32 %v522, %v746
        %v748 = vpop.f32.mrb[0].mxu0
        %749 = vmatprep.mubr.f32.mxu0 0.0
        %750 = vmatmul.mubr.f32.gmra.mrb[0].mxu0 %v287
        %v751 = vpop.f32.mrb[0].mxu0
        %v752 = vadd.f32 %v527, %v751
        %v753 = vpop.f32.mrb[0].mxu0
        %754 = vmatprep.mubr.f32.mxu0 0.0
        %755 = vmatmul.mubr.f32.gmra.mrb[0].mxu0 %v288
        %v756 = vpop.f32.mrb[0].mxu0
        %v757 = vadd.f32 %v532, %v756
        %v758 = vpop.f32.mrb[0].mxu0
        %759 = vmatprep.mubr.f32.mxu0 0.0
        %760 = vmatmul.mubr.f32.gmra.mrb[0].mxu0 %v289
        %v761 = vpop.f32.mrb[0].mxu0
        %v762 = vadd.f32 %v537, %v761
        %v763 = vpop.f32.mrb[0].mxu0
        %764 = vmatprep.mubr.f32.mxu0 0.0
        %765 = vmatmul.mubr.f32.gmra.mrb[0].mxu0 %v290
        %v766 = vpop.f32.mrb[0].mxu0
        %v767 = vadd.f32 %v542, %v766
        %v768 = vpop.f32.mrb[0].mxu0
        %769 = vmatprep.mubr.f32.mxu0 0.0
        %770 = vmatmul.mubr.f32.gmra.mrb[0].mxu0 %v291
        %v771 = vpop.f32.mrb[0].mxu0
        %v772 = vadd.f32 %v547, %v771
        %v773 = vpop.f32.mrb[0].mxu0
        %774 = vmatprep.mubr.f32.mxu0 0.0
        %775 = vmatmul.mubr.f32.gmra.mrb[0].mxu0 %v292
        %v776 = vpop.f32.mrb[0].mxu0
        %v777 = vadd.f32 %v552, %v776
        %v778 = vpop.f32.mrb[0].mxu0
        %779 = vmatprep.mubr.f32.mxu0 0.0
        %780 = vmatmul.mubr.f32.gmra.mrb[0].mxu0 %v293
        %v781 = vpop.f32.mrb[0].mxu0
        %v782 = vadd.f32 %v557, %v781
        %v783 = vpop.f32.mrb[0].mxu0
        %784 = vmatprep.mubr.f32.mxu0 0.0
        %785 = vmatmul.mubr.f32.gmra.mrb[0].mxu0 %v294
        %v786 = vpop.f32.mrb[0].mxu0
        %v787 = vadd.f32 %v562, %v786
        %v788 = vpop.f32.mrb[0].mxu0
        %789 = vmatprep.mubr.f32.mxu0 0.0
        %790 = vmatmul.mubr.f32.gmra.mrb[0].mxu0 %v295
        %v791 = vpop.f32.mrb[0].mxu0
        %v792 = vadd.f32 %v567, %v791
        %v793 = vpop.f32.mrb[0].mxu0
        %794 = vmatprep.mubr.f32.mxu0 0.0
        %795 = vmatmul.mubr.f32.gmra.mrb[0].mxu0 %v296
        %v796 = vpop.f32.mrb[0].mxu0
        %v797 = vadd.f32 %v572, %v796
        %v798 = vpop.f32.mrb[0].mxu0
        %799 = vmatprep.mubr.f32.mxu0 0.0
        %800 = vmatmul.mubr.f32.gmra.mrb[0].mxu0 %v297
        %v801 = vpop.f32.mrb[0].mxu0
        %v802 = vadd.f32 %v577, %v801
        %v803 = vpop.f32.mrb[0].mxu0
        %804 = vmatprep.mubr.f32.mxu0 0.0
        %805 = vmatmul.mubr.f32.gmra.mrb[0].mxu0 %v298
        %v806 = vpop.f32.mrb[0].mxu0
        %v807 = vadd.f32 %v582, %v806
        %v808 = vpop.f32.mrb[0].mxu0
        %809 = vmatprep.mubr.f32.mxu0 0.0
        %810 = vmatmul.mubr.f32.gmra.mrb[0].mxu0 %v299
        %v811 = vpop.f32.mrb[0].mxu0
        %v812 = vadd.f32 %v587, %v811
        %v813 = vpop.f32.mrb[0].mxu0
        %814 = vdwg.mxu0
        %v815 = vld [vmem:[%s235 + $0x2] sm:$0xff]
        %v816 = vld [vmem:[%s235 + $0xa] sm:$0xff]
        %v817 = vld [vmem:[%s235 + $0x1a] sm:$0xff]
        %v818 = vld [vmem:[%s235 + $0x22] sm:$0xff]
        %v819 = vld [vmem:[%s235 + $0x32] sm:$0xff]
        %v820 = vld [vmem:[%s235 + $0x3a] sm:$0xff]
        %v821 = vld [vmem:[%s235 + $0x4a] sm:$0xff]
        %v822 = vld [vmem:[%s235 + $0x52] sm:$0xff]
        %v823 = vld [vmem:[%s235 + $0x62] sm:$0xff]
        %v824 = vld [vmem:[%s235 + $0x6a] sm:$0xff]
        %v825 = vld [vmem:[%s235 + $0x7a] sm:$0xff]
        %v826 = vld [vmem:[%s235 + $0x82] sm:$0xff]
        %v827 = vld [vmem:[%s235 + $0x92] sm:$0xff]
        %v828 = vld [vmem:[%s235 + $0x9a] sm:$0xff]
        %v829 = vld [vmem:[%s235 + $0xaa] sm:$0xff]
        %v830 = vld [vmem:[%s235 + $0xb2] sm:$0xff]
        %v831 = vld [vmem:[%s235 + $0xc2] sm:$0xff]
        %v832 = vld [vmem:[%s235 + $0xca] sm:$0xff]
        %v833 = vld [vmem:[%s235 + $0xda] sm:$0xff]
        %v834 = vld [vmem:[%s235 + $0xe2] sm:$0xff]
        %v835 = vld [vmem:[%s235 + $0xf2] sm:$0xff]
        %v836 = vld [vmem:[%s235 + $0xfa] sm:$0xff]
        %v837 = vld [vmem:[%s235 + $0x10a] sm:$0xff]
        %v838 = vld [vmem:[%s235 + $0x112] sm:$0xff]
        %v839 = vld [vmem:[%s235 + $0x122] sm:$0xff]
        %v840 = vld [vmem:[%s235 + $0x12a] sm:$0xff]
        %v841 = vld [vmem:[%s235 + $0x13a] sm:$0xff]
        %v842 = vld [vmem:[%s235 + $0x142] sm:$0xff]
        %v843 = vld [vmem:[%s235 + $0x152] sm:$0xff]
        %v844 = vld [vmem:[%s235 + $0x15a] sm:$0xff]
        %v845 = vld [vmem:[%s235 + $0x16a] sm:$0xff]
        %v846 = vld [vmem:[%s235 + $0x172] sm:$0xff]
        %s847 = scalar_lea.vmem [#allocation5], 256
        %v848 = vld [vmem:[%s847] sm:$0xff]
        %v849 = vld [vmem:[%s847 + $0x8] sm:$0xff]
        %v850 = vld [vmem:[%s847 + $0x10] sm:$0xff]
        %v851 = vld [vmem:[%s847 + $0x18] sm:$0xff]
        %v852 = vld [vmem:[%s847 + $0x20] sm:$0xff]
        %v853 = vld [vmem:[%s847 + $0x28] sm:$0xff]
        %v854 = vld [vmem:[%s847 + $0x30] sm:$0xff]
        %v855 = vld [vmem:[%s847 + $0x38] sm:$0xff]
        %v856 = vld [vmem:[%s847 + $0x40] sm:$0xff]
        %v857 = vld [vmem:[%s847 + $0x48] sm:$0xff]
        %v858 = vld [vmem:[%s847 + $0x50] sm:$0xff]
        %v859 = vld [vmem:[%s847 + $0x58] sm:$0xff]
        %v860 = vld [vmem:[%s847 + $0x60] sm:$0xff]
        %v861 = vld [vmem:[%s847 + $0x68] sm:$0xff]
        %v862 = vld [vmem:[%s847 + $0x70] sm:$0xff]
        %v863 = vld [vmem:[%s847 + $0x78] sm:$0xff]
        %864 = vmatprep.subr.mxu0 0.0
        %865 = vmatpush1.msra.mxu0 %v848
        %866 = vmatprep.subr.mxu0 0.0
        %867 = vmatpush1.msra.mxu0 %v849
        %868 = vmatprep.subr.mxu0 0.0
        %869 = vmatpush1.msra.mxu0 %v850
        %870 = vmatprep.subr.mxu0 0.0
        %871 = vmatpush1.msra.mxu0 %v851
        %872 = vmatprep.subr.mxu0 0.0
        %873 = vmatpush1.msra.mxu0 %v852
        %874 = vmatprep.subr.mxu0 0.0
        %875 = vmatpush1.msra.mxu0 %v853
        %876 = vmatprep.subr.mxu0 0.0
        %877 = vmatpush1.msra.mxu0 %v854
        %878 = vmatprep.subr.mxu0 0.0
        %879 = vmatpush1.msra.mxu0 %v855
        %880 = vmatprep.subr.mxu0 0.0
        %881 = vmatpush1.msra.mxu0 %v856
        %882 = vmatprep.subr.mxu0 0.0
        %883 = vmatpush1.msra.mxu0 %v857
        %884 = vmatprep.subr.mxu0 0.0
        %885 = vmatpush1.msra.mxu0 %v858
        %886 = vmatprep.subr.mxu0 0.0
        %887 = vmatpush1.msra.mxu0 %v859
        %888 = vmatprep.subr.mxu0 0.0
        %889 = vmatpush1.msra.mxu0 %v860
        %890 = vmatprep.subr.mxu0 0.0
        %891 = vmatpush1.msra.mxu0 %v861
        %892 = vmatprep.subr.mxu0 0.0
        %893 = vmatpush1.msra.mxu0 %v862
        %894 = vmatprep.subr.mxu0 0.0
        %895 = vmatpush1.msra.mxu0 %v863
        %896 = vmatprep.subr.mxu0 0.0
        %897 = vmatpush1.msra.mxu0 0.0
        %898 = vmatprep.subr.mxu0 0.0
        %899 = vmatpush1.msra.mxu0 0.0
        %900 = vmatprep.subr.mxu0 0.0
        %901 = vmatpush1.msra.mxu0 0.0
        %902 = vmatprep.subr.mxu0 0.0
        %903 = vmatpush1.msra.mxu0 0.0
        %904 = vmatprep.subr.mxu0 0.0
        %905 = vmatpush1.msra.mxu0 0.0
        %906 = vmatprep.subr.mxu0 0.0
        %907 = vmatpush1.msra.mxu0 0.0
        %908 = vmatprep.subr.mxu0 0.0
        %909 = vmatpush1.msra.mxu0 0.0
        %910 = vmatprep.subr.mxu0 0.0
        %911 = vmatpush1.msra.mxu0 0.0
        %912 = vmatprep.subr.mxu0 0.0
        %913 = vmatpush1.msra.mxu0 0.0
        %914 = vmatprep.subr.mxu0 0.0
        %915 = vmatpush1.msra.mxu0 0.0
        %916 = vmatprep.subr.mxu0 0.0
        %917 = vmatpush1.msra.mxu0 0.0
        %918 = vmatprep.subr.mxu0 0.0
        %919 = vmatpush1.msra.mxu0 0.0
        %920 = vmatprep.subr.mxu0 0.0
        %921 = vmatpush1.msra.mxu0 0.0
        %922 = vmatprep.subr.mxu0 0.0
        %923 = vmatpush1.msra.mxu0 0.0
        %924 = vmatprep.subr.mxu0 0.0
        %925 = vmatpush1.msra.mxu0 0.0
        %926 = vmatprep.subr.mxu0 0.0
        %927 = vmatpush1.msra.mxu0 0.0
        %928 = vmatprep.mubr.f32.mxu0 0.0
        %929 = vmatmul.mubr.f32.gmra.mrb[0].mxu0 %v815
        %v930 = vpop.f32.mrb[0].mxu0
        %v931 = vadd.f32 0.0, %v930
        %v932 = vpop.f32.mrb[0].mxu0
        %933 = vmatprep.mubr.f32.mxu0 0.0
        %934 = vmatmul.mubr.f32.gmra.mrb[0].mxu0 %v816
        %v935 = vpop.f32.mrb[0].mxu0
        %v936 = vadd.f32 0.0, %v935
        %v937 = vpop.f32.mrb[0].mxu0
        %938 = vmatprep.mubr.f32.mxu0 0.0
        %939 = vmatmul.mubr.f32.gmra.mrb[0].mxu0 %v817
        %v940 = vpop.f32.mrb[0].mxu0
        %v941 = vadd.f32 0.0, %v940
        %v942 = vpop.f32.mrb[0].mxu0
        %943 = vmatprep.mubr.f32.mxu0 0.0
        %944 = vmatmul.mubr.f32.gmra.mrb[0].mxu0 %v818
        %v945 = vpop.f32.mrb[0].mxu0
        %v946 = vadd.f32 0.0, %v945
        %v947 = vpop.f32.mrb[0].mxu0
        %948 = vmatprep.mubr.f32.mxu0 0.0
        %949 = vmatmul.mubr.f32.gmra.mrb[0].mxu0 %v819
        %v950 = vpop.f32.mrb[0].mxu0
        %v951 = vadd.f32 0.0, %v950
        %v952 = vpop.f32.mrb[0].mxu0
        %953 = vmatprep.mubr.f32.mxu0 0.0
        %954 = vmatmul.mubr.f32.gmra.mrb[0].mxu0 %v820
        %v955 = vpop.f32.mrb[0].mxu0
        %v956 = vadd.f32 0.0, %v955
        %v957 = vpop.f32.mrb[0].mxu0
        %958 = vmatprep.mubr.f32.mxu0 0.0
        %959 = vmatmul.mubr.f32.gmra.mrb[0].mxu0 %v821
        %v960 = vpop.f32.mrb[0].mxu0
        %v961 = vadd.f32 0.0, %v960
        %v962 = vpop.f32.mrb[0].mxu0
        %963 = vmatprep.mubr.f32.mxu0 0.0
        %964 = vmatmul.mubr.f32.gmra.mrb[0].mxu0 %v822
        %v965 = vpop.f32.mrb[0].mxu0
        %v966 = vadd.f32 0.0, %v965
        %v967 = vpop.f32.mrb[0].mxu0
        %968 = vmatprep.mubr.f32.mxu0 0.0
        %969 = vmatmul.mubr.f32.gmra.mrb[0].mxu0 %v823
        %v970 = vpop.f32.mrb[0].mxu0
        %v971 = vadd.f32 0.0, %v970
        %v972 = vpop.f32.mrb[0].mxu0
        %973 = vmatprep.mubr.f32.mxu0 0.0
        %974 = vmatmul.mubr.f32.gmra.mrb[0].mxu0 %v824
        %v975 = vpop.f32.mrb[0].mxu0
        %v976 = vadd.f32 0.0, %v975
        %v977 = vpop.f32.mrb[0].mxu0
        %978 = vmatprep.mubr.f32.mxu0 0.0
        %979 = vmatmul.mubr.f32.gmra.mrb[0].mxu0 %v825
        %v980 = vpop.f32.mrb[0].mxu0
        %v981 = vadd.f32 0.0, %v980
        %v982 = vpop.f32.mrb[0].mxu0
        %983 = vmatprep.mubr.f32.mxu0 0.0
        %984 = vmatmul.mubr.f32.gmra.mrb[0].mxu0 %v826
        %v985 = vpop.f32.mrb[0].mxu0
        %v986 = vadd.f32 0.0, %v985
        %v987 = vpop.f32.mrb[0].mxu0
        %988 = vmatprep.mubr.f32.mxu0 0.0
        %989 = vmatmul.mubr.f32.gmra.mrb[0].mxu0 %v827
        %v990 = vpop.f32.mrb[0].mxu0
        %v991 = vadd.f32 0.0, %v990
        %v992 = vpop.f32.mrb[0].mxu0
        %993 = vmatprep.mubr.f32.mxu0 0.0
        %994 = vmatmul.mubr.f32.gmra.mrb[0].mxu0 %v828
        %v995 = vpop.f32.mrb[0].mxu0
        %v996 = vadd.f32 0.0, %v995
        %v997 = vpop.f32.mrb[0].mxu0
        %998 = vmatprep.mubr.f32.mxu0 0.0
        %999 = vmatmul.mubr.f32.gmra.mrb[0].mxu0 %v829
        %v1000 = vpop.f32.mrb[0].mxu0
        %v1001 = vadd.f32 0.0, %v1000
        %v1002 = vpop.f32.mrb[0].mxu0
        %1003 = vmatprep.mubr.f32.mxu0 0.0
        %1004 = vmatmul.mubr.f32.gmra.mrb[0].mxu0 %v830
        %v1005 = vpop.f32.mrb[0].mxu0
        %v1006 = vadd.f32 0.0, %v1005
        %v1007 = vpop.f32.mrb[0].mxu0
        %1008 = vmatprep.mubr.f32.mxu0 0.0
        %1009 = vmatmul.mubr.f32.gmra.mrb[0].mxu0 %v831
        %v1010 = vpop.f32.mrb[0].mxu0
        %v1011 = vadd.f32 0.0, %v1010
        %v1012 = vpop.f32.mrb[0].mxu0
        %1013 = vmatprep.mubr.f32.mxu0 0.0
        %1014 = vmatmul.mubr.f32.gmra.mrb[0].mxu0 %v832
        %v1015 = vpop.f32.mrb[0].mxu0
        %v1016 = vadd.f32 0.0, %v1015
        %v1017 = vpop.f32.mrb[0].mxu0
        %1018 = vmatprep.mubr.f32.mxu0 0.0
        %1019 = vmatmul.mubr.f32.gmra.mrb[0].mxu0 %v833
        %v1020 = vpop.f32.mrb[0].mxu0
        %v1021 = vadd.f32 0.0, %v1020
        %v1022 = vpop.f32.mrb[0].mxu0
        %1023 = vmatprep.mubr.f32.mxu0 0.0
        %1024 = vmatmul.mubr.f32.gmra.mrb[0].mxu0 %v834
        %v1025 = vpop.f32.mrb[0].mxu0
        %v1026 = vadd.f32 0.0, %v1025
        %v1027 = vpop.f32.mrb[0].mxu0
        %1028 = vmatprep.mubr.f32.mxu0 0.0
        %1029 = vmatmul.mubr.f32.gmra.mrb[0].mxu0 %v835
        %v1030 = vpop.f32.mrb[0].mxu0
        %v1031 = vadd.f32 0.0, %v1030
        %v1032 = vpop.f32.mrb[0].mxu0
        %1033 = vmatprep.mubr.f32.mxu0 0.0
        %1034 = vmatmul.mubr.f32.gmra.mrb[0].mxu0 %v836
        %v1035 = vpop.f32.mrb[0].mxu0
        %v1036 = vadd.f32 0.0, %v1035
        %v1037 = vpop.f32.mrb[0].mxu0
        %1038 = vmatprep.mubr.f32.mxu0 0.0
        %1039 = vmatmul.mubr.f32.gmra.mrb[0].mxu0 %v837
        %v1040 = vpop.f32.mrb[0].mxu0
        %v1041 = vadd.f32 0.0, %v1040
        %v1042 = vpop.f32.mrb[0].mxu0
        %1043 = vmatprep.mubr.f32.mxu0 0.0
        %1044 = vmatmul.mubr.f32.gmra.mrb[0].mxu0 %v838
        %v1045 = vpop.f32.mrb[0].mxu0
        %v1046 = vadd.f32 0.0, %v1045
        %v1047 = vpop.f32.mrb[0].mxu0
        %1048 = vmatprep.mubr.f32.mxu0 0.0
        %1049 = vmatmul.mubr.f32.gmra.mrb[0].mxu0 %v839
        %v1050 = vpop.f32.mrb[0].mxu0
        %v1051 = vadd.f32 0.0, %v1050
        %v1052 = vpop.f32.mrb[0].mxu0
        %1053 = vmatprep.mubr.f32.mxu0 0.0
        %1054 = vmatmul.mubr.f32.gmra.mrb[0].mxu0 %v840
        %v1055 = vpop.f32.mrb[0].mxu0
        %v1056 = vadd.f32 0.0, %v1055
        %v1057 = vpop.f32.mrb[0].mxu0
        %1058 = vmatprep.mubr.f32.mxu0 0.0
        %1059 = vmatmul.mubr.f32.gmra.mrb[0].mxu0 %v841
        %v1060 = vpop.f32.mrb[0].mxu0
        %v1061 = vadd.f32 0.0, %v1060
        %v1062 = vpop.f32.mrb[0].mxu0
        %1063 = vmatprep.mubr.f32.mxu0 0.0
        %1064 = vmatmul.mubr.f32.gmra.mrb[0].mxu0 %v842
        %v1065 = vpop.f32.mrb[0].mxu0
        %v1066 = vadd.f32 0.0, %v1065
        %v1067 = vpop.f32.mrb[0].mxu0
        %1068 = vmatprep.mubr.f32.mxu0 0.0
        %1069 = vmatmul.mubr.f32.gmra.mrb[0].mxu0 %v843
        %v1070 = vpop.f32.mrb[0].mxu0
        %v1071 = vadd.f32 0.0, %v1070
        %v1072 = vpop.f32.mrb[0].mxu0
        %1073 = vmatprep.mubr.f32.mxu0 0.0
        %1074 = vmatmul.mubr.f32.gmra.mrb[0].mxu0 %v844
        %v1075 = vpop.f32.mrb[0].mxu0
        %v1076 = vadd.f32 0.0, %v1075
        %v1077 = vpop.f32.mrb[0].mxu0
        %1078 = vmatprep.mubr.f32.mxu0 0.0
        %1079 = vmatmul.mubr.f32.gmra.mrb[0].mxu0 %v845
        %v1080 = vpop.f32.mrb[0].mxu0
        %v1081 = vadd.f32 0.0, %v1080
        %v1082 = vpop.f32.mrb[0].mxu0
        %1083 = vmatprep.mubr.f32.mxu0 0.0
        %1084 = vmatmul.mubr.f32.gmra.mrb[0].mxu0 %v846
        %v1085 = vpop.f32.mrb[0].mxu0
        %v1086 = vadd.f32 0.0, %v1085
        %v1087 = vpop.f32.mrb[0].mxu0
        %1088 = vdwg.mxu0
        %v1089 = vadd.f32 %v657, %v931
        %v1090 = vadd.f32 %v662, %v936
        %v1091 = vadd.f32 %v667, %v941
        %v1092 = vadd.f32 %v672, %v946
        %v1093 = vadd.f32 %v677, %v951
        %v1094 = vadd.f32 %v682, %v956
        %v1095 = vadd.f32 %v687, %v961
        %v1096 = vadd.f32 %v692, %v966
        %v1097 = vadd.f32 %v697, %v971
        %v1098 = vadd.f32 %v702, %v976
        %v1099 = vadd.f32 %v707, %v981
        %v1100 = vadd.f32 %v712, %v986
        %v1101 = vadd.f32 %v717, %v991
        %v1102 = vadd.f32 %v722, %v996
        %v1103 = vadd.f32 %v727, %v1001
        %v1104 = vadd.f32 %v732, %v1006
        %v1105 = vadd.f32 %v737, %v1011
        %v1106 = vadd.f32 %v742, %v1016
        %v1107 = vadd.f32 %v747, %v1021
        %v1108 = vadd.f32 %v752, %v1026
        %v1109 = vadd.f32 %v757, %v1031
        %v1110 = vadd.f32 %v762, %v1036
        %v1111 = vadd.f32 %v767, %v1041
        %v1112 = vadd.f32 %v772, %v1046
        %v1113 = vadd.f32 %v777, %v1051
        %v1114 = vadd.f32 %v782, %v1056
        %v1115 = vadd.f32 %v787, %v1061
        %v1116 = vadd.f32 %v792, %v1066
        %v1117 = vadd.f32 %v797, %v1071
        %v1118 = vadd.f32 %v802, %v1076
        %v1119 = vadd.f32 %v807, %v1081
        %v1120 = vadd.f32 %v812, %v1086
        %s1121 = scalar_lea.vmem %s235, 24 [#allocation2]
        %v1122 = vld [vmem:[%s1121] sm:$0xff]
        %v1123 = vld [vmem:[%s1121 + $0x8] sm:$0xff]
        %v1124 = vld [vmem:[%s1121 + $0x18] sm:$0xff]
        %v1125 = vld [vmem:[%s1121 + $0x20] sm:$0xff]
        %v1126 = vld [vmem:[%s1121 + $0x30] sm:$0xff]
        %v1127 = vld [vmem:[%s1121 + $0x38] sm:$0xff]
        %v1128 = vld [vmem:[%s1121 + $0x48] sm:$0xff]
        %v1129 = vld [vmem:[%s1121 + $0x50] sm:$0xff]
        %v1130 = vld [vmem:[%s1121 + $0x60] sm:$0xff]
        %v1131 = vld [vmem:[%s1121 + $0x68] sm:$0xff]
        %v1132 = vld [vmem:[%s1121 + $0x78] sm:$0xff]
        %v1133 = vld [vmem:[%s1121 + $0x80] sm:$0xff]
        %v1134 = vld [vmem:[%s1121 + $0x90] sm:$0xff]
        %v1135 = vld [vmem:[%s1121 + $0x98] sm:$0xff]
        %v1136 = vld [vmem:[%s1121 + $0xa8] sm:$0xff]
        %v1137 = vld [vmem:[%s1121 + $0xb0] sm:$0xff]
        %v1138 = vld [vmem:[%s1121 + $0xc0] sm:$0xff]
        %v1139 = vld [vmem:[%s1121 + $0xc8] sm:$0xff]
        %v1140 = vld [vmem:[%s1121 + $0xd8] sm:$0xff]
        %v1141 = vld [vmem:[%s1121 + $0xe0] sm:$0xff]
        %v1142 = vld [vmem:[%s1121 + $0xf0] sm:$0xff]
        %v1143 = vld [vmem:[%s1121 + $0xf8] sm:$0xff]
        %v1144 = vld [vmem:[%s1121 + $0x108] sm:$0xff]
        %v1145 = vld [vmem:[%s1121 + $0x110] sm:$0xff]
        %v1146 = vld [vmem:[%s1121 + $0x120] sm:$0xff]
        %v1147 = vld [vmem:[%s1121 + $0x128] sm:$0xff]
        %v1148 = vld [vmem:[%s1121 + $0x138] sm:$0xff]
        %v1149 = vld [vmem:[%s1121 + $0x140] sm:$0xff]
        %v1150 = vld [vmem:[%s1121 + $0x150] sm:$0xff]
        %v1151 = vld [vmem:[%s1121 + $0x158] sm:$0xff]
        %v1152 = vld [vmem:[%s1121 + $0x168] sm:$0xff]
        %v1153 = vld [vmem:[%s1121 + $0x170] sm:$0xff]
        %s1154 = scalar_lea.vmem [#allocation5], 384
        %v1155 = vld [vmem:[%s1154] sm:$0xff]
        %v1156 = vld [vmem:[%s1154 + $0x8] sm:$0xff]
        %v1157 = vld [vmem:[%s1154 + $0x10] sm:$0xff]
        %v1158 = vld [vmem:[%s1154 + $0x18] sm:$0xff]
        %v1159 = vld [vmem:[%s1154 + $0x20] sm:$0xff]
        %v1160 = vld [vmem:[%s1154 + $0x28] sm:$0xff]
        %v1161 = vld [vmem:[%s1154 + $0x30] sm:$0xff]
        %v1162 = vld [vmem:[%s1154 + $0x38] sm:$0xff]
        %v1163 = vld [vmem:[%s1154 + $0x40] sm:$0xff]
        %v1164 = vld [vmem:[%s1154 + $0x48] sm:$0xff]
        %v1165 = vld [vmem:[%s1154 + $0x50] sm:$0xff]
        %v1166 = vld [vmem:[%s1154 + $0x58] sm:$0xff]
        %v1167 = vld [vmem:[%s1154 + $0x60] sm:$0xff]
        %v1168 = vld [vmem:[%s1154 + $0x68] sm:$0xff]
        %v1169 = vld [vmem:[%s1154 + $0x70] sm:$0xff]
        %v1170 = vld [vmem:[%s1154 + $0x78] sm:$0xff]
        %1171 = vmatprep.subr.mxu0 0.0
        %1172 = vmatpush1.msra.mxu0 %v1155
        %1173 = vmatprep.subr.mxu0 0.0
        %1174 = vmatpush1.msra.mxu0 %v1156
        %1175 = vmatprep.subr.mxu0 0.0
        %1176 = vmatpush1.msra.mxu0 %v1157
        %1177 = vmatprep.subr.mxu0 0.0
        %1178 = vmatpush1.msra.mxu0 %v1158
        %1179 = vmatprep.subr.mxu0 0.0
        %1180 = vmatpush1.msra.mxu0 %v1159
        %1181 = vmatprep.subr.mxu0 0.0
        %1182 = vmatpush1.msra.mxu0 %v1160
        %1183 = vmatprep.subr.mxu0 0.0
        %1184 = vmatpush1.msra.mxu0 %v1161
        %1185 = vmatprep.subr.mxu0 0.0
        %1186 = vmatpush1.msra.mxu0 %v1162
        %1187 = vmatprep.subr.mxu0 0.0
        %1188 = vmatpush1.msra.mxu0 %v1163
        %1189 = vmatprep.subr.mxu0 0.0
        %1190 = vmatpush1.msra.mxu0 %v1164
        %1191 = vmatprep.subr.mxu0 0.0
        %1192 = vmatpush1.msra.mxu0 %v1165
        %1193 = vmatprep.subr.mxu0 0.0
        %1194 = vmatpush1.msra.mxu0 %v1166
        %1195 = vmatprep.subr.mxu0 0.0
        %1196 = vmatpush1.msra.mxu0 %v1167
        %1197 = vmatprep.subr.mxu0 0.0
        %1198 = vmatpush1.msra.mxu0 %v1168
        %1199 = vmatprep.subr.mxu0 0.0
        %1200 = vmatpush1.msra.mxu0 %v1169
        %1201 = vmatprep.subr.mxu0 0.0
        %1202 = vmatpush1.msra.mxu0 %v1170
        %1203 = vmatprep.subr.mxu0 0.0
        %1204 = vmatpush1.msra.mxu0 0.0
        %1205 = vmatprep.subr.mxu0 0.0
        %1206 = vmatpush1.msra.mxu0 0.0
        %1207 = vmatprep.subr.mxu0 0.0
        %1208 = vmatpush1.msra.mxu0 0.0
        %1209 = vmatprep.subr.mxu0 0.0
        %1210 = vmatpush1.msra.mxu0 0.0
        %1211 = vmatprep.subr.mxu0 0.0
        %1212 = vmatpush1.msra.mxu0 0.0
        %1213 = vmatprep.subr.mxu0 0.0
        %1214 = vmatpush1.msra.mxu0 0.0
        %1215 = vmatprep.subr.mxu0 0.0
        %1216 = vmatpush1.msra.mxu0 0.0
        %1217 = vmatprep.subr.mxu0 0.0
        %1218 = vmatpush1.msra.mxu0 0.0
        %1219 = vmatprep.subr.mxu0 0.0
        %1220 = vmatpush1.msra.mxu0 0.0
        %1221 = vmatprep.subr.mxu0 0.0
        %1222 = vmatpush1.msra.mxu0 0.0
        %1223 = vmatprep.subr.mxu0 0.0
        %1224 = vmatpush1.msra.mxu0 0.0
        %1225 = vmatprep.subr.mxu0 0.0
        %1226 = vmatpush1.msra.mxu0 0.0
        %1227 = vmatprep.subr.mxu0 0.0
        %1228 = vmatpush1.msra.mxu0 0.0
        %1229 = vmatprep.subr.mxu0 0.0
        %1230 = vmatpush1.msra.mxu0 0.0
        %1231 = vmatprep.subr.mxu0 0.0
        %1232 = vmatpush1.msra.mxu0 0.0
        %1233 = vmatprep.subr.mxu0 0.0
        %1234 = vmatpush1.msra.mxu0 0.0
        %1235 = vmatprep.mubr.f32.mxu0 0.0
        %1236 = vmatmul.mubr.f32.gmra.mrb[0].mxu0 %v1122
        %v1237 = vpop.f32.mrb[0].mxu0
        %v1238 = vadd.f32 0.0, %v1237
        %v1239 = vpop.f32.mrb[0].mxu0
        %1240 = vmatprep.mubr.f32.mxu0 0.0
        %1241 = vmatmul.mubr.f32.gmra.mrb[0].mxu0 %v1123
        %v1242 = vpop.f32.mrb[0].mxu0
        %v1243 = vadd.f32 0.0, %v1242
        %v1244 = vpop.f32.mrb[0].mxu0
        %1245 = vmatprep.mubr.f32.mxu0 0.0
        %1246 = vmatmul.mubr.f32.gmra.mrb[0].mxu0 %v1124
        %v1247 = vpop.f32.mrb[0].mxu0
        %v1248 = vadd.f32 0.0, %v1247
        %v1249 = vpop.f32.mrb[0].mxu0
        %1250 = vmatprep.mubr.f32.mxu0 0.0
        %1251 = vmatmul.mubr.f32.gmra.mrb[0].mxu0 %v1125
        %v1252 = vpop.f32.mrb[0].mxu0
        %v1253 = vadd.f32 0.0, %v1252
        %v1254 = vpop.f32.mrb[0].mxu0
        %1255 = vmatprep.mubr.f32.mxu0 0.0
        %1256 = vmatmul.mubr.f32.gmra.mrb[0].mxu0 %v1126
        %v1257 = vpop.f32.mrb[0].mxu0
        %v1258 = vadd.f32 0.0, %v1257
        %v1259 = vpop.f32.mrb[0].mxu0
        %1260 = vmatprep.mubr.f32.mxu0 0.0
        %1261 = vmatmul.mubr.f32.gmra.mrb[0].mxu0 %v1127
        %v1262 = vpop.f32.mrb[0].mxu0
        %v1263 = vadd.f32 0.0, %v1262
        %v1264 = vpop.f32.mrb[0].mxu0
        %1265 = vmatprep.mubr.f32.mxu0 0.0
        %1266 = vmatmul.mubr.f32.gmra.mrb[0].mxu0 %v1128
        %v1267 = vpop.f32.mrb[0].mxu0
        %v1268 = vadd.f32 0.0, %v1267
        %v1269 = vpop.f32.mrb[0].mxu0
        %1270 = vmatprep.mubr.f32.mxu0 0.0
        %1271 = vmatmul.mubr.f32.gmra.mrb[0].mxu0 %v1129
        %v1272 = vpop.f32.mrb[0].mxu0
        %v1273 = vadd.f32 0.0, %v1272
        %v1274 = vpop.f32.mrb[0].mxu0
        %1275 = vmatprep.mubr.f32.mxu0 0.0
        %1276 = vmatmul.mubr.f32.gmra.mrb[0].mxu0 %v1130
        %v1277 = vpop.f32.mrb[0].mxu0
        %v1278 = vadd.f32 0.0, %v1277
        %v1279 = vpop.f32.mrb[0].mxu0
        %1280 = vmatprep.mubr.f32.mxu0 0.0
        %1281 = vmatmul.mubr.f32.gmra.mrb[0].mxu0 %v1131
        %v1282 = vpop.f32.mrb[0].mxu0
        %v1283 = vadd.f32 0.0, %v1282
        %v1284 = vpop.f32.mrb[0].mxu0
        %1285 = vmatprep.mubr.f32.mxu0 0.0
        %1286 = vmatmul.mubr.f32.gmra.mrb[0].mxu0 %v1132
        %v1287 = vpop.f32.mrb[0].mxu0
        %v1288 = vadd.f32 0.0, %v1287
        %v1289 = vpop.f32.mrb[0].mxu0
        %1290 = vmatprep.mubr.f32.mxu0 0.0
        %1291 = vmatmul.mubr.f32.gmra.mrb[0].mxu0 %v1133
        %v1292 = vpop.f32.mrb[0].mxu0
        %v1293 = vadd.f32 0.0, %v1292
        %v1294 = vpop.f32.mrb[0].mxu0
        %1295 = vmatprep.mubr.f32.mxu0 0.0
        %1296 = vmatmul.mubr.f32.gmra.mrb[0].mxu0 %v1134
        %v1297 = vpop.f32.mrb[0].mxu0
        %v1298 = vadd.f32 0.0, %v1297
        %v1299 = vpop.f32.mrb[0].mxu0
        %1300 = vmatprep.mubr.f32.mxu0 0.0
        %1301 = vmatmul.mubr.f32.gmra.mrb[0].mxu0 %v1135
        %v1302 = vpop.f32.mrb[0].mxu0
        %v1303 = vadd.f32 0.0, %v1302
        %v1304 = vpop.f32.mrb[0].mxu0
        %1305 = vmatprep.mubr.f32.mxu0 0.0
        %1306 = vmatmul.mubr.f32.gmra.mrb[0].mxu0 %v1136
        %v1307 = vpop.f32.mrb[0].mxu0
        %v1308 = vadd.f32 0.0, %v1307
        %v1309 = vpop.f32.mrb[0].mxu0
        %1310 = vmatprep.mubr.f32.mxu0 0.0
        %1311 = vmatmul.mubr.f32.gmra.mrb[0].mxu0 %v1137
        %v1312 = vpop.f32.mrb[0].mxu0
        %v1313 = vadd.f32 0.0, %v1312
        %v1314 = vpop.f32.mrb[0].mxu0
        %1315 = vmatprep.mubr.f32.mxu0 0.0
        %1316 = vmatmul.mubr.f32.gmra.mrb[0].mxu0 %v1138
        %v1317 = vpop.f32.mrb[0].mxu0
        %v1318 = vadd.f32 0.0, %v1317
        %v1319 = vpop.f32.mrb[0].mxu0
        %1320 = vmatprep.mubr.f32.mxu0 0.0
        %1321 = vmatmul.mubr.f32.gmra.mrb[0].mxu0 %v1139
        %v1322 = vpop.f32.mrb[0].mxu0
        %v1323 = vadd.f32 0.0, %v1322
        %v1324 = vpop.f32.mrb[0].mxu0
        %1325 = vmatprep.mubr.f32.mxu0 0.0
        %1326 = vmatmul.mubr.f32.gmra.mrb[0].mxu0 %v1140
        %v1327 = vpop.f32.mrb[0].mxu0
        %v1328 = vadd.f32 0.0, %v1327
        %v1329 = vpop.f32.mrb[0].mxu0
        %1330 = vmatprep.mubr.f32.mxu0 0.0
        %1331 = vmatmul.mubr.f32.gmra.mrb[0].mxu0 %v1141
        %v1332 = vpop.f32.mrb[0].mxu0
        %v1333 = vadd.f32 0.0, %v1332
        %v1334 = vpop.f32.mrb[0].mxu0
        %1335 = vmatprep.mubr.f32.mxu0 0.0
        %1336 = vmatmul.mubr.f32.gmra.mrb[0].mxu0 %v1142
        %v1337 = vpop.f32.mrb[0].mxu0
        %v1338 = vadd.f32 0.0, %v1337
        %v1339 = vpop.f32.mrb[0].mxu0
        %1340 = vmatprep.mubr.f32.mxu0 0.0
        %1341 = vmatmul.mubr.f32.gmra.mrb[0].mxu0 %v1143
        %v1342 = vpop.f32.mrb[0].mxu0
        %v1343 = vadd.f32 0.0, %v1342
        %v1344 = vpop.f32.mrb[0].mxu0
        %1345 = vmatprep.mubr.f32.mxu0 0.0
        %1346 = vmatmul.mubr.f32.gmra.mrb[0].mxu0 %v1144
        %v1347 = vpop.f32.mrb[0].mxu0
        %v1348 = vadd.f32 0.0, %v1347
        %v1349 = vpop.f32.mrb[0].mxu0
        %1350 = vmatprep.mubr.f32.mxu0 0.0
        %1351 = vmatmul.mubr.f32.gmra.mrb[0].mxu0 %v1145
        %v1352 = vpop.f32.mrb[0].mxu0
        %v1353 = vadd.f32 0.0, %v1352
        %v1354 = vpop.f32.mrb[0].mxu0
        %1355 = vmatprep.mubr.f32.mxu0 0.0
        %1356 = vmatmul.mubr.f32.gmra.mrb[0].mxu0 %v1146
        %v1357 = vpop.f32.mrb[0].mxu0
        %v1358 = vadd.f32 0.0, %v1357
        %v1359 = vpop.f32.mrb[0].mxu0
        %1360 = vmatprep.mubr.f32.mxu0 0.0
        %1361 = vmatmul.mubr.f32.gmra.mrb[0].mxu0 %v1147
        %v1362 = vpop.f32.mrb[0].mxu0
        %v1363 = vadd.f32 0.0, %v1362
        %v1364 = vpop.f32.mrb[0].mxu0
        %1365 = vmatprep.mubr.f32.mxu0 0.0
        %1366 = vmatmul.mubr.f32.gmra.mrb[0].mxu0 %v1148
        %v1367 = vpop.f32.mrb[0].mxu0
        %v1368 = vadd.f32 0.0, %v1367
        %v1369 = vpop.f32.mrb[0].mxu0
        %1370 = vmatprep.mubr.f32.mxu0 0.0
        %1371 = vmatmul.mubr.f32.gmra.mrb[0].mxu0 %v1149
        %v1372 = vpop.f32.mrb[0].mxu0
        %v1373 = vadd.f32 0.0, %v1372
        %v1374 = vpop.f32.mrb[0].mxu0
        %1375 = vmatprep.mubr.f32.mxu0 0.0
        %1376 = vmatmul.mubr.f32.gmra.mrb[0].mxu0 %v1150
        %v1377 = vpop.f32.mrb[0].mxu0
        %v1378 = vadd.f32 0.0, %v1377
        %v1379 = vpop.f32.mrb[0].mxu0
        %1380 = vmatprep.mubr.f32.mxu0 0.0
        %1381 = vmatmul.mubr.f32.gmra.mrb[0].mxu0 %v1151
        %v1382 = vpop.f32.mrb[0].mxu0
        %v1383 = vadd.f32 0.0, %v1382
        %v1384 = vpop.f32.mrb[0].mxu0
        %1385 = vmatprep.mubr.f32.mxu0 0.0
        %1386 = vmatmul.mubr.f32.gmra.mrb[0].mxu0 %v1152
        %v1387 = vpop.f32.mrb[0].mxu0
        %v1388 = vadd.f32 0.0, %v1387
        %v1389 = vpop.f32.mrb[0].mxu0
        %1390 = vmatprep.mubr.f32.mxu0 0.0
        %1391 = vmatmul.mubr.f32.gmra.mrb[0].mxu0 %v1153
        %v1392 = vpop.f32.mrb[0].mxu0
        %v1393 = vadd.f32 0.0, %v1392
        %v1394 = vpop.f32.mrb[0].mxu0
        %1395 = vdwg.mxu0
        %v1396 = vadd.f32 %v1089, %v1238
        %v1397 = vadd.f32 %v1090, %v1243
        %v1398 = vadd.f32 %v1091, %v1248
        %v1399 = vadd.f32 %v1092, %v1253
        %v1400 = vadd.f32 %v1093, %v1258
        %v1401 = vadd.f32 %v1094, %v1263
        %v1402 = vadd.f32 %v1095, %v1268
        %v1403 = vadd.f32 %v1096, %v1273
        %v1404 = vadd.f32 %v1097, %v1278
        %v1405 = vadd.f32 %v1098, %v1283
        %v1406 = vadd.f32 %v1099, %v1288
        %v1407 = vadd.f32 %v1100, %v1293
        %v1408 = vadd.f32 %v1101, %v1298
        %v1409 = vadd.f32 %v1102, %v1303
        %v1410 = vadd.f32 %v1103, %v1308
        %v1411 = vadd.f32 %v1104, %v1313
        %v1412 = vadd.f32 %v1105, %v1318
        %v1413 = vadd.f32 %v1106, %v1323
        %v1414 = vadd.f32 %v1107, %v1328
        %v1415 = vadd.f32 %v1108, %v1333
        %v1416 = vadd.f32 %v1109, %v1338
        %v1417 = vadd.f32 %v1110, %v1343
        %v1418 = vadd.f32 %v1111, %v1348
        %v1419 = vadd.f32 %v1112, %v1353
        %v1420 = vadd.f32 %v1113, %v1358
        %v1421 = vadd.f32 %v1114, %v1363
        %v1422 = vadd.f32 %v1115, %v1368
        %v1423 = vadd.f32 %v1116, %v1373
        %v1424 = vadd.f32 %v1117, %v1378
        %v1425 = vadd.f32 %v1118, %v1383
        %v1426 = vadd.f32 %v1119, %v1388
        %v1427 = vadd.f32 %v1120, %v1393
        %v1428 = vld [vmem:[%s1121 + $0x1] sm:$0xff]
        %v1429 = vld [vmem:[%s1121 + $0x9] sm:$0xff]
        %v1430 = vld [vmem:[%s1121 + $0x19] sm:$0xff]
        %v1431 = vld [vmem:[%s1121 + $0x21] sm:$0xff]
        %v1432 = vld [vmem:[%s1121 + $0x31] sm:$0xff]
        %v1433 = vld [vmem:[%s1121 + $0x39] sm:$0xff]
        %v1434 = vld [vmem:[%s1121 + $0x49] sm:$0xff]
        %v1435 = vld [vmem:[%s1121 + $0x51] sm:$0xff]
        %v1436 = vld [vmem:[%s1121 + $0x61] sm:$0xff]
        %v1437 = vld [vmem:[%s1121 + $0x69] sm:$0xff]
        %v1438 = vld [vmem:[%s1121 + $0x79] sm:$0xff]
        %v1439 = vld [vmem:[%s1121 + $0x81] sm:$0xff]
        %v1440 = vld [vmem:[%s1121 + $0x91] sm:$0xff]
        %v1441 = vld [vmem:[%s1121 + $0x99] sm:$0xff]
        %v1442 = vld [vmem:[%s1121 + $0xa9] sm:$0xff]
        %v1443 = vld [vmem:[%s1121 + $0xb1] sm:$0xff]
        %v1444 = vld [vmem:[%s1121 + $0xc1] sm:$0xff]
        %v1445 = vld [vmem:[%s1121 + $0xc9] sm:$0xff]
        %v1446 = vld [vmem:[%s1121 + $0xd9] sm:$0xff]
        %v1447 = vld [vmem:[%s1121 + $0xe1] sm:$0xff]
        %v1448 = vld [vmem:[%s1121 + $0xf1] sm:$0xff]
        %v1449 = vld [vmem:[%s1121 + $0xf9] sm:$0xff]
        %v1450 = vld [vmem:[%s1121 + $0x109] sm:$0xff]
        %v1451 = vld [vmem:[%s1121 + $0x111] sm:$0xff]
        %v1452 = vld [vmem:[%s1121 + $0x121] sm:$0xff]
        %v1453 = vld [vmem:[%s1121 + $0x129] sm:$0xff]
        %v1454 = vld [vmem:[%s1121 + $0x139] sm:$0xff]
        %v1455 = vld [vmem:[%s1121 + $0x141] sm:$0xff]
        %v1456 = vld [vmem:[%s1121 + $0x151] sm:$0xff]
        %v1457 = vld [vmem:[%s1121 + $0x159] sm:$0xff]
        %v1458 = vld [vmem:[%s1121 + $0x169] sm:$0xff]
        %v1459 = vld [vmem:[%s1121 + $0x171] sm:$0xff]
        %s1460 = scalar_lea.vmem [#allocation5], 512
        %v1461 = vld [vmem:[%s1460] sm:$0xff]
        %v1462 = vld [vmem:[%s1460 + $0x8] sm:$0xff]
        %v1463 = vld [vmem:[%s1460 + $0x10] sm:$0xff]
        %v1464 = vld [vmem:[%s1460 + $0x18] sm:$0xff]
        %v1465 = vld [vmem:[%s1460 + $0x20] sm:$0xff]
        %v1466 = vld [vmem:[%s1460 + $0x28] sm:$0xff]
        %v1467 = vld [vmem:[%s1460 + $0x30] sm:$0xff]
        %v1468 = vld [vmem:[%s1460 + $0x38] sm:$0xff]
        %v1469 = vld [vmem:[%s1460 + $0x40] sm:$0xff]
        %v1470 = vld [vmem:[%s1460 + $0x48] sm:$0xff]
        %v1471 = vld [vmem:[%s1460 + $0x50] sm:$0xff]
        %v1472 = vld [vmem:[%s1460 + $0x58] sm:$0xff]
        %v1473 = vld [vmem:[%s1460 + $0x60] sm:$0xff]
        %v1474 = vld [vmem:[%s1460 + $0x68] sm:$0xff]
        %v1475 = vld [vmem:[%s1460 + $0x70] sm:$0xff]
        %v1476 = vld [vmem:[%s1460 + $0x78] sm:$0xff]
        %1477 = vmatprep.subr.mxu0 0.0
        %1478 = vmatpush1.msra.mxu0 %v1461
        %1479 = vmatprep.subr.mxu0 0.0
        %1480 = vmatpush1.msra.mxu0 %v1462
        %1481 = vmatprep.subr.mxu0 0.0
        %1482 = vmatpush1.msra.mxu0 %v1463
        %1483 = vmatprep.subr.mxu0 0.0
        %1484 = vmatpush1.msra.mxu0 %v1464
        %1485 = vmatprep.subr.mxu0 0.0
        %1486 = vmatpush1.msra.mxu0 %v1465
        %1487 = vmatprep.subr.mxu0 0.0
        %1488 = vmatpush1.msra.mxu0 %v1466
        %1489 = vmatprep.subr.mxu0 0.0
        %1490 = vmatpush1.msra.mxu0 %v1467
        %1491 = vmatprep.subr.mxu0 0.0
        %1492 = vmatpush1.msra.mxu0 %v1468
        %1493 = vmatprep.subr.mxu0 0.0
        %1494 = vmatpush1.msra.mxu0 %v1469
        %1495 = vmatprep.subr.mxu0 0.0
        %1496 = vmatpush1.msra.mxu0 %v1470
        %1497 = vmatprep.subr.mxu0 0.0
        %1498 = vmatpush1.msra.mxu0 %v1471
        %1499 = vmatprep.subr.mxu0 0.0
        %1500 = vmatpush1.msra.mxu0 %v1472
        %1501 = vmatprep.subr.mxu0 0.0
        %1502 = vmatpush1.msra.mxu0 %v1473
        %1503 = vmatprep.subr.mxu0 0.0
        %1504 = vmatpush1.msra.mxu0 %v1474
        %1505 = vmatprep.subr.mxu0 0.0
        %1506 = vmatpush1.msra.mxu0 %v1475
        %1507 = vmatprep.subr.mxu0 0.0
        %1508 = vmatpush1.msra.mxu0 %v1476
        %1509 = vmatprep.subr.mxu0 0.0
        %1510 = vmatpush1.msra.mxu0 0.0
        %1511 = vmatprep.subr.mxu0 0.0
        %1512 = vmatpush1.msra.mxu0 0.0
        %1513 = vmatprep.subr.mxu0 0.0
        %1514 = vmatpush1.msra.mxu0 0.0
        %1515 = vmatprep.subr.mxu0 0.0
        %1516 = vmatpush1.msra.mxu0 0.0
        %1517 = vmatprep.subr.mxu0 0.0
        %1518 = vmatpush1.msra.mxu0 0.0
        %1519 = vmatprep.subr.mxu0 0.0
        %1520 = vmatpush1.msra.mxu0 0.0
        %1521 = vmatprep.subr.mxu0 0.0
        %1522 = vmatpush1.msra.mxu0 0.0
        %1523 = vmatprep.subr.mxu0 0.0
        %1524 = vmatpush1.msra.mxu0 0.0
        %1525 = vmatprep.subr.mxu0 0.0
        %1526 = vmatpush1.msra.mxu0 0.0
        %1527 = vmatprep.subr.mxu0 0.0
        %1528 = vmatpush1.msra.mxu0 0.0
        %1529 = vmatprep.subr.mxu0 0.0
        %1530 = vmatpush1.msra.mxu0 0.0
        %1531 = vmatprep.subr.mxu0 0.0
        %1532 = vmatpush1.msra.mxu0 0.0
        %1533 = vmatprep.subr.mxu0 0.0
        %1534 = vmatpush1.msra.mxu0 0.0
        %1535 = vmatprep.subr.mxu0 0.0
        %1536 = vmatpush1.msra.mxu0 0.0
        %1537 = vmatprep.subr.mxu0 0.0
        %1538 = vmatpush1.msra.mxu0 0.0
        %1539 = vmatprep.subr.mxu0 0.0
        %1540 = vmatpush1.msra.mxu0 0.0
        %1541 = vmatprep.mubr.f32.mxu0 0.0
        %1542 = vmatmul.mubr.f32.gmra.mrb[0].mxu0 %v1428
        %v1543 = vpop.f32.mrb[0].mxu0
        %v1544 = vadd.f32 0.0, %v1543
        %v1545 = vpop.f32.mrb[0].mxu0
        %1546 = vmatprep.mubr.f32.mxu0 0.0
        %1547 = vmatmul.mubr.f32.gmra.mrb[0].mxu0 %v1429
        %v1548 = vpop.f32.mrb[0].mxu0
        %v1549 = vadd.f32 0.0, %v1548
        %v1550 = vpop.f32.mrb[0].mxu0
        %1551 = vmatprep.mubr.f32.mxu0 0.0
        %1552 = vmatmul.mubr.f32.gmra.mrb[0].mxu0 %v1430
        %v1553 = vpop.f32.mrb[0].mxu0
        %v1554 = vadd.f32 0.0, %v1553
        %v1555 = vpop.f32.mrb[0].mxu0
        %1556 = vmatprep.mubr.f32.mxu0 0.0
        %1557 = vmatmul.mubr.f32.gmra.mrb[0].mxu0 %v1431
        %v1558 = vpop.f32.mrb[0].mxu0
        %v1559 = vadd.f32 0.0, %v1558
        %v1560 = vpop.f32.mrb[0].mxu0
        %1561 = vmatprep.mubr.f32.mxu0 0.0
        %1562 = vmatmul.mubr.f32.gmra.mrb[0].mxu0 %v1432
        %v1563 = vpop.f32.mrb[0].mxu0
        %v1564 = vadd.f32 0.0, %v1563
        %v1565 = vpop.f32.mrb[0].mxu0
        %1566 = vmatprep.mubr.f32.mxu0 0.0
        %1567 = vmatmul.mubr.f32.gmra.mrb[0].mxu0 %v1433
        %v1568 = vpop.f32.mrb[0].mxu0
        %v1569 = vadd.f32 0.0, %v1568
        %v1570 = vpop.f32.mrb[0].mxu0
        %1571 = vmatprep.mubr.f32.mxu0 0.0
        %1572 = vmatmul.mubr.f32.gmra.mrb[0].mxu0 %v1434
        %v1573 = vpop.f32.mrb[0].mxu0
        %v1574 = vadd.f32 0.0, %v1573
        %v1575 = vpop.f32.mrb[0].mxu0
        %1576 = vmatprep.mubr.f32.mxu0 0.0
        %1577 = vmatmul.mubr.f32.gmra.mrb[0].mxu0 %v1435
        %v1578 = vpop.f32.mrb[0].mxu0
        %v1579 = vadd.f32 0.0, %v1578
        %v1580 = vpop.f32.mrb[0].mxu0
        %1581 = vmatprep.mubr.f32.mxu0 0.0
        %1582 = vmatmul.mubr.f32.gmra.mrb[0].mxu0 %v1436
        %v1583 = vpop.f32.mrb[0].mxu0
        %v1584 = vadd.f32 0.0, %v1583
        %v1585 = vpop.f32.mrb[0].mxu0
        %1586 = vmatprep.mubr.f32.mxu0 0.0
        %1587 = vmatmul.mubr.f32.gmra.mrb[0].mxu0 %v1437
        %v1588 = vpop.f32.mrb[0].mxu0
        %v1589 = vadd.f32 0.0, %v1588
        %v1590 = vpop.f32.mrb[0].mxu0
        %1591 = vmatprep.mubr.f32.mxu0 0.0
        %1592 = vmatmul.mubr.f32.gmra.mrb[0].mxu0 %v1438
        %v1593 = vpop.f32.mrb[0].mxu0
        %v1594 = vadd.f32 0.0, %v1593
        %v1595 = vpop.f32.mrb[0].mxu0
        %1596 = vmatprep.mubr.f32.mxu0 0.0
        %1597 = vmatmul.mubr.f32.gmra.mrb[0].mxu0 %v1439
        %v1598 = vpop.f32.mrb[0].mxu0
        %v1599 = vadd.f32 0.0, %v1598
        %v1600 = vpop.f32.mrb[0].mxu0
        %1601 = vmatprep.mubr.f32.mxu0 0.0
        %1602 = vmatmul.mubr.f32.gmra.mrb[0].mxu0 %v1440
        %v1603 = vpop.f32.mrb[0].mxu0
        %v1604 = vadd.f32 0.0, %v1603
        %v1605 = vpop.f32.mrb[0].mxu0
        %1606 = vmatprep.mubr.f32.mxu0 0.0
        %1607 = vmatmul.mubr.f32.gmra.mrb[0].mxu0 %v1441
        %v1608 = vpop.f32.mrb[0].mxu0
        %v1609 = vadd.f32 0.0, %v1608
        %v1610 = vpop.f32.mrb[0].mxu0
        %1611 = vmatprep.mubr.f32.mxu0 0.0
        %1612 = vmatmul.mubr.f32.gmra.mrb[0].mxu0 %v1442
        %v1613 = vpop.f32.mrb[0].mxu0
        %v1614 = vadd.f32 0.0, %v1613
        %v1615 = vpop.f32.mrb[0].mxu0
        %1616 = vmatprep.mubr.f32.mxu0 0.0
        %1617 = vmatmul.mubr.f32.gmra.mrb[0].mxu0 %v1443
        %v1618 = vpop.f32.mrb[0].mxu0
        %v1619 = vadd.f32 0.0, %v1618
        %v1620 = vpop.f32.mrb[0].mxu0
        %1621 = vmatprep.mubr.f32.mxu0 0.0
        %1622 = vmatmul.mubr.f32.gmra.mrb[0].mxu0 %v1444
        %v1623 = vpop.f32.mrb[0].mxu0
        %v1624 = vadd.f32 0.0, %v1623
        %v1625 = vpop.f32.mrb[0].mxu0
        %1626 = vmatprep.mubr.f32.mxu0 0.0
        %1627 = vmatmul.mubr.f32.gmra.mrb[0].mxu0 %v1445
        %v1628 = vpop.f32.mrb[0].mxu0
        %v1629 = vadd.f32 0.0, %v1628
        %v1630 = vpop.f32.mrb[0].mxu0
        %1631 = vmatprep.mubr.f32.mxu0 0.0
        %1632 = vmatmul.mubr.f32.gmra.mrb[0].mxu0 %v1446
        %v1633 = vpop.f32.mrb[0].mxu0
        %v1634 = vadd.f32 0.0, %v1633
        %v1635 = vpop.f32.mrb[0].mxu0
        %1636 = vmatprep.mubr.f32.mxu0 0.0
        %1637 = vmatmul.mubr.f32.gmra.mrb[0].mxu0 %v1447
        %v1638 = vpop.f32.mrb[0].mxu0
        %v1639 = vadd.f32 0.0, %v1638
        %v1640 = vpop.f32.mrb[0].mxu0
        %1641 = vmatprep.mubr.f32.mxu0 0.0
        %1642 = vmatmul.mubr.f32.gmra.mrb[0].mxu0 %v1448
        %v1643 = vpop.f32.mrb[0].mxu0
        %v1644 = vadd.f32 0.0, %v1643
        %v1645 = vpop.f32.mrb[0].mxu0
        %1646 = vmatprep.mubr.f32.mxu0 0.0
        %1647 = vmatmul.mubr.f32.gmra.mrb[0].mxu0 %v1449
        %v1648 = vpop.f32.mrb[0].mxu0
        %v1649 = vadd.f32 0.0, %v1648
        %v1650 = vpop.f32.mrb[0].mxu0
        %1651 = vmatprep.mubr.f32.mxu0 0.0
        %1652 = vmatmul.mubr.f32.gmra.mrb[0].mxu0 %v1450
        %v1653 = vpop.f32.mrb[0].mxu0
        %v1654 = vadd.f32 0.0, %v1653
        %v1655 = vpop.f32.mrb[0].mxu0
        %1656 = vmatprep.mubr.f32.mxu0 0.0
        %1657 = vmatmul.mubr.f32.gmra.mrb[0].mxu0 %v1451
        %v1658 = vpop.f32.mrb[0].mxu0
        %v1659 = vadd.f32 0.0, %v1658
        %v1660 = vpop.f32.mrb[0].mxu0
        %1661 = vmatprep.mubr.f32.mxu0 0.0
        %1662 = vmatmul.mubr.f32.gmra.mrb[0].mxu0 %v1452
        %v1663 = vpop.f32.mrb[0].mxu0
        %v1664 = vadd.f32 0.0, %v1663
        %v1665 = vpop.f32.mrb[0].mxu0
        %1666 = vmatprep.mubr.f32.mxu0 0.0
        %1667 = vmatmul.mubr.f32.gmra.mrb[0].mxu0 %v1453
        %v1668 = vpop.f32.mrb[0].mxu0
        %v1669 = vadd.f32 0.0, %v1668
        %v1670 = vpop.f32.mrb[0].mxu0
        %1671 = vmatprep.mubr.f32.mxu0 0.0
        %1672 = vmatmul.mubr.f32.gmra.mrb[0].mxu0 %v1454
        %v1673 = vpop.f32.mrb[0].mxu0
        %v1674 = vadd.f32 0.0, %v1673
        %v1675 = vpop.f32.mrb[0].mxu0
        %1676 = vmatprep.mubr.f32.mxu0 0.0
        %1677 = vmatmul.mubr.f32.gmra.mrb[0].mxu0 %v1455
        %v1678 = vpop.f32.mrb[0].mxu0
        %v1679 = vadd.f32 0.0, %v1678
        %v1680 = vpop.f32.mrb[0].mxu0
        %1681 = vmatprep.mubr.f32.mxu0 0.0
        %1682 = vmatmul.mubr.f32.gmra.mrb[0].mxu0 %v1456
        %v1683 = vpop.f32.mrb[0].mxu0
        %v1684 = vadd.f32 0.0, %v1683
        %v1685 = vpop.f32.mrb[0].mxu0
        %1686 = vmatprep.mubr.f32.mxu0 0.0
        %1687 = vmatmul.mubr.f32.gmra.mrb[0].mxu0 %v1457
        %v1688 = vpop.f32.mrb[0].mxu0
        %v1689 = vadd.f32 0.0, %v1688
        %v1690 = vpop.f32.mrb[0].mxu0
        %1691 = vmatprep.mubr.f32.mxu0 0.0
        %1692 = vmatmul.mubr.f32.gmra.mrb[0].mxu0 %v1458
        %v1693 = vpop.f32.mrb[0].mxu0
        %v1694 = vadd.f32 0.0, %v1693
        %v1695 = vpop.f32.mrb[0].mxu0
        %1696 = vmatprep.mubr.f32.mxu0 0.0
        %1697 = vmatmul.mubr.f32.gmra.mrb[0].mxu0 %v1459
        %v1698 = vpop.f32.mrb[0].mxu0
        %v1699 = vadd.f32 0.0, %v1698
        %v1700 = vpop.f32.mrb[0].mxu0
        %1701 = vdwg.mxu0
        %v1702 = vadd.f32 %v1396, %v1544
        %v1703 = vadd.f32 %v1397, %v1549
        %v1704 = vadd.f32 %v1398, %v1554
        %v1705 = vadd.f32 %v1399, %v1559
        %v1706 = vadd.f32 %v1400, %v1564
        %v1707 = vadd.f32 %v1401, %v1569
        %v1708 = vadd.f32 %v1402, %v1574
        %v1709 = vadd.f32 %v1403, %v1579
        %v1710 = vadd.f32 %v1404, %v1584
        %v1711 = vadd.f32 %v1405, %v1589
        %v1712 = vadd.f32 %v1406, %v1594
        %v1713 = vadd.f32 %v1407, %v1599
        %v1714 = vadd.f32 %v1408, %v1604
        %v1715 = vadd.f32 %v1409, %v1609
        %v1716 = vadd.f32 %v1410, %v1614
        %v1717 = vadd.f32 %v1411, %v1619
        %v1718 = vadd.f32 %v1412, %v1624
        %v1719 = vadd.f32 %v1413, %v1629
        %v1720 = vadd.f32 %v1414, %v1634
        %v1721 = vadd.f32 %v1415, %v1639
        %v1722 = vadd.f32 %v1416, %v1644
        %v1723 = vadd.f32 %v1417, %v1649
        %v1724 = vadd.f32 %v1418, %v1654
        %v1725 = vadd.f32 %v1419, %v1659
        %v1726 = vadd.f32 %v1420, %v1664
        %v1727 = vadd.f32 %v1421, %v1669
        %v1728 = vadd.f32 %v1422, %v1674
        %v1729 = vadd.f32 %v1423, %v1679
        %v1730 = vadd.f32 %v1424, %v1684
        %v1731 = vadd.f32 %v1425, %v1689
        %v1732 = vadd.f32 %v1426, %v1694
        %v1733 = vadd.f32 %v1427, %v1699
        %v1734 = vld [vmem:[%s1121 + $0x2] sm:$0xff]
        %v1735 = vld [vmem:[%s1121 + $0xa] sm:$0xff]
        %v1736 = vld [vmem:[%s1121 + $0x1a] sm:$0xff]
        %v1737 = vld [vmem:[%s1121 + $0x22] sm:$0xff]
        %v1738 = vld [vmem:[%s1121 + $0x32] sm:$0xff]
        %v1739 = vld [vmem:[%s1121 + $0x3a] sm:$0xff]
        %v1740 = vld [vmem:[%s1121 + $0x4a] sm:$0xff]
        %v1741 = vld [vmem:[%s1121 + $0x52] sm:$0xff]
        %v1742 = vld [vmem:[%s1121 + $0x62] sm:$0xff]
        %v1743 = vld [vmem:[%s1121 + $0x6a] sm:$0xff]
        %v1744 = vld [vmem:[%s1121 + $0x7a] sm:$0xff]
        %v1745 = vld [vmem:[%s1121 + $0x82] sm:$0xff]
        %v1746 = vld [vmem:[%s1121 + $0x92] sm:$0xff]
        %v1747 = vld [vmem:[%s1121 + $0x9a] sm:$0xff]
        %v1748 = vld [vmem:[%s1121 + $0xaa] sm:$0xff]
        %v1749 = vld [vmem:[%s1121 + $0xb2] sm:$0xff]
        %v1750 = vld [vmem:[%s1121 + $0xc2] sm:$0xff]
        %v1751 = vld [vmem:[%s1121 + $0xca] sm:$0xff]
        %v1752 = vld [vmem:[%s1121 + $0xda] sm:$0xff]
        %v1753 = vld [vmem:[%s1121 + $0xe2] sm:$0xff]
        %v1754 = vld [vmem:[%s1121 + $0xf2] sm:$0xff]
        %v1755 = vld [vmem:[%s1121 + $0xfa] sm:$0xff]
        %v1756 = vld [vmem:[%s1121 + $0x10a] sm:$0xff]
        %v1757 = vld [vmem:[%s1121 + $0x112] sm:$0xff]
        %v1758 = vld [vmem:[%s1121 + $0x122] sm:$0xff]
        %v1759 = vld [vmem:[%s1121 + $0x12a] sm:$0xff]
        %v1760 = vld [vmem:[%s1121 + $0x13a] sm:$0xff]
        %v1761 = vld [vmem:[%s1121 + $0x142] sm:$0xff]
        %v1762 = vld [vmem:[%s1121 + $0x152] sm:$0xff]
        %v1763 = vld [vmem:[%s1121 + $0x15a] sm:$0xff]
        %v1764 = vld [vmem:[%s1121 + $0x16a] sm:$0xff]
        %v1765 = vld [vmem:[%s1121 + $0x172] sm:$0xff]
        %s1766 = scalar_lea.vmem [#allocation5], 640
        %v1767 = vld [vmem:[%s1766] sm:$0xff]
        %v1768 = vld [vmem:[%s1766 + $0x8] sm:$0xff]
        %v1769 = vld [vmem:[%s1766 + $0x10] sm:$0xff]
        %v1770 = vld [vmem:[%s1766 + $0x18] sm:$0xff]
        %v1771 = vld [vmem:[%s1766 + $0x20] sm:$0xff]
        %v1772 = vld [vmem:[%s1766 + $0x28] sm:$0xff]
        %v1773 = vld [vmem:[%s1766 + $0x30] sm:$0xff]
        %v1774 = vld [vmem:[%s1766 + $0x38] sm:$0xff]
        %v1775 = vld [vmem:[%s1766 + $0x40] sm:$0xff]
        %v1776 = vld [vmem:[%s1766 + $0x48] sm:$0xff]
        %v1777 = vld [vmem:[%s1766 + $0x50] sm:$0xff]
        %v1778 = vld [vmem:[%s1766 + $0x58] sm:$0xff]
        %v1779 = vld [vmem:[%s1766 + $0x60] sm:$0xff]
        %v1780 = vld [vmem:[%s1766 + $0x68] sm:$0xff]
        %v1781 = vld [vmem:[%s1766 + $0x70] sm:$0xff]
        %v1782 = vld [vmem:[%s1766 + $0x78] sm:$0xff]
        %1783 = vmatprep.subr.mxu0 0.0
        %1784 = vmatpush1.msra.mxu0 %v1767
        %1785 = vmatprep.subr.mxu0 0.0
        %1786 = vmatpush1.msra.mxu0 %v1768
        %1787 = vmatprep.subr.mxu0 0.0
        %1788 = vmatpush1.msra.mxu0 %v1769
        %1789 = vmatprep.subr.mxu0 0.0
        %1790 = vmatpush1.msra.mxu0 %v1770
        %1791 = vmatprep.subr.mxu0 0.0
        %1792 = vmatpush1.msra.mxu0 %v1771
        %1793 = vmatprep.subr.mxu0 0.0
        %1794 = vmatpush1.msra.mxu0 %v1772
        %1795 = vmatprep.subr.mxu0 0.0
        %1796 = vmatpush1.msra.mxu0 %v1773
        %1797 = vmatprep.subr.mxu0 0.0
        %1798 = vmatpush1.msra.mxu0 %v1774
        %1799 = vmatprep.subr.mxu0 0.0
        %1800 = vmatpush1.msra.mxu0 %v1775
        %1801 = vmatprep.subr.mxu0 0.0
        %1802 = vmatpush1.msra.mxu0 %v1776
        %1803 = vmatprep.subr.mxu0 0.0
        %1804 = vmatpush1.msra.mxu0 %v1777
        %1805 = vmatprep.subr.mxu0 0.0
        %1806 = vmatpush1.msra.mxu0 %v1778
        %1807 = vmatprep.subr.mxu0 0.0
        %1808 = vmatpush1.msra.mxu0 %v1779
        %1809 = vmatprep.subr.mxu0 0.0
        %1810 = vmatpush1.msra.mxu0 %v1780
        %1811 = vmatprep.subr.mxu0 0.0
        %1812 = vmatpush1.msra.mxu0 %v1781
        %1813 = vmatprep.subr.mxu0 0.0
        %1814 = vmatpush1.msra.mxu0 %v1782
        %1815 = vmatprep.subr.mxu0 0.0
        %1816 = vmatpush1.msra.mxu0 0.0
        %1817 = vmatprep.subr.mxu0 0.0
        %1818 = vmatpush1.msra.mxu0 0.0
        %1819 = vmatprep.subr.mxu0 0.0
        %1820 = vmatpush1.msra.mxu0 0.0
        %1821 = vmatprep.subr.mxu0 0.0
        %1822 = vmatpush1.msra.mxu0 0.0
        %1823 = vmatprep.subr.mxu0 0.0
        %1824 = vmatpush1.msra.mxu0 0.0
        %1825 = vmatprep.subr.mxu0 0.0
        %1826 = vmatpush1.msra.mxu0 0.0
        %1827 = vmatprep.subr.mxu0 0.0
        %1828 = vmatpush1.msra.mxu0 0.0
        %1829 = vmatprep.subr.mxu0 0.0
        %1830 = vmatpush1.msra.mxu0 0.0
        %1831 = vmatprep.subr.mxu0 0.0
        %1832 = vmatpush1.msra.mxu0 0.0
        %1833 = vmatprep.subr.mxu0 0.0
        %1834 = vmatpush1.msra.mxu0 0.0
        %1835 = vmatprep.subr.mxu0 0.0
        %1836 = vmatpush1.msra.mxu0 0.0
        %1837 = vmatprep.subr.mxu0 0.0
        %1838 = vmatpush1.msra.mxu0 0.0
        %1839 = vmatprep.subr.mxu0 0.0
        %1840 = vmatpush1.msra.mxu0 0.0
        %1841 = vmatprep.subr.mxu0 0.0
        %1842 = vmatpush1.msra.mxu0 0.0
        %1843 = vmatprep.subr.mxu0 0.0
        %1844 = vmatpush1.msra.mxu0 0.0
        %1845 = vmatprep.subr.mxu0 0.0
        %1846 = vmatpush1.msra.mxu0 0.0
        %1847 = vmatprep.mubr.f32.mxu0 0.0
        %1848 = vmatmul.mubr.f32.gmra.mrb[0].mxu0 %v1734
        %v1849 = vpop.f32.mrb[0].mxu0
        %v1850 = vadd.f32 0.0, %v1849
        %v1851 = vpop.f32.mrb[0].mxu0
        %1852 = vmatprep.mubr.f32.mxu0 0.0
        %1853 = vmatmul.mubr.f32.gmra.mrb[0].mxu0 %v1735
        %v1854 = vpop.f32.mrb[0].mxu0
        %v1855 = vadd.f32 0.0, %v1854
        %v1856 = vpop.f32.mrb[0].mxu0
        %1857 = vmatprep.mubr.f32.mxu0 0.0
        %1858 = vmatmul.mubr.f32.gmra.mrb[0].mxu0 %v1736
        %v1859 = vpop.f32.mrb[0].mxu0
        %v1860 = vadd.f32 0.0, %v1859
        %v1861 = vpop.f32.mrb[0].mxu0
        %1862 = vmatprep.mubr.f32.mxu0 0.0
        %1863 = vmatmul.mubr.f32.gmra.mrb[0].mxu0 %v1737
        %v1864 = vpop.f32.mrb[0].mxu0
        %v1865 = vadd.f32 0.0, %v1864
        %v1866 = vpop.f32.mrb[0].mxu0
        %1867 = vmatprep.mubr.f32.mxu0 0.0
        %1868 = vmatmul.mubr.f32.gmra.mrb[0].mxu0 %v1738
        %v1869 = vpop.f32.mrb[0].mxu0
        %v1870 = vadd.f32 0.0, %v1869
        %v1871 = vpop.f32.mrb[0].mxu0
        %1872 = vmatprep.mubr.f32.mxu0 0.0
        %1873 = vmatmul.mubr.f32.gmra.mrb[0].mxu0 %v1739
        %v1874 = vpop.f32.mrb[0].mxu0
        %v1875 = vadd.f32 0.0, %v1874
        %v1876 = vpop.f32.mrb[0].mxu0
        %1877 = vmatprep.mubr.f32.mxu0 0.0
        %1878 = vmatmul.mubr.f32.gmra.mrb[0].mxu0 %v1740
        %v1879 = vpop.f32.mrb[0].mxu0
        %v1880 = vadd.f32 0.0, %v1879
        %v1881 = vpop.f32.mrb[0].mxu0
        %1882 = vmatprep.mubr.f32.mxu0 0.0
        %1883 = vmatmul.mubr.f32.gmra.mrb[0].mxu0 %v1741
        %v1884 = vpop.f32.mrb[0].mxu0
        %v1885 = vadd.f32 0.0, %v1884
        %v1886 = vpop.f32.mrb[0].mxu0
        %1887 = vmatprep.mubr.f32.mxu0 0.0
        %1888 = vmatmul.mubr.f32.gmra.mrb[0].mxu0 %v1742
        %v1889 = vpop.f32.mrb[0].mxu0
        %v1890 = vadd.f32 0.0, %v1889
        %v1891 = vpop.f32.mrb[0].mxu0
        %1892 = vmatprep.mubr.f32.mxu0 0.0
        %1893 = vmatmul.mubr.f32.gmra.mrb[0].mxu0 %v1743
        %v1894 = vpop.f32.mrb[0].mxu0
        %v1895 = vadd.f32 0.0, %v1894
        %v1896 = vpop.f32.mrb[0].mxu0
        %1897 = vmatprep.mubr.f32.mxu0 0.0
        %1898 = vmatmul.mubr.f32.gmra.mrb[0].mxu0 %v1744
        %v1899 = vpop.f32.mrb[0].mxu0
        %v1900 = vadd.f32 0.0, %v1899
        %v1901 = vpop.f32.mrb[0].mxu0
        %1902 = vmatprep.mubr.f32.mxu0 0.0
        %1903 = vmatmul.mubr.f32.gmra.mrb[0].mxu0 %v1745
        %v1904 = vpop.f32.mrb[0].mxu0
        %v1905 = vadd.f32 0.0, %v1904
        %v1906 = vpop.f32.mrb[0].mxu0
        %1907 = vmatprep.mubr.f32.mxu0 0.0
        %1908 = vmatmul.mubr.f32.gmra.mrb[0].mxu0 %v1746
        %v1909 = vpop.f32.mrb[0].mxu0
        %v1910 = vadd.f32 0.0, %v1909
        %v1911 = vpop.f32.mrb[0].mxu0
        %1912 = vmatprep.mubr.f32.mxu0 0.0
        %1913 = vmatmul.mubr.f32.gmra.mrb[0].mxu0 %v1747
        %v1914 = vpop.f32.mrb[0].mxu0
        %v1915 = vadd.f32 0.0, %v1914
        %v1916 = vpop.f32.mrb[0].mxu0
        %1917 = vmatprep.mubr.f32.mxu0 0.0
        %1918 = vmatmul.mubr.f32.gmra.mrb[0].mxu0 %v1748
        %v1919 = vpop.f32.mrb[0].mxu0
        %v1920 = vadd.f32 0.0, %v1919
        %v1921 = vpop.f32.mrb[0].mxu0
        %1922 = vmatprep.mubr.f32.mxu0 0.0
        %1923 = vmatmul.mubr.f32.gmra.mrb[0].mxu0 %v1749
        %v1924 = vpop.f32.mrb[0].mxu0
        %v1925 = vadd.f32 0.0, %v1924
        %v1926 = vpop.f32.mrb[0].mxu0
        %1927 = vmatprep.mubr.f32.mxu0 0.0
        %1928 = vmatmul.mubr.f32.gmra.mrb[0].mxu0 %v1750
        %v1929 = vpop.f32.mrb[0].mxu0
        %v1930 = vadd.f32 0.0, %v1929
        %v1931 = vpop.f32.mrb[0].mxu0
        %1932 = vmatprep.mubr.f32.mxu0 0.0
        %1933 = vmatmul.mubr.f32.gmra.mrb[0].mxu0 %v1751
        %v1934 = vpop.f32.mrb[0].mxu0
        %v1935 = vadd.f32 0.0, %v1934
        %v1936 = vpop.f32.mrb[0].mxu0
        %1937 = vmatprep.mubr.f32.mxu0 0.0
        %1938 = vmatmul.mubr.f32.gmra.mrb[0].mxu0 %v1752
        %v1939 = vpop.f32.mrb[0].mxu0
        %v1940 = vadd.f32 0.0, %v1939
        %v1941 = vpop.f32.mrb[0].mxu0
        %1942 = vmatprep.mubr.f32.mxu0 0.0
        %1943 = vmatmul.mubr.f32.gmra.mrb[0].mxu0 %v1753
        %v1944 = vpop.f32.mrb[0].mxu0
        %v1945 = vadd.f32 0.0, %v1944
        %v1946 = vpop.f32.mrb[0].mxu0
        %1947 = vmatprep.mubr.f32.mxu0 0.0
        %1948 = vmatmul.mubr.f32.gmra.mrb[0].mxu0 %v1754
        %v1949 = vpop.f32.mrb[0].mxu0
        %v1950 = vadd.f32 0.0, %v1949
        %v1951 = vpop.f32.mrb[0].mxu0
        %1952 = vmatprep.mubr.f32.mxu0 0.0
        %1953 = vmatmul.mubr.f32.gmra.mrb[0].mxu0 %v1755
        %v1954 = vpop.f32.mrb[0].mxu0
        %v1955 = vadd.f32 0.0, %v1954
        %v1956 = vpop.f32.mrb[0].mxu0
        %1957 = vmatprep.mubr.f32.mxu0 0.0
        %1958 = vmatmul.mubr.f32.gmra.mrb[0].mxu0 %v1756
        %v1959 = vpop.f32.mrb[0].mxu0
        %v1960 = vadd.f32 0.0, %v1959
        %v1961 = vpop.f32.mrb[0].mxu0
        %1962 = vmatprep.mubr.f32.mxu0 0.0
        %1963 = vmatmul.mubr.f32.gmra.mrb[0].mxu0 %v1757
        %v1964 = vpop.f32.mrb[0].mxu0
        %v1965 = vadd.f32 0.0, %v1964
        %v1966 = vpop.f32.mrb[0].mxu0
        %1967 = vmatprep.mubr.f32.mxu0 0.0
        %1968 = vmatmul.mubr.f32.gmra.mrb[0].mxu0 %v1758
        %v1969 = vpop.f32.mrb[0].mxu0
        %v1970 = vadd.f32 0.0, %v1969
        %v1971 = vpop.f32.mrb[0].mxu0
        %1972 = vmatprep.mubr.f32.mxu0 0.0
        %1973 = vmatmul.mubr.f32.gmra.mrb[0].mxu0 %v1759
        %v1974 = vpop.f32.mrb[0].mxu0
        %v1975 = vadd.f32 0.0, %v1974
        %v1976 = vpop.f32.mrb[0].mxu0
        %1977 = vmatprep.mubr.f32.mxu0 0.0
        %1978 = vmatmul.mubr.f32.gmra.mrb[0].mxu0 %v1760
        %v1979 = vpop.f32.mrb[0].mxu0
        %v1980 = vadd.f32 0.0, %v1979
        %v1981 = vpop.f32.mrb[0].mxu0
        %1982 = vmatprep.mubr.f32.mxu0 0.0
        %1983 = vmatmul.mubr.f32.gmra.mrb[0].mxu0 %v1761
        %v1984 = vpop.f32.mrb[0].mxu0
        %v1985 = vadd.f32 0.0, %v1984
        %v1986 = vpop.f32.mrb[0].mxu0
        %1987 = vmatprep.mubr.f32.mxu0 0.0
        %1988 = vmatmul.mubr.f32.gmra.mrb[0].mxu0 %v1762
        %v1989 = vpop.f32.mrb[0].mxu0
        %v1990 = vadd.f32 0.0, %v1989
        %v1991 = vpop.f32.mrb[0].mxu0
        %1992 = vmatprep.mubr.f32.mxu0 0.0
        %1993 = vmatmul.mubr.f32.gmra.mrb[0].mxu0 %v1763
        %v1994 = vpop.f32.mrb[0].mxu0
        %v1995 = vadd.f32 0.0, %v1994
        %v1996 = vpop.f32.mrb[0].mxu0
        %1997 = vmatprep.mubr.f32.mxu0 0.0
        %1998 = vmatmul.mubr.f32.gmra.mrb[0].mxu0 %v1764
        %v1999 = vpop.f32.mrb[0].mxu0
        %v2000 = vadd.f32 0.0, %v1999
        %v2001 = vpop.f32.mrb[0].mxu0
        %2002 = vmatprep.mubr.f32.mxu0 0.0
        %2003 = vmatmul.mubr.f32.gmra.mrb[0].mxu0 %v1765
        %v2004 = vpop.f32.mrb[0].mxu0
        %v2005 = vadd.f32 0.0, %v2004
        %v2006 = vpop.f32.mrb[0].mxu0
        %2007 = vdwg.mxu0
        %v2008 = vadd.f32 %v1702, %v1850
        %v2009 = vadd.f32 %v1703, %v1855
        %v2010 = vadd.f32 %v1704, %v1860
        %v2011 = vadd.f32 %v1705, %v1865
        %v2012 = vadd.f32 %v1706, %v1870
        %v2013 = vadd.f32 %v1707, %v1875
        %v2014 = vadd.f32 %v1708, %v1880
        %v2015 = vadd.f32 %v1709, %v1885
        %v2016 = vadd.f32 %v1710, %v1890
        %v2017 = vadd.f32 %v1711, %v1895
        %v2018 = vadd.f32 %v1712, %v1900
        %v2019 = vadd.f32 %v1713, %v1905
        %v2020 = vadd.f32 %v1714, %v1910
        %v2021 = vadd.f32 %v1715, %v1915
        %v2022 = vadd.f32 %v1716, %v1920
        %v2023 = vadd.f32 %v1717, %v1925
        %v2024 = vadd.f32 %v1718, %v1930
        %v2025 = vadd.f32 %v1719, %v1935
        %v2026 = vadd.f32 %v1720, %v1940
        %v2027 = vadd.f32 %v1721, %v1945
        %v2028 = vadd.f32 %v1722, %v1950
        %v2029 = vadd.f32 %v1723, %v1955
        %v2030 = vadd.f32 %v1724, %v1960
        %v2031 = vadd.f32 %v1725, %v1965
        %v2032 = vadd.f32 %v1726, %v1970
        %v2033 = vadd.f32 %v1727, %v1975
        %v2034 = vadd.f32 %v1728, %v1980
        %v2035 = vadd.f32 %v1729, %v1985
        %v2036 = vadd.f32 %v1730, %v1990
        %v2037 = vadd.f32 %v1731, %v1995
        %v2038 = vadd.f32 %v1732, %v2000
        %v2039 = vadd.f32 %v1733, %v2005
        %s2040 = scalar_lea.vmem %s235, 48 [#allocation2]
        %v2041 = vld [vmem:[%s2040] sm:$0xff]
        %v2042 = vld [vmem:[%s2040 + $0x8] sm:$0xff]
        %v2043 = vld [vmem:[%s2040 + $0x18] sm:$0xff]
        %v2044 = vld [vmem:[%s2040 + $0x20] sm:$0xff]
        %v2045 = vld [vmem:[%s2040 + $0x30] sm:$0xff]
        %v2046 = vld [vmem:[%s2040 + $0x38] sm:$0xff]
        %v2047 = vld [vmem:[%s2040 + $0x48] sm:$0xff]
        %v2048 = vld [vmem:[%s2040 + $0x50] sm:$0xff]
        %v2049 = vld [vmem:[%s2040 + $0x60] sm:$0xff]
        %v2050 = vld [vmem:[%s2040 + $0x68] sm:$0xff]
        %v2051 = vld [vmem:[%s2040 + $0x78] sm:$0xff]
        %v2052 = vld [vmem:[%s2040 + $0x80] sm:$0xff]
        %v2053 = vld [vmem:[%s2040 + $0x90] sm:$0xff]
        %v2054 = vld [vmem:[%s2040 + $0x98] sm:$0xff]
        %v2055 = vld [vmem:[%s2040 + $0xa8] sm:$0xff]
        %v2056 = vld [vmem:[%s2040 + $0xb0] sm:$0xff]
        %v2057 = vld [vmem:[%s2040 + $0xc0] sm:$0xff]
        %v2058 = vld [vmem:[%s2040 + $0xc8] sm:$0xff]
        %v2059 = vld [vmem:[%s2040 + $0xd8] sm:$0xff]
        %v2060 = vld [vmem:[%s2040 + $0xe0] sm:$0xff]
        %v2061 = vld [vmem:[%s2040 + $0xf0] sm:$0xff]
        %v2062 = vld [vmem:[%s2040 + $0xf8] sm:$0xff]
        %v2063 = vld [vmem:[%s2040 + $0x108] sm:$0xff]
        %v2064 = vld [vmem:[%s2040 + $0x110] sm:$0xff]
        %v2065 = vld [vmem:[%s2040 + $0x120] sm:$0xff]
        %v2066 = vld [vmem:[%s2040 + $0x128] sm:$0xff]
        %v2067 = vld [vmem:[%s2040 + $0x138] sm:$0xff]
        %v2068 = vld [vmem:[%s2040 + $0x140] sm:$0xff]
        %v2069 = vld [vmem:[%s2040 + $0x150] sm:$0xff]
        %v2070 = vld [vmem:[%s2040 + $0x158] sm:$0xff]
        %v2071 = vld [vmem:[%s2040 + $0x168] sm:$0xff]
        %v2072 = vld [vmem:[%s2040 + $0x170] sm:$0xff]
        %s2073 = scalar_lea.vmem [#allocation5], 768
        %v2074 = vld [vmem:[%s2073] sm:$0xff]
        %v2075 = vld [vmem:[%s2073 + $0x8] sm:$0xff]
        %v2076 = vld [vmem:[%s2073 + $0x10] sm:$0xff]
        %v2077 = vld [vmem:[%s2073 + $0x18] sm:$0xff]
        %v2078 = vld [vmem:[%s2073 + $0x20] sm:$0xff]
        %v2079 = vld [vmem:[%s2073 + $0x28] sm:$0xff]
        %v2080 = vld [vmem:[%s2073 + $0x30] sm:$0xff]
        %v2081 = vld [vmem:[%s2073 + $0x38] sm:$0xff]
        %v2082 = vld [vmem:[%s2073 + $0x40] sm:$0xff]
        %v2083 = vld [vmem:[%s2073 + $0x48] sm:$0xff]
        %v2084 = vld [vmem:[%s2073 + $0x50] sm:$0xff]
        %v2085 = vld [vmem:[%s2073 + $0x58] sm:$0xff]
        %v2086 = vld [vmem:[%s2073 + $0x60] sm:$0xff]
        %v2087 = vld [vmem:[%s2073 + $0x68] sm:$0xff]
        %v2088 = vld [vmem:[%s2073 + $0x70] sm:$0xff]
        %v2089 = vld [vmem:[%s2073 + $0x78] sm:$0xff]
        %2090 = vmatprep.subr.mxu0 0.0
        %2091 = vmatpush1.msra.mxu0 %v2074
        %2092 = vmatprep.subr.mxu0 0.0
        %2093 = vmatpush1.msra.mxu0 %v2075
        %2094 = vmatprep.subr.mxu0 0.0
        %2095 = vmatpush1.msra.mxu0 %v2076
        %2096 = vmatprep.subr.mxu0 0.0
        %2097 = vmatpush1.msra.mxu0 %v2077
        %2098 = vmatprep.subr.mxu0 0.0
        %2099 = vmatpush1.msra.mxu0 %v2078
        %2100 = vmatprep.subr.mxu0 0.0
        %2101 = vmatpush1.msra.mxu0 %v2079
        %2102 = vmatprep.subr.mxu0 0.0
        %2103 = vmatpush1.msra.mxu0 %v2080
        %2104 = vmatprep.subr.mxu0 0.0
        %2105 = vmatpush1.msra.mxu0 %v2081
        %2106 = vmatprep.subr.mxu0 0.0
        %2107 = vmatpush1.msra.mxu0 %v2082
        %2108 = vmatprep.subr.mxu0 0.0
        %2109 = vmatpush1.msra.mxu0 %v2083
        %2110 = vmatprep.subr.mxu0 0.0
        %2111 = vmatpush1.msra.mxu0 %v2084
        %2112 = vmatprep.subr.mxu0 0.0
        %2113 = vmatpush1.msra.mxu0 %v2085
        %2114 = vmatprep.subr.mxu0 0.0
        %2115 = vmatpush1.msra.mxu0 %v2086
        %2116 = vmatprep.subr.mxu0 0.0
        %2117 = vmatpush1.msra.mxu0 %v2087
        %2118 = vmatprep.subr.mxu0 0.0
        %2119 = vmatpush1.msra.mxu0 %v2088
        %2120 = vmatprep.subr.mxu0 0.0
        %2121 = vmatpush1.msra.mxu0 %v2089
        %2122 = vmatprep.subr.mxu0 0.0
        %2123 = vmatpush1.msra.mxu0 0.0
        %2124 = vmatprep.subr.mxu0 0.0
        %2125 = vmatpush1.msra.mxu0 0.0
        %2126 = vmatprep.subr.mxu0 0.0
        %2127 = vmatpush1.msra.mxu0 0.0
        %2128 = vmatprep.subr.mxu0 0.0
        %2129 = vmatpush1.msra.mxu0 0.0
        %2130 = vmatprep.subr.mxu0 0.0
        %2131 = vmatpush1.msra.mxu0 0.0
        %2132 = vmatprep.subr.mxu0 0.0
        %2133 = vmatpush1.msra.mxu0 0.0
        %2134 = vmatprep.subr.mxu0 0.0
        %2135 = vmatpush1.msra.mxu0 0.0
        %2136 = vmatprep.subr.mxu0 0.0
        %2137 = vmatpush1.msra.mxu0 0.0
        %2138 = vmatprep.subr.mxu0 0.0
        %2139 = vmatpush1.msra.mxu0 0.0
        %2140 = vmatprep.subr.mxu0 0.0
        %2141 = vmatpush1.msra.mxu0 0.0
        %2142 = vmatprep.subr.mxu0 0.0
        %2143 = vmatpush1.msra.mxu0 0.0
        %2144 = vmatprep.subr.mxu0 0.0
        %2145 = vmatpush1.msra.mxu0 0.0
        %2146 = vmatprep.subr.mxu0 0.0
        %2147 = vmatpush1.msra.mxu0 0.0
        %2148 = vmatprep.subr.mxu0 0.0
        %2149 = vmatpush1.msra.mxu0 0.0
        %2150 = vmatprep.subr.mxu0 0.0
        %2151 = vmatpush1.msra.mxu0 0.0
        %2152 = vmatprep.subr.mxu0 0.0
        %2153 = vmatpush1.msra.mxu0 0.0
        %2154 = vmatprep.mubr.f32.mxu0 0.0
        %2155 = vmatmul.mubr.f32.gmra.mrb[0].mxu0 %v2041
        %v2156 = vpop.f32.mrb[0].mxu0
        %v2157 = vadd.f32 0.0, %v2156
        %v2158 = vpop.f32.mrb[0].mxu0
        %2159 = vmatprep.mubr.f32.mxu0 0.0
        %2160 = vmatmul.mubr.f32.gmra.mrb[0].mxu0 %v2042
        %v2161 = vpop.f32.mrb[0].mxu0
        %v2162 = vadd.f32 0.0, %v2161
        %v2163 = vpop.f32.mrb[0].mxu0
        %2164 = vmatprep.mubr.f32.mxu0 0.0
        %2165 = vmatmul.mubr.f32.gmra.mrb[0].mxu0 %v2043
        %v2166 = vpop.f32.mrb[0].mxu0
        %v2167 = vadd.f32 0.0, %v2166
        %v2168 = vpop.f32.mrb[0].mxu0
        %2169 = vmatprep.mubr.f32.mxu0 0.0
        %2170 = vmatmul.mubr.f32.gmra.mrb[0].mxu0 %v2044
        %v2171 = vpop.f32.mrb[0].mxu0
        %v2172 = vadd.f32 0.0, %v2171
        %v2173 = vpop.f32.mrb[0].mxu0
        %2174 = vmatprep.mubr.f32.mxu0 0.0
        %2175 = vmatmul.mubr.f32.gmra.mrb[0].mxu0 %v2045
        %v2176 = vpop.f32.mrb[0].mxu0
        %v2177 = vadd.f32 0.0, %v2176
        %v2178 = vpop.f32.mrb[0].mxu0
        %2179 = vmatprep.mubr.f32.mxu0 0.0
        %2180 = vmatmul.mubr.f32.gmra.mrb[0].mxu0 %v2046
        %v2181 = vpop.f32.mrb[0].mxu0
        %v2182 = vadd.f32 0.0, %v2181
        %v2183 = vpop.f32.mrb[0].mxu0
        %2184 = vmatprep.mubr.f32.mxu0 0.0
        %2185 = vmatmul.mubr.f32.gmra.mrb[0].mxu0 %v2047
        %v2186 = vpop.f32.mrb[0].mxu0
        %v2187 = vadd.f32 0.0, %v2186
        %v2188 = vpop.f32.mrb[0].mxu0
        %2189 = vmatprep.mubr.f32.mxu0 0.0
        %2190 = vmatmul.mubr.f32.gmra.mrb[0].mxu0 %v2048
        %v2191 = vpop.f32.mrb[0].mxu0
        %v2192 = vadd.f32 0.0, %v2191
        %v2193 = vpop.f32.mrb[0].mxu0
        %2194 = vmatprep.mubr.f32.mxu0 0.0
        %2195 = vmatmul.mubr.f32.gmra.mrb[0].mxu0 %v2049
        %v2196 = vpop.f32.mrb[0].mxu0
        %v2197 = vadd.f32 0.0, %v2196
        %v2198 = vpop.f32.mrb[0].mxu0
        %2199 = vmatprep.mubr.f32.mxu0 0.0
        %2200 = vmatmul.mubr.f32.gmra.mrb[0].mxu0 %v2050
        %v2201 = vpop.f32.mrb[0].mxu0
        %v2202 = vadd.f32 0.0, %v2201
        %v2203 = vpop.f32.mrb[0].mxu0
        %2204 = vmatprep.mubr.f32.mxu0 0.0
        %2205 = vmatmul.mubr.f32.gmra.mrb[0].mxu0 %v2051
        %v2206 = vpop.f32.mrb[0].mxu0
        %v2207 = vadd.f32 0.0, %v2206
        %v2208 = vpop.f32.mrb[0].mxu0
        %2209 = vmatprep.mubr.f32.mxu0 0.0
        %2210 = vmatmul.mubr.f32.gmra.mrb[0].mxu0 %v2052
        %v2211 = vpop.f32.mrb[0].mxu0
        %v2212 = vadd.f32 0.0, %v2211
        %v2213 = vpop.f32.mrb[0].mxu0
        %2214 = vmatprep.mubr.f32.mxu0 0.0
        %2215 = vmatmul.mubr.f32.gmra.mrb[0].mxu0 %v2053
        %v2216 = vpop.f32.mrb[0].mxu0
        %v2217 = vadd.f32 0.0, %v2216
        %v2218 = vpop.f32.mrb[0].mxu0
        %2219 = vmatprep.mubr.f32.mxu0 0.0
        %2220 = vmatmul.mubr.f32.gmra.mrb[0].mxu0 %v2054
        %v2221 = vpop.f32.mrb[0].mxu0
        %v2222 = vadd.f32 0.0, %v2221
        %v2223 = vpop.f32.mrb[0].mxu0
        %2224 = vmatprep.mubr.f32.mxu0 0.0
        %2225 = vmatmul.mubr.f32.gmra.mrb[0].mxu0 %v2055
        %v2226 = vpop.f32.mrb[0].mxu0
        %v2227 = vadd.f32 0.0, %v2226
        %v2228 = vpop.f32.mrb[0].mxu0
        %2229 = vmatprep.mubr.f32.mxu0 0.0
        %2230 = vmatmul.mubr.f32.gmra.mrb[0].mxu0 %v2056
        %v2231 = vpop.f32.mrb[0].mxu0
        %v2232 = vadd.f32 0.0, %v2231
        %v2233 = vpop.f32.mrb[0].mxu0
        %2234 = vmatprep.mubr.f32.mxu0 0.0
        %2235 = vmatmul.mubr.f32.gmra.mrb[0].mxu0 %v2057
        %v2236 = vpop.f32.mrb[0].mxu0
        %v2237 = vadd.f32 0.0, %v2236
        %v2238 = vpop.f32.mrb[0].mxu0
        %2239 = vmatprep.mubr.f32.mxu0 0.0
        %2240 = vmatmul.mubr.f32.gmra.mrb[0].mxu0 %v2058
        %v2241 = vpop.f32.mrb[0].mxu0
        %v2242 = vadd.f32 0.0, %v2241
        %v2243 = vpop.f32.mrb[0].mxu0
        %2244 = vmatprep.mubr.f32.mxu0 0.0
        %2245 = vmatmul.mubr.f32.gmra.mrb[0].mxu0 %v2059
        %v2246 = vpop.f32.mrb[0].mxu0
        %v2247 = vadd.f32 0.0, %v2246
        %v2248 = vpop.f32.mrb[0].mxu0
        %2249 = vmatprep.mubr.f32.mxu0 0.0
        %2250 = vmatmul.mubr.f32.gmra.mrb[0].mxu0 %v2060
        %v2251 = vpop.f32.mrb[0].mxu0
        %v2252 = vadd.f32 0.0, %v2251
        %v2253 = vpop.f32.mrb[0].mxu0
        %2254 = vmatprep.mubr.f32.mxu0 0.0
        %2255 = vmatmul.mubr.f32.gmra.mrb[0].mxu0 %v2061
        %v2256 = vpop.f32.mrb[0].mxu0
        %v2257 = vadd.f32 0.0, %v2256
        %v2258 = vpop.f32.mrb[0].mxu0
        %2259 = vmatprep.mubr.f32.mxu0 0.0
        %2260 = vmatmul.mubr.f32.gmra.mrb[0].mxu0 %v2062
        %v2261 = vpop.f32.mrb[0].mxu0
        %v2262 = vadd.f32 0.0, %v2261
        %v2263 = vpop.f32.mrb[0].mxu0
        %2264 = vmatprep.mubr.f32.mxu0 0.0
        %2265 = vmatmul.mubr.f32.gmra.mrb[0].mxu0 %v2063
        %v2266 = vpop.f32.mrb[0].mxu0
        %v2267 = vadd.f32 0.0, %v2266
        %v2268 = vpop.f32.mrb[0].mxu0
        %2269 = vmatprep.mubr.f32.mxu0 0.0
        %2270 = vmatmul.mubr.f32.gmra.mrb[0].mxu0 %v2064
        %v2271 = vpop.f32.mrb[0].mxu0
        %v2272 = vadd.f32 0.0, %v2271
        %v2273 = vpop.f32.mrb[0].mxu0
        %2274 = vmatprep.mubr.f32.mxu0 0.0
        %2275 = vmatmul.mubr.f32.gmra.mrb[0].mxu0 %v2065
        %v2276 = vpop.f32.mrb[0].mxu0
        %v2277 = vadd.f32 0.0, %v2276
        %v2278 = vpop.f32.mrb[0].mxu0
        %2279 = vmatprep.mubr.f32.mxu0 0.0
        %2280 = vmatmul.mubr.f32.gmra.mrb[0].mxu0 %v2066
        %v2281 = vpop.f32.mrb[0].mxu0
        %v2282 = vadd.f32 0.0, %v2281
        %v2283 = vpop.f32.mrb[0].mxu0
        %2284 = vmatprep.mubr.f32.mxu0 0.0
        %2285 = vmatmul.mubr.f32.gmra.mrb[0].mxu0 %v2067
        %v2286 = vpop.f32.mrb[0].mxu0
        %v2287 = vadd.f32 0.0, %v2286
        %v2288 = vpop.f32.mrb[0].mxu0
        %2289 = vmatprep.mubr.f32.mxu0 0.0
        %2290 = vmatmul.mubr.f32.gmra.mrb[0].mxu0 %v2068
        %v2291 = vpop.f32.mrb[0].mxu0
        %v2292 = vadd.f32 0.0, %v2291
        %v2293 = vpop.f32.mrb[0].mxu0
        %2294 = vmatprep.mubr.f32.mxu0 0.0
        %2295 = vmatmul.mubr.f32.gmra.mrb[0].mxu0 %v2069
        %v2296 = vpop.f32.mrb[0].mxu0
        %v2297 = vadd.f32 0.0, %v2296
        %v2298 = vpop.f32.mrb[0].mxu0
        %2299 = vmatprep.mubr.f32.mxu0 0.0
        %2300 = vmatmul.mubr.f32.gmra.mrb[0].mxu0 %v2070
        %v2301 = vpop.f32.mrb[0].mxu0
        %v2302 = vadd.f32 0.0, %v2301
        %v2303 = vpop.f32.mrb[0].mxu0
        %2304 = vmatprep.mubr.f32.mxu0 0.0
        %2305 = vmatmul.mubr.f32.gmra.mrb[0].mxu0 %v2071
        %v2306 = vpop.f32.mrb[0].mxu0
        %v2307 = vadd.f32 0.0, %v2306
        %v2308 = vpop.f32.mrb[0].mxu0
        %2309 = vmatprep.mubr.f32.mxu0 0.0
        %2310 = vmatmul.mubr.f32.gmra.mrb[0].mxu0 %v2072
        %v2311 = vpop.f32.mrb[0].mxu0
        %v2312 = vadd.f32 0.0, %v2311
        %v2313 = vpop.f32.mrb[0].mxu0
        %2314 = vdwg.mxu0
        %v2315 = vadd.f32 %v2008, %v2157
        %v2316 = vadd.f32 %v2009, %v2162
        %v2317 = vadd.f32 %v2010, %v2167
        %v2318 = vadd.f32 %v2011, %v2172
        %v2319 = vadd.f32 %v2012, %v2177
        %v2320 = vadd.f32 %v2013, %v2182
        %v2321 = vadd.f32 %v2014, %v2187
        %v2322 = vadd.f32 %v2015, %v2192
        %v2323 = vadd.f32 %v2016, %v2197
        %v2324 = vadd.f32 %v2017, %v2202
        %v2325 = vadd.f32 %v2018, %v2207
        %v2326 = vadd.f32 %v2019, %v2212
        %v2327 = vadd.f32 %v2020, %v2217
        %v2328 = vadd.f32 %v2021, %v2222
        %v2329 = vadd.f32 %v2022, %v2227
        %v2330 = vadd.f32 %v2023, %v2232
        %v2331 = vadd.f32 %v2024, %v2237
        %v2332 = vadd.f32 %v2025, %v2242
        %v2333 = vadd.f32 %v2026, %v2247
        %v2334 = vadd.f32 %v2027, %v2252
        %v2335 = vadd.f32 %v2028, %v2257
        %v2336 = vadd.f32 %v2029, %v2262
        %v2337 = vadd.f32 %v2030, %v2267
        %v2338 = vadd.f32 %v2031, %v2272
        %v2339 = vadd.f32 %v2032, %v2277
        %v2340 = vadd.f32 %v2033, %v2282
        %v2341 = vadd.f32 %v2034, %v2287
        %v2342 = vadd.f32 %v2035, %v2292
        %v2343 = vadd.f32 %v2036, %v2297
        %v2344 = vadd.f32 %v2037, %v2302
        %v2345 = vadd.f32 %v2038, %v2307
        %v2346 = vadd.f32 %v2039, %v2312
        %v2347 = vld [vmem:[%s2040 + $0x1] sm:$0xff]
        %v2348 = vld [vmem:[%s2040 + $0x9] sm:$0xff]
        %v2349 = vld [vmem:[%s2040 + $0x19] sm:$0xff]
        %v2350 = vld [vmem:[%s2040 + $0x21] sm:$0xff]
        %v2351 = vld [vmem:[%s2040 + $0x31] sm:$0xff]
        %v2352 = vld [vmem:[%s2040 + $0x39] sm:$0xff]
        %v2353 = vld [vmem:[%s2040 + $0x49] sm:$0xff]
        %v2354 = vld [vmem:[%s2040 + $0x51] sm:$0xff]
        %v2355 = vld [vmem:[%s2040 + $0x61] sm:$0xff]
        %v2356 = vld [vmem:[%s2040 + $0x69] sm:$0xff]
        %v2357 = vld [vmem:[%s2040 + $0x79] sm:$0xff]
        %v2358 = vld [vmem:[%s2040 + $0x81] sm:$0xff]
        %v2359 = vld [vmem:[%s2040 + $0x91] sm:$0xff]
        %v2360 = vld [vmem:[%s2040 + $0x99] sm:$0xff]
        %v2361 = vld [vmem:[%s2040 + $0xa9] sm:$0xff]
        %v2362 = vld [vmem:[%s2040 + $0xb1] sm:$0xff]
        %v2363 = vld [vmem:[%s2040 + $0xc1] sm:$0xff]
        %v2364 = vld [vmem:[%s2040 + $0xc9] sm:$0xff]
        %v2365 = vld [vmem:[%s2040 + $0xd9] sm:$0xff]
        %v2366 = vld [vmem:[%s2040 + $0xe1] sm:$0xff]
        %v2367 = vld [vmem:[%s2040 + $0xf1] sm:$0xff]
        %v2368 = vld [vmem:[%s2040 + $0xf9] sm:$0xff]
        %v2369 = vld [vmem:[%s2040 + $0x109] sm:$0xff]
        %v2370 = vld [vmem:[%s2040 + $0x111] sm:$0xff]
        %v2371 = vld [vmem:[%s2040 + $0x121] sm:$0xff]
        %v2372 = vld [vmem:[%s2040 + $0x129] sm:$0xff]
        %v2373 = vld [vmem:[%s2040 + $0x139] sm:$0xff]
        %v2374 = vld [vmem:[%s2040 + $0x141] sm:$0xff]
        %v2375 = vld [vmem:[%s2040 + $0x151] sm:$0xff]
        %v2376 = vld [vmem:[%s2040 + $0x159] sm:$0xff]
        %v2377 = vld [vmem:[%s2040 + $0x169] sm:$0xff]
        %v2378 = vld [vmem:[%s2040 + $0x171] sm:$0xff]
        %s2379 = scalar_lea.vmem [#allocation5], 896
        %v2380 = vld [vmem:[%s2379] sm:$0xff]
        %v2381 = vld [vmem:[%s2379 + $0x8] sm:$0xff]
        %v2382 = vld [vmem:[%s2379 + $0x10] sm:$0xff]
        %v2383 = vld [vmem:[%s2379 + $0x18] sm:$0xff]
        %v2384 = vld [vmem:[%s2379 + $0x20] sm:$0xff]
        %v2385 = vld [vmem:[%s2379 + $0x28] sm:$0xff]
        %v2386 = vld [vmem:[%s2379 + $0x30] sm:$0xff]
        %v2387 = vld [vmem:[%s2379 + $0x38] sm:$0xff]
        %v2388 = vld [vmem:[%s2379 + $0x40] sm:$0xff]
        %v2389 = vld [vmem:[%s2379 + $0x48] sm:$0xff]
        %v2390 = vld [vmem:[%s2379 + $0x50] sm:$0xff]
        %v2391 = vld [vmem:[%s2379 + $0x58] sm:$0xff]
        %v2392 = vld [vmem:[%s2379 + $0x60] sm:$0xff]
        %v2393 = vld [vmem:[%s2379 + $0x68] sm:$0xff]
        %v2394 = vld [vmem:[%s2379 + $0x70] sm:$0xff]
        %v2395 = vld [vmem:[%s2379 + $0x78] sm:$0xff]
        %2396 = vmatprep.subr.mxu0 0.0
        %2397 = vmatpush1.msra.mxu0 %v2380
        %2398 = vmatprep.subr.mxu0 0.0
        %2399 = vmatpush1.msra.mxu0 %v2381
        %2400 = vmatprep.subr.mxu0 0.0
        %2401 = vmatpush1.msra.mxu0 %v2382
        %2402 = vmatprep.subr.mxu0 0.0
        %2403 = vmatpush1.msra.mxu0 %v2383
        %2404 = vmatprep.subr.mxu0 0.0
        %2405 = vmatpush1.msra.mxu0 %v2384
        %2406 = vmatprep.subr.mxu0 0.0
        %2407 = vmatpush1.msra.mxu0 %v2385
        %2408 = vmatprep.subr.mxu0 0.0
        %2409 = vmatpush1.msra.mxu0 %v2386
        %2410 = vmatprep.subr.mxu0 0.0
        %2411 = vmatpush1.msra.mxu0 %v2387
        %2412 = vmatprep.subr.mxu0 0.0
        %2413 = vmatpush1.msra.mxu0 %v2388
        %2414 = vmatprep.subr.mxu0 0.0
        %2415 = vmatpush1.msra.mxu0 %v2389
        %2416 = vmatprep.subr.mxu0 0.0
        %2417 = vmatpush1.msra.mxu0 %v2390
        %2418 = vmatprep.subr.mxu0 0.0
        %2419 = vmatpush1.msra.mxu0 %v2391
        %2420 = vmatprep.subr.mxu0 0.0
        %2421 = vmatpush1.msra.mxu0 %v2392
        %2422 = vmatprep.subr.mxu0 0.0
        %2423 = vmatpush1.msra.mxu0 %v2393
        %2424 = vmatprep.subr.mxu0 0.0
        %2425 = vmatpush1.msra.mxu0 %v2394
        %2426 = vmatprep.subr.mxu0 0.0
        %2427 = vmatpush1.msra.mxu0 %v2395
        %2428 = vmatprep.subr.mxu0 0.0
        %2429 = vmatpush1.msra.mxu0 0.0
        %2430 = vmatprep.subr.mxu0 0.0
        %2431 = vmatpush1.msra.mxu0 0.0
        %2432 = vmatprep.subr.mxu0 0.0
        %2433 = vmatpush1.msra.mxu0 0.0
        %2434 = vmatprep.subr.mxu0 0.0
        %2435 = vmatpush1.msra.mxu0 0.0
        %2436 = vmatprep.subr.mxu0 0.0
        %2437 = vmatpush1.msra.mxu0 0.0
        %2438 = vmatprep.subr.mxu0 0.0
        %2439 = vmatpush1.msra.mxu0 0.0
        %2440 = vmatprep.subr.mxu0 0.0
        %2441 = vmatpush1.msra.mxu0 0.0
        %2442 = vmatprep.subr.mxu0 0.0
        %2443 = vmatpush1.msra.mxu0 0.0
        %2444 = vmatprep.subr.mxu0 0.0
        %2445 = vmatpush1.msra.mxu0 0.0
        %2446 = vmatprep.subr.mxu0 0.0
        %2447 = vmatpush1.msra.mxu0 0.0
        %2448 = vmatprep.subr.mxu0 0.0
        %2449 = vmatpush1.msra.mxu0 0.0
        %2450 = vmatprep.subr.mxu0 0.0
        %2451 = vmatpush1.msra.mxu0 0.0
        %2452 = vmatprep.subr.mxu0 0.0
        %2453 = vmatpush1.msra.mxu0 0.0
        %2454 = vmatprep.subr.mxu0 0.0
        %2455 = vmatpush1.msra.mxu0 0.0
        %2456 = vmatprep.subr.mxu0 0.0
        %2457 = vmatpush1.msra.mxu0 0.0
        %2458 = vmatprep.subr.mxu0 0.0
        %2459 = vmatpush1.msra.mxu0 0.0
        %2460 = vmatprep.mubr.f32.mxu0 0.0
        %2461 = vmatmul.mubr.f32.gmra.mrb[0].mxu0 %v2347
        %v2462 = vpop.f32.mrb[0].mxu0
        %v2463 = vadd.f32 0.0, %v2462
        %v2464 = vpop.f32.mrb[0].mxu0
        %2465 = vmatprep.mubr.f32.mxu0 0.0
        %2466 = vmatmul.mubr.f32.gmra.mrb[0].mxu0 %v2348
        %v2467 = vpop.f32.mrb[0].mxu0
        %v2468 = vadd.f32 0.0, %v2467
        %v2469 = vpop.f32.mrb[0].mxu0
        %2470 = vmatprep.mubr.f32.mxu0 0.0
        %2471 = vmatmul.mubr.f32.gmra.mrb[0].mxu0 %v2349
        %v2472 = vpop.f32.mrb[0].mxu0
        %v2473 = vadd.f32 0.0, %v2472
        %v2474 = vpop.f32.mrb[0].mxu0
        %2475 = vmatprep.mubr.f32.mxu0 0.0
        %2476 = vmatmul.mubr.f32.gmra.mrb[0].mxu0 %v2350
        %v2477 = vpop.f32.mrb[0].mxu0
        %v2478 = vadd.f32 0.0, %v2477
        %v2479 = vpop.f32.mrb[0].mxu0
        %2480 = vmatprep.mubr.f32.mxu0 0.0
        %2481 = vmatmul.mubr.f32.gmra.mrb[0].mxu0 %v2351
        %v2482 = vpop.f32.mrb[0].mxu0
        %v2483 = vadd.f32 0.0, %v2482
        %v2484 = vpop.f32.mrb[0].mxu0
        %2485 = vmatprep.mubr.f32.mxu0 0.0
        %2486 = vmatmul.mubr.f32.gmra.mrb[0].mxu0 %v2352
        %v2487 = vpop.f32.mrb[0].mxu0
        %v2488 = vadd.f32 0.0, %v2487
        %v2489 = vpop.f32.mrb[0].mxu0
        %2490 = vmatprep.mubr.f32.mxu0 0.0
        %2491 = vmatmul.mubr.f32.gmra.mrb[0].mxu0 %v2353
        %v2492 = vpop.f32.mrb[0].mxu0
        %v2493 = vadd.f32 0.0, %v2492
        %v2494 = vpop.f32.mrb[0].mxu0
        %2495 = vmatprep.mubr.f32.mxu0 0.0
        %2496 = vmatmul.mubr.f32.gmra.mrb[0].mxu0 %v2354
        %v2497 = vpop.f32.mrb[0].mxu0
        %v2498 = vadd.f32 0.0, %v2497
        %v2499 = vpop.f32.mrb[0].mxu0
        %2500 = vmatprep.mubr.f32.mxu0 0.0
        %2501 = vmatmul.mubr.f32.gmra.mrb[0].mxu0 %v2355
        %v2502 = vpop.f32.mrb[0].mxu0
        %v2503 = vadd.f32 0.0, %v2502
        %v2504 = vpop.f32.mrb[0].mxu0
        %2505 = vmatprep.mubr.f32.mxu0 0.0
        %2506 = vmatmul.mubr.f32.gmra.mrb[0].mxu0 %v2356
        %v2507 = vpop.f32.mrb[0].mxu0
        %v2508 = vadd.f32 0.0, %v2507
        %v2509 = vpop.f32.mrb[0].mxu0
        %2510 = vmatprep.mubr.f32.mxu0 0.0
        %2511 = vmatmul.mubr.f32.gmra.mrb[0].mxu0 %v2357
        %v2512 = vpop.f32.mrb[0].mxu0
        %v2513 = vadd.f32 0.0, %v2512
        %v2514 = vpop.f32.mrb[0].mxu0
        %2515 = vmatprep.mubr.f32.mxu0 0.0
        %2516 = vmatmul.mubr.f32.gmra.mrb[0].mxu0 %v2358
        %v2517 = vpop.f32.mrb[0].mxu0
        %v2518 = vadd.f32 0.0, %v2517
        %v2519 = vpop.f32.mrb[0].mxu0
        %2520 = vmatprep.mubr.f32.mxu0 0.0
        %2521 = vmatmul.mubr.f32.gmra.mrb[0].mxu0 %v2359
        %v2522 = vpop.f32.mrb[0].mxu0
        %v2523 = vadd.f32 0.0, %v2522
        %v2524 = vpop.f32.mrb[0].mxu0
        %2525 = vmatprep.mubr.f32.mxu0 0.0
        %2526 = vmatmul.mubr.f32.gmra.mrb[0].mxu0 %v2360
        %v2527 = vpop.f32.mrb[0].mxu0
        %v2528 = vadd.f32 0.0, %v2527
        %v2529 = vpop.f32.mrb[0].mxu0
        %2530 = vmatprep.mubr.f32.mxu0 0.0
        %2531 = vmatmul.mubr.f32.gmra.mrb[0].mxu0 %v2361
        %v2532 = vpop.f32.mrb[0].mxu0
        %v2533 = vadd.f32 0.0, %v2532
        %v2534 = vpop.f32.mrb[0].mxu0
        %2535 = vmatprep.mubr.f32.mxu0 0.0
        %2536 = vmatmul.mubr.f32.gmra.mrb[0].mxu0 %v2362
        %v2537 = vpop.f32.mrb[0].mxu0
        %v2538 = vadd.f32 0.0, %v2537
        %v2539 = vpop.f32.mrb[0].mxu0
        %2540 = vmatprep.mubr.f32.mxu0 0.0
        %2541 = vmatmul.mubr.f32.gmra.mrb[0].mxu0 %v2363
        %v2542 = vpop.f32.mrb[0].mxu0
        %v2543 = vadd.f32 0.0, %v2542
        %v2544 = vpop.f32.mrb[0].mxu0
        %2545 = vmatprep.mubr.f32.mxu0 0.0
        %2546 = vmatmul.mubr.f32.gmra.mrb[0].mxu0 %v2364
        %v2547 = vpop.f32.mrb[0].mxu0
        %v2548 = vadd.f32 0.0, %v2547
        %v2549 = vpop.f32.mrb[0].mxu0
        %2550 = vmatprep.mubr.f32.mxu0 0.0
        %2551 = vmatmul.mubr.f32.gmra.mrb[0].mxu0 %v2365
        %v2552 = vpop.f32.mrb[0].mxu0
        %v2553 = vadd.f32 0.0, %v2552
        %v2554 = vpop.f32.mrb[0].mxu0
        %2555 = vmatprep.mubr.f32.mxu0 0.0
        %2556 = vmatmul.mubr.f32.gmra.mrb[0].mxu0 %v2366
        %v2557 = vpop.f32.mrb[0].mxu0
        %v2558 = vadd.f32 0.0, %v2557
        %v2559 = vpop.f32.mrb[0].mxu0
        %2560 = vmatprep.mubr.f32.mxu0 0.0
        %2561 = vmatmul.mubr.f32.gmra.mrb[0].mxu0 %v2367
        %v2562 = vpop.f32.mrb[0].mxu0
        %v2563 = vadd.f32 0.0, %v2562
        %v2564 = vpop.f32.mrb[0].mxu0
        %2565 = vmatprep.mubr.f32.mxu0 0.0
        %2566 = vmatmul.mubr.f32.gmra.mrb[0].mxu0 %v2368
        %v2567 = vpop.f32.mrb[0].mxu0
        %v2568 = vadd.f32 0.0, %v2567
        %v2569 = vpop.f32.mrb[0].mxu0
        %2570 = vmatprep.mubr.f32.mxu0 0.0
        %2571 = vmatmul.mubr.f32.gmra.mrb[0].mxu0 %v2369
        %v2572 = vpop.f32.mrb[0].mxu0
        %v2573 = vadd.f32 0.0, %v2572
        %v2574 = vpop.f32.mrb[0].mxu0
        %2575 = vmatprep.mubr.f32.mxu0 0.0
        %2576 = vmatmul.mubr.f32.gmra.mrb[0].mxu0 %v2370
        %v2577 = vpop.f32.mrb[0].mxu0
        %v2578 = vadd.f32 0.0, %v2577
        %v2579 = vpop.f32.mrb[0].mxu0
        %2580 = vmatprep.mubr.f32.mxu0 0.0
        %2581 = vmatmul.mubr.f32.gmra.mrb[0].mxu0 %v2371
        %v2582 = vpop.f32.mrb[0].mxu0
        %v2583 = vadd.f32 0.0, %v2582
        %v2584 = vpop.f32.mrb[0].mxu0
        %2585 = vmatprep.mubr.f32.mxu0 0.0
        %2586 = vmatmul.mubr.f32.gmra.mrb[0].mxu0 %v2372
        %v2587 = vpop.f32.mrb[0].mxu0
        %v2588 = vadd.f32 0.0, %v2587
        %v2589 = vpop.f32.mrb[0].mxu0
        %2590 = vmatprep.mubr.f32.mxu0 0.0
        %2591 = vmatmul.mubr.f32.gmra.mrb[0].mxu0 %v2373
        %v2592 = vpop.f32.mrb[0].mxu0
        %v2593 = vadd.f32 0.0, %v2592
        %v2594 = vpop.f32.mrb[0].mxu0
        %2595 = vmatprep.mubr.f32.mxu0 0.0
        %2596 = vmatmul.mubr.f32.gmra.mrb[0].mxu0 %v2374
        %v2597 = vpop.f32.mrb[0].mxu0
        %v2598 = vadd.f32 0.0, %v2597
        %v2599 = vpop.f32.mrb[0].mxu0
        %2600 = vmatprep.mubr.f32.mxu0 0.0
        %2601 = vmatmul.mubr.f32.gmra.mrb[0].mxu0 %v2375
        %v2602 = vpop.f32.mrb[0].mxu0
        %v2603 = vadd.f32 0.0, %v2602
        %v2604 = vpop.f32.mrb[0].mxu0
        %2605 = vmatprep.mubr.f32.mxu0 0.0
        %2606 = vmatmul.mubr.f32.gmra.mrb[0].mxu0 %v2376
        %v2607 = vpop.f32.mrb[0].mxu0
        %v2608 = vadd.f32 0.0, %v2607
        %v2609 = vpop.f32.mrb[0].mxu0
        %2610 = vmatprep.mubr.f32.mxu0 0.0
        %2611 = vmatmul.mubr.f32.gmra.mrb[0].mxu0 %v2377
        %v2612 = vpop.f32.mrb[0].mxu0
        %v2613 = vadd.f32 0.0, %v2612
        %v2614 = vpop.f32.mrb[0].mxu0
        %2615 = vmatprep.mubr.f32.mxu0 0.0
        %2616 = vmatmul.mubr.f32.gmra.mrb[0].mxu0 %v2378
        %v2617 = vpop.f32.mrb[0].mxu0
        %v2618 = vadd.f32 0.0, %v2617
        %v2619 = vpop.f32.mrb[0].mxu0
        %2620 = vdwg.mxu0
        %v2621 = vadd.f32 %v2315, %v2463
        %v2622 = vadd.f32 %v2316, %v2468
        %v2623 = vadd.f32 %v2317, %v2473
        %v2624 = vadd.f32 %v2318, %v2478
        %v2625 = vadd.f32 %v2319, %v2483
        %v2626 = vadd.f32 %v2320, %v2488
        %v2627 = vadd.f32 %v2321, %v2493
        %v2628 = vadd.f32 %v2322, %v2498
        %v2629 = vadd.f32 %v2323, %v2503
        %v2630 = vadd.f32 %v2324, %v2508
        %v2631 = vadd.f32 %v2325, %v2513
        %v2632 = vadd.f32 %v2326, %v2518
        %v2633 = vadd.f32 %v2327, %v2523
        %v2634 = vadd.f32 %v2328, %v2528
        %v2635 = vadd.f32 %v2329, %v2533
        %v2636 = vadd.f32 %v2330, %v2538
        %v2637 = vadd.f32 %v2331, %v2543
        %v2638 = vadd.f32 %v2332, %v2548
        %v2639 = vadd.f32 %v2333, %v2553
        %v2640 = vadd.f32 %v2334, %v2558
        %v2641 = vadd.f32 %v2335, %v2563
        %v2642 = vadd.f32 %v2336, %v2568
        %v2643 = vadd.f32 %v2337, %v2573
        %v2644 = vadd.f32 %v2338, %v2578
        %v2645 = vadd.f32 %v2339, %v2583
        %v2646 = vadd.f32 %v2340, %v2588
        %v2647 = vadd.f32 %v2341, %v2593
        %v2648 = vadd.f32 %v2342, %v2598
        %v2649 = vadd.f32 %v2343, %v2603
        %v2650 = vadd.f32 %v2344, %v2608
        %v2651 = vadd.f32 %v2345, %v2613
        %v2652 = vadd.f32 %v2346, %v2618
        %v2653 = vld [vmem:[%s2040 + $0x2] sm:$0xff]
        %v2654 = vld [vmem:[%s2040 + $0xa] sm:$0xff]
        %v2655 = vld [vmem:[%s2040 + $0x1a] sm:$0xff]
        %v2656 = vld [vmem:[%s2040 + $0x22] sm:$0xff]
        %v2657 = vld [vmem:[%s2040 + $0x32] sm:$0xff]
        %v2658 = vld [vmem:[%s2040 + $0x3a] sm:$0xff]
        %v2659 = vld [vmem:[%s2040 + $0x4a] sm:$0xff]
        %v2660 = vld [vmem:[%s2040 + $0x52] sm:$0xff]
        %v2661 = vld [vmem:[%s2040 + $0x62] sm:$0xff]
        %v2662 = vld [vmem:[%s2040 + $0x6a] sm:$0xff]
        %v2663 = vld [vmem:[%s2040 + $0x7a] sm:$0xff]
        %v2664 = vld [vmem:[%s2040 + $0x82] sm:$0xff]
        %v2665 = vld [vmem:[%s2040 + $0x92] sm:$0xff]
        %v2666 = vld [vmem:[%s2040 + $0x9a] sm:$0xff]
        %v2667 = vld [vmem:[%s2040 + $0xaa] sm:$0xff]
        %v2668 = vld [vmem:[%s2040 + $0xb2] sm:$0xff]
        %v2669 = vld [vmem:[%s2040 + $0xc2] sm:$0xff]
        %v2670 = vld [vmem:[%s2040 + $0xca] sm:$0xff]
        %v2671 = vld [vmem:[%s2040 + $0xda] sm:$0xff]
        %v2672 = vld [vmem:[%s2040 + $0xe2] sm:$0xff]
        %v2673 = vld [vmem:[%s2040 + $0xf2] sm:$0xff]
        %v2674 = vld [vmem:[%s2040 + $0xfa] sm:$0xff]
        %v2675 = vld [vmem:[%s2040 + $0x10a] sm:$0xff]
        %v2676 = vld [vmem:[%s2040 + $0x112] sm:$0xff]
        %v2677 = vld [vmem:[%s2040 + $0x122] sm:$0xff]
        %v2678 = vld [vmem:[%s2040 + $0x12a] sm:$0xff]
        %v2679 = vld [vmem:[%s2040 + $0x13a] sm:$0xff]
        %v2680 = vld [vmem:[%s2040 + $0x142] sm:$0xff]
        %v2681 = vld [vmem:[%s2040 + $0x152] sm:$0xff]
        %v2682 = vld [vmem:[%s2040 + $0x15a] sm:$0xff]
        %v2683 = vld [vmem:[%s2040 + $0x16a] sm:$0xff]
        %v2684 = vld [vmem:[%s2040 + $0x172] sm:$0xff]
        %s2685 = scalar_lea.vmem [#allocation5], 1024
        %v2686 = vld [vmem:[%s2685] sm:$0xff]
        %v2687 = vld [vmem:[%s2685 + $0x8] sm:$0xff]
        %v2688 = vld [vmem:[%s2685 + $0x10] sm:$0xff]
        %v2689 = vld [vmem:[%s2685 + $0x18] sm:$0xff]
        %v2690 = vld [vmem:[%s2685 + $0x20] sm:$0xff]
        %v2691 = vld [vmem:[%s2685 + $0x28] sm:$0xff]
        %v2692 = vld [vmem:[%s2685 + $0x30] sm:$0xff]
        %v2693 = vld [vmem:[%s2685 + $0x38] sm:$0xff]
        %v2694 = vld [vmem:[%s2685 + $0x40] sm:$0xff]
        %v2695 = vld [vmem:[%s2685 + $0x48] sm:$0xff]
        %v2696 = vld [vmem:[%s2685 + $0x50] sm:$0xff]
        %v2697 = vld [vmem:[%s2685 + $0x58] sm:$0xff]
        %v2698 = vld [vmem:[%s2685 + $0x60] sm:$0xff]
        %v2699 = vld [vmem:[%s2685 + $0x68] sm:$0xff]
        %v2700 = vld [vmem:[%s2685 + $0x70] sm:$0xff]
        %v2701 = vld [vmem:[%s2685 + $0x78] sm:$0xff]
        %2702 = vmatprep.subr.mxu0 0.0
        %2703 = vmatpush1.msra.mxu0 %v2686
        %2704 = vmatprep.subr.mxu0 0.0
        %2705 = vmatpush1.msra.mxu0 %v2687
        %2706 = vmatprep.subr.mxu0 0.0
        %2707 = vmatpush1.msra.mxu0 %v2688
        %2708 = vmatprep.subr.mxu0 0.0
        %2709 = vmatpush1.msra.mxu0 %v2689
        %2710 = vmatprep.subr.mxu0 0.0
        %2711 = vmatpush1.msra.mxu0 %v2690
        %2712 = vmatprep.subr.mxu0 0.0
        %2713 = vmatpush1.msra.mxu0 %v2691
        %2714 = vmatprep.subr.mxu0 0.0
        %2715 = vmatpush1.msra.mxu0 %v2692
        %2716 = vmatprep.subr.mxu0 0.0
        %2717 = vmatpush1.msra.mxu0 %v2693
        %2718 = vmatprep.subr.mxu0 0.0
        %2719 = vmatpush1.msra.mxu0 %v2694
        %2720 = vmatprep.subr.mxu0 0.0
        %2721 = vmatpush1.msra.mxu0 %v2695
        %2722 = vmatprep.subr.mxu0 0.0
        %2723 = vmatpush1.msra.mxu0 %v2696
        %2724 = vmatprep.subr.mxu0 0.0
        %2725 = vmatpush1.msra.mxu0 %v2697
        %2726 = vmatprep.subr.mxu0 0.0
        %2727 = vmatpush1.msra.mxu0 %v2698
        %2728 = vmatprep.subr.mxu0 0.0
        %2729 = vmatpush1.msra.mxu0 %v2699
        %2730 = vmatprep.subr.mxu0 0.0
        %2731 = vmatpush1.msra.mxu0 %v2700
        %2732 = vmatprep.subr.mxu0 0.0
        %2733 = vmatpush1.msra.mxu0 %v2701
        %2734 = vmatprep.subr.mxu0 0.0
        %2735 = vmatpush1.msra.mxu0 0.0
        %2736 = vmatprep.subr.mxu0 0.0
        %2737 = vmatpush1.msra.mxu0 0.0
        %2738 = vmatprep.subr.mxu0 0.0
        %2739 = vmatpush1.msra.mxu0 0.0
        %2740 = vmatprep.subr.mxu0 0.0
        %2741 = vmatpush1.msra.mxu0 0.0
        %2742 = vmatprep.subr.mxu0 0.0
        %2743 = vmatpush1.msra.mxu0 0.0
        %2744 = vmatprep.subr.mxu0 0.0
        %2745 = vmatpush1.msra.mxu0 0.0
        %2746 = vmatprep.subr.mxu0 0.0
        %2747 = vmatpush1.msra.mxu0 0.0
        %2748 = vmatprep.subr.mxu0 0.0
        %2749 = vmatpush1.msra.mxu0 0.0
        %2750 = vmatprep.subr.mxu0 0.0
        %2751 = vmatpush1.msra.mxu0 0.0
        %2752 = vmatprep.subr.mxu0 0.0
        %2753 = vmatpush1.msra.mxu0 0.0
        %2754 = vmatprep.subr.mxu0 0.0
        %2755 = vmatpush1.msra.mxu0 0.0
        %2756 = vmatprep.subr.mxu0 0.0
        %2757 = vmatpush1.msra.mxu0 0.0
        %2758 = vmatprep.subr.mxu0 0.0
        %2759 = vmatpush1.msra.mxu0 0.0
        %2760 = vmatprep.subr.mxu0 0.0
        %2761 = vmatpush1.msra.mxu0 0.0
        %2762 = vmatprep.subr.mxu0 0.0
        %2763 = vmatpush1.msra.mxu0 0.0
        %2764 = vmatprep.subr.mxu0 0.0
        %2765 = vmatpush1.msra.mxu0 0.0
        %2766 = vmatprep.mubr.f32.mxu0 0.0
        %2767 = vmatmul.mubr.f32.gmra.mrb[0].mxu0 %v2653
        %v2768 = vpop.f32.mrb[0].mxu0
        %v2769 = vadd.f32 0.0, %v2768
        %v2770 = vpop.f32.mrb[0].mxu0
        %2771 = vmatprep.mubr.f32.mxu0 0.0
        %2772 = vmatmul.mubr.f32.gmra.mrb[0].mxu0 %v2654
        %v2773 = vpop.f32.mrb[0].mxu0
        %v2774 = vadd.f32 0.0, %v2773
        %v2775 = vpop.f32.mrb[0].mxu0
        %2776 = vmatprep.mubr.f32.mxu0 0.0
        %2777 = vmatmul.mubr.f32.gmra.mrb[0].mxu0 %v2655
        %v2778 = vpop.f32.mrb[0].mxu0
        %v2779 = vadd.f32 0.0, %v2778
        %v2780 = vpop.f32.mrb[0].mxu0
        %2781 = vmatprep.mubr.f32.mxu0 0.0
        %2782 = vmatmul.mubr.f32.gmra.mrb[0].mxu0 %v2656
        %v2783 = vpop.f32.mrb[0].mxu0
        %v2784 = vadd.f32 0.0, %v2783
        %v2785 = vpop.f32.mrb[0].mxu0
        %2786 = vmatprep.mubr.f32.mxu0 0.0
        %2787 = vmatmul.mubr.f32.gmra.mrb[0].mxu0 %v2657
        %v2788 = vpop.f32.mrb[0].mxu0
        %v2789 = vadd.f32 0.0, %v2788
        %v2790 = vpop.f32.mrb[0].mxu0
        %2791 = vmatprep.mubr.f32.mxu0 0.0
        %2792 = vmatmul.mubr.f32.gmra.mrb[0].mxu0 %v2658
        %v2793 = vpop.f32.mrb[0].mxu0
        %v2794 = vadd.f32 0.0, %v2793
        %v2795 = vpop.f32.mrb[0].mxu0
        %2796 = vmatprep.mubr.f32.mxu0 0.0
        %2797 = vmatmul.mubr.f32.gmra.mrb[0].mxu0 %v2659
        %v2798 = vpop.f32.mrb[0].mxu0
        %v2799 = vadd.f32 0.0, %v2798
        %v2800 = vpop.f32.mrb[0].mxu0
        %2801 = vmatprep.mubr.f32.mxu0 0.0
        %2802 = vmatmul.mubr.f32.gmra.mrb[0].mxu0 %v2660
        %v2803 = vpop.f32.mrb[0].mxu0
        %v2804 = vadd.f32 0.0, %v2803
        %v2805 = vpop.f32.mrb[0].mxu0
        %2806 = vmatprep.mubr.f32.mxu0 0.0
        %2807 = vmatmul.mubr.f32.gmra.mrb[0].mxu0 %v2661
        %v2808 = vpop.f32.mrb[0].mxu0
        %v2809 = vadd.f32 0.0, %v2808
        %v2810 = vpop.f32.mrb[0].mxu0
        %2811 = vmatprep.mubr.f32.mxu0 0.0
        %2812 = vmatmul.mubr.f32.gmra.mrb[0].mxu0 %v2662
        %v2813 = vpop.f32.mrb[0].mxu0
        %v2814 = vadd.f32 0.0, %v2813
        %v2815 = vpop.f32.mrb[0].mxu0
        %2816 = vmatprep.mubr.f32.mxu0 0.0
        %2817 = vmatmul.mubr.f32.gmra.mrb[0].mxu0 %v2663
        %v2818 = vpop.f32.mrb[0].mxu0
        %v2819 = vadd.f32 0.0, %v2818
        %v2820 = vpop.f32.mrb[0].mxu0
        %2821 = vmatprep.mubr.f32.mxu0 0.0
        %2822 = vmatmul.mubr.f32.gmra.mrb[0].mxu0 %v2664
        %v2823 = vpop.f32.mrb[0].mxu0
        %v2824 = vadd.f32 0.0, %v2823
        %v2825 = vpop.f32.mrb[0].mxu0
        %2826 = vmatprep.mubr.f32.mxu0 0.0
        %2827 = vmatmul.mubr.f32.gmra.mrb[0].mxu0 %v2665
        %v2828 = vpop.f32.mrb[0].mxu0
        %v2829 = vadd.f32 0.0, %v2828
        %v2830 = vpop.f32.mrb[0].mxu0
        %2831 = vmatprep.mubr.f32.mxu0 0.0
        %2832 = vmatmul.mubr.f32.gmra.mrb[0].mxu0 %v2666
        %v2833 = vpop.f32.mrb[0].mxu0
        %v2834 = vadd.f32 0.0, %v2833
        %v2835 = vpop.f32.mrb[0].mxu0
        %2836 = vmatprep.mubr.f32.mxu0 0.0
        %2837 = vmatmul.mubr.f32.gmra.mrb[0].mxu0 %v2667
        %v2838 = vpop.f32.mrb[0].mxu0
        %v2839 = vadd.f32 0.0, %v2838
        %v2840 = vpop.f32.mrb[0].mxu0
        %2841 = vmatprep.mubr.f32.mxu0 0.0
        %2842 = vmatmul.mubr.f32.gmra.mrb[0].mxu0 %v2668
        %v2843 = vpop.f32.mrb[0].mxu0
        %v2844 = vadd.f32 0.0, %v2843
        %v2845 = vpop.f32.mrb[0].mxu0
        %2846 = vmatprep.mubr.f32.mxu0 0.0
        %2847 = vmatmul.mubr.f32.gmra.mrb[0].mxu0 %v2669
        %v2848 = vpop.f32.mrb[0].mxu0
        %v2849 = vadd.f32 0.0, %v2848
        %v2850 = vpop.f32.mrb[0].mxu0
        %2851 = vmatprep.mubr.f32.mxu0 0.0
        %2852 = vmatmul.mubr.f32.gmra.mrb[0].mxu0 %v2670
        %v2853 = vpop.f32.mrb[0].mxu0
        %v2854 = vadd.f32 0.0, %v2853
        %v2855 = vpop.f32.mrb[0].mxu0
        %2856 = vmatprep.mubr.f32.mxu0 0.0
        %2857 = vmatmul.mubr.f32.gmra.mrb[0].mxu0 %v2671
        %v2858 = vpop.f32.mrb[0].mxu0
        %v2859 = vadd.f32 0.0, %v2858
        %v2860 = vpop.f32.mrb[0].mxu0
        %2861 = vmatprep.mubr.f32.mxu0 0.0
        %2862 = vmatmul.mubr.f32.gmra.mrb[0].mxu0 %v2672
        %v2863 = vpop.f32.mrb[0].mxu0
        %v2864 = vadd.f32 0.0, %v2863
        %v2865 = vpop.f32.mrb[0].mxu0
        %2866 = vmatprep.mubr.f32.mxu0 0.0
        %2867 = vmatmul.mubr.f32.gmra.mrb[0].mxu0 %v2673
        %v2868 = vpop.f32.mrb[0].mxu0
        %v2869 = vadd.f32 0.0, %v2868
        %v2870 = vpop.f32.mrb[0].mxu0
        %2871 = vmatprep.mubr.f32.mxu0 0.0
        %2872 = vmatmul.mubr.f32.gmra.mrb[0].mxu0 %v2674
        %v2873 = vpop.f32.mrb[0].mxu0
        %v2874 = vadd.f32 0.0, %v2873
        %v2875 = vpop.f32.mrb[0].mxu0
        %2876 = vmatprep.mubr.f32.mxu0 0.0
        %2877 = vmatmul.mubr.f32.gmra.mrb[0].mxu0 %v2675
        %v2878 = vpop.f32.mrb[0].mxu0
        %v2879 = vadd.f32 0.0, %v2878
        %v2880 = vpop.f32.mrb[0].mxu0
        %2881 = vmatprep.mubr.f32.mxu0 0.0
        %2882 = vmatmul.mubr.f32.gmra.mrb[0].mxu0 %v2676
        %v2883 = vpop.f32.mrb[0].mxu0
        %v2884 = vadd.f32 0.0, %v2883
        %v2885 = vpop.f32.mrb[0].mxu0
        %2886 = vmatprep.mubr.f32.mxu0 0.0
        %2887 = vmatmul.mubr.f32.gmra.mrb[0].mxu0 %v2677
        %v2888 = vpop.f32.mrb[0].mxu0
        %v2889 = vadd.f32 0.0, %v2888
        %v2890 = vpop.f32.mrb[0].mxu0
        %2891 = vmatprep.mubr.f32.mxu0 0.0
        %2892 = vmatmul.mubr.f32.gmra.mrb[0].mxu0 %v2678
        %v2893 = vpop.f32.mrb[0].mxu0
        %v2894 = vadd.f32 0.0, %v2893
        %v2895 = vpop.f32.mrb[0].mxu0
        %2896 = vmatprep.mubr.f32.mxu0 0.0
        %2897 = vmatmul.mubr.f32.gmra.mrb[0].mxu0 %v2679
        %v2898 = vpop.f32.mrb[0].mxu0
        %v2899 = vadd.f32 0.0, %v2898
        %v2900 = vpop.f32.mrb[0].mxu0
        %2901 = vmatprep.mubr.f32.mxu0 0.0
        %2902 = vmatmul.mubr.f32.gmra.mrb[0].mxu0 %v2680
        %v2903 = vpop.f32.mrb[0].mxu0
        %v2904 = vadd.f32 0.0, %v2903
        %v2905 = vpop.f32.mrb[0].mxu0
        %2906 = vmatprep.mubr.f32.mxu0 0.0
        %2907 = vmatmul.mubr.f32.gmra.mrb[0].mxu0 %v2681
        %v2908 = vpop.f32.mrb[0].mxu0
        %v2909 = vadd.f32 0.0, %v2908
        %v2910 = vpop.f32.mrb[0].mxu0
        %2911 = vmatprep.mubr.f32.mxu0 0.0
        %2912 = vmatmul.mubr.f32.gmra.mrb[0].mxu0 %v2682
        %v2913 = vpop.f32.mrb[0].mxu0
        %v2914 = vadd.f32 0.0, %v2913
        %v2915 = vpop.f32.mrb[0].mxu0
        %2916 = vmatprep.mubr.f32.mxu0 0.0
        %2917 = vmatmul.mubr.f32.gmra.mrb[0].mxu0 %v2683
        %v2918 = vpop.f32.mrb[0].mxu0
        %v2919 = vadd.f32 0.0, %v2918
        %v2920 = vpop.f32.mrb[0].mxu0
        %2921 = vmatprep.mubr.f32.mxu0 0.0
        %2922 = vmatmul.mubr.f32.gmra.mrb[0].mxu0 %v2684
        %v2923 = vpop.f32.mrb[0].mxu0
        %v2924 = vadd.f32 0.0, %v2923
        %v2925 = vpop.f32.mrb[0].mxu0
        %2926 = vdwg.mxu0
        %v2927 = vadd.f32 %v2621, %v2769
        %v2928 = vadd.f32 %v2622, %v2774
        %v2929 = vadd.f32 %v2623, %v2779
        %v2930 = vadd.f32 %v2624, %v2784
        %v2931 = vadd.f32 %v2625, %v2789
        %v2932 = vadd.f32 %v2626, %v2794
        %v2933 = vadd.f32 %v2627, %v2799
        %v2934 = vadd.f32 %v2628, %v2804
        %v2935 = vadd.f32 %v2629, %v2809
        %v2936 = vadd.f32 %v2630, %v2814
        %v2937 = vadd.f32 %v2631, %v2819
        %v2938 = vadd.f32 %v2632, %v2824
        %v2939 = vadd.f32 %v2633, %v2829
        %v2940 = vadd.f32 %v2634, %v2834
        %v2941 = vadd.f32 %v2635, %v2839
        %v2942 = vadd.f32 %v2636, %v2844
        %v2943 = vadd.f32 %v2637, %v2849
        %v2944 = vadd.f32 %v2638, %v2854
        %v2945 = vadd.f32 %v2639, %v2859
        %v2946 = vadd.f32 %v2640, %v2864
        %v2947 = vadd.f32 %v2641, %v2869
        %v2948 = vadd.f32 %v2642, %v2874
        %v2949 = vadd.f32 %v2643, %v2879
        %v2950 = vadd.f32 %v2644, %v2884
        %v2951 = vadd.f32 %v2645, %v2889
        %v2952 = vadd.f32 %v2646, %v2894
        %v2953 = vadd.f32 %v2647, %v2899
        %v2954 = vadd.f32 %v2648, %v2904
        %v2955 = vadd.f32 %v2649, %v2909
        %v2956 = vadd.f32 %v2650, %v2914
        %v2957 = vadd.f32 %v2651, %v2919
        %v2958 = vadd.f32 %v2652, %v2924
        %v2959 = vld [vmem:[#allocation7] sm:$0x1]
        %v2961 = vlaneseq
        %v2962 = vshrl.u32 %v2961, 7
        %v2963 = vsub.s32 0, %v2962
        %v2964 = vrot.slane %v2959, %v2963
        %v2966 = vadd.f32 %v2927, %v2964
        %v2967 = vadd.f32 %v2928, %v2964
        %v2968 = vadd.f32 %v2929, %v2964
        %v2969 = vadd.f32 %v2930, %v2964
        %v2970 = vadd.f32 %v2931, %v2964
        %v2971 = vadd.f32 %v2932, %v2964
        %v2972 = vadd.f32 %v2933, %v2964
        %v2973 = vadd.f32 %v2934, %v2964
        %v2974 = vadd.f32 %v2935, %v2964
        %v2975 = vadd.f32 %v2936, %v2964
        %v2976 = vadd.f32 %v2937, %v2964
        %v2977 = vadd.f32 %v2938, %v2964
        %v2978 = vadd.f32 %v2939, %v2964
        %v2979 = vadd.f32 %v2940, %v2964
        %v2980 = vadd.f32 %v2941, %v2964
        %v2981 = vadd.f32 %v2942, %v2964
        %v2982 = vadd.f32 %v2943, %v2964
        %v2983 = vadd.f32 %v2944, %v2964
        %v2984 = vadd.f32 %v2945, %v2964
        %v2985 = vadd.f32 %v2946, %v2964
        %v2986 = vadd.f32 %v2947, %v2964
        %v2987 = vadd.f32 %v2948, %v2964
        %v2988 = vadd.f32 %v2949, %v2964
        %v2989 = vadd.f32 %v2950, %v2964
        %v2990 = vadd.f32 %v2951, %v2964
        %v2991 = vadd.f32 %v2952, %v2964
        %v2992 = vadd.f32 %v2953, %v2964
        %v2993 = vadd.f32 %v2954, %v2964
        %v2994 = vadd.f32 %v2955, %v2964
        %v2995 = vadd.f32 %v2956, %v2964
        %v2996 = vadd.f32 %v2957, %v2964
        %v2997 = vadd.f32 %v2958, %v2964
        %v2998 = vmax.f32 %v2966, 0.0
        %v2999 = vmax.f32 %v2967, 0.0
        %v3000 = vmax.f32 %v2968, 0.0
        %v3001 = vmax.f32 %v2969, 0.0
        %v3002 = vmax.f32 %v2970, 0.0
        %v3003 = vmax.f32 %v2971, 0.0
        %v3004 = vmax.f32 %v2972, 0.0
        %v3005 = vmax.f32 %v2973, 0.0
        %v3006 = vmax.f32 %v2974, 0.0
        %v3007 = vmax.f32 %v2975, 0.0
        %v3008 = vmax.f32 %v2976, 0.0
        %v3009 = vmax.f32 %v2977, 0.0
        %v3010 = vmax.f32 %v2978, 0.0
        %v3011 = vmax.f32 %v2979, 0.0
        %v3012 = vmax.f32 %v2980, 0.0
        %v3013 = vmax.f32 %v2981, 0.0
        %v3014 = vmax.f32 %v2982, 0.0
        %v3015 = vmax.f32 %v2983, 0.0
        %v3016 = vmax.f32 %v2984, 0.0
        %v3017 = vmax.f32 %v2985, 0.0
        %v3018 = vmax.f32 %v2986, 0.0
        %v3019 = vmax.f32 %v2987, 0.0
        %v3020 = vmax.f32 %v2988, 0.0
        %v3021 = vmax.f32 %v2989, 0.0
        %v3022 = vmax.f32 %v2990, 0.0
        %v3023 = vmax.f32 %v2991, 0.0
        %v3024 = vmax.f32 %v2992, 0.0
        %v3025 = vmax.f32 %v2993, 0.0
        %v3026 = vmax.f32 %v2994, 0.0
        %v3027 = vmax.f32 %v2995, 0.0
        %v3028 = vmax.f32 %v2996, 0.0
        %v3029 = vmax.f32 %v2997, 0.0
        %3030 = vst [vmem:[%s265] sm:$0xff] %v2998
        %3031 = vst [vmem:[%s265 + $0x8] sm:$0xff] %v2999
        %3032 = vst [vmem:[%s265 + $0x10] sm:$0xff] %v3000
        %3033 = vst [vmem:[%s265 + $0x18] sm:$0xff] %v3001
        %3034 = vst [vmem:[%s265 + $0x20] sm:$0xff] %v3002
        %3035 = vst [vmem:[%s265 + $0x28] sm:$0xff] %v3003
        %3036 = vst [vmem:[%s265 + $0x30] sm:$0xff] %v3004
        %3037 = vst [vmem:[%s265 + $0x38] sm:$0xff] %v3005
        %3038 = vst [vmem:[%s265 + $0x40] sm:$0xff] %v3006
        %3039 = vst [vmem:[%s265 + $0x48] sm:$0xff] %v3007
        %3040 = vst [vmem:[%s265 + $0x50] sm:$0xff] %v3008
        %3041 = vst [vmem:[%s265 + $0x58] sm:$0xff] %v3009
        %3042 = vst [vmem:[%s265 + $0x60] sm:$0xff] %v3010
        %3043 = vst [vmem:[%s265 + $0x68] sm:$0xff] %v3011
        %3044 = vst [vmem:[%s265 + $0x70] sm:$0xff] %v3012
        %3045 = vst [vmem:[%s265 + $0x78] sm:$0xff] %v3013
        %3046 = vst [vmem:[%s265 + $0x80] sm:$0xff] %v3014
        %3047 = vst [vmem:[%s265 + $0x88] sm:$0xff] %v3015
        %3048 = vst [vmem:[%s265 + $0x90] sm:$0xff] %v3016
        %3049 = vst [vmem:[%s265 + $0x98] sm:$0xff] %v3017
        %3050 = vst [vmem:[%s265 + $0xa0] sm:$0xff] %v3018
        %3051 = vst [vmem:[%s265 + $0xa8] sm:$0xff] %v3019
        %3052 = vst [vmem:[%s265 + $0xb0] sm:$0xff] %v3020
        %3053 = vst [vmem:[%s265 + $0xb8] sm:$0xff] %v3021
        %3054 = vst [vmem:[%s265 + $0xc0] sm:$0xff] %v3022
        %3055 = vst [vmem:[%s265 + $0xc8] sm:$0xff] %v3023
        %3056 = vst [vmem:[%s265 + $0xd0] sm:$0xff] %v3024
        %3057 = vst [vmem:[%s265 + $0xd8] sm:$0xff] %v3025
        %3058 = vst [vmem:[%s265 + $0xe0] sm:$0xff] %v3026
        %3059 = vst [vmem:[%s265 + $0xe8] sm:$0xff] %v3027
        %3060 = vst [vmem:[%s265 + $0xf0] sm:$0xff] %v3028
        %3061 = vst [vmem:[%s265 + $0xf8] sm:$0xff] %v3029
        %s3062 = sand.u32 %s141, 1
        %s3063 = scalar_lea.sflag [#allocation4], %s3062
        %s3064 = sand.u32 %s141, 1
        %s3065 = smul.addr %s3064, 256
        %s3066 = scalar_lea.vmem [#allocation8], %s3065
        // Predicated region
        $region45: #{tpu_custom_call.1} parent=31 // pred_check
          %p3067 = pneg %p151
        $region46: #{tpu_custom_call.1} parent=31 // pred_check_branch
          %3069 = sbr.rel (%p3067) target = $region48
        $region47: #{tpu_custom_call.1} parent=31 // pred_region
          %s3070 = smul.u32 16, %s29
          %s3072 = ssub.s32 4096, 4096
          %3073 = vsyncadd %s3063, %s3072
          %s3074 = smul.addr %s3070, 2
          %s3075 = sadd.s32 %s28, %s3074
          %s3076 = smul.addr %s27, 32
          %s3077 = sadd.s32 %s3075, %s3076
          %s3078 = smul.addr %s3077, 128
          %s3079 = scalar_lea.hbm %s3, %s3078
          %s3080 = sshll.u32 %s3066, 4
          %s3081 = int_to_ptr.vmem [resolvable:$true] %s3080
          %3086 = dma.vmem_to_hbm [thread:$0]  %s3081, 4096, %s3079, %s3063, 128, 128, 8
        $region48: #{tpu_custom_call.1} parent=31 // pred_fallthru
          _
      $region32: #{tpu_custom_call.1} parent=5 // pred_fallthru
        _
      %p3087 = scmp.le.s32.totalorder 2, %s16
      // Predicated region
      $region49: #{tpu_custom_call.1} parent=5 // pred_check
        %p3088 = pneg %p3087
      $region50: #{tpu_custom_call.1} parent=5 // pred_check_branch
        %3090 = sbr.rel (%p3088) target = $region52
      $region51: #{tpu_custom_call.1} parent=5 // pred_region
        %s3091 = ssub.s32 %s16, 2
        // Predicated region
        $region53: #{tpu_custom_call.1} parent=51 // pred_check
          %p3092 = pneg %p157
        $region54: #{tpu_custom_call.1} parent=51 // pred_check_branch
          %3094 = sbr.rel (%p3092) target = $region56
        $region55: #{tpu_custom_call.1} parent=51 // pred_region
          %s3095 = sand.u32 %s142, 1
          %s3096 = scalar_lea.sflag [#allocation4], %s3095
          %s3097 = sand.u32 %s142, 1
          %s3098 = smul.addr %s3097, 256
          %s3099 = scalar_lea.vmem [#allocation8], %s3098
          %3100 = dma.done %s3096, 4096
        $region56: #{tpu_custom_call.1} parent=51 // pred_fallthru
          _
      $region52: #{tpu_custom_call.1} parent=5 // pred_fallthru
        _
    $region6: #{tpu_custom_call.1} parent=1 // loop_footer
      %s20 = sadd.s32 1, %s16
    $region7: #{tpu_custom_call.1} parent=1 // loop_footer_branch
      %15 = sbr.rel target = $region3
    $region8: #{tpu_custom_call.1} parent=1 // loop_exit
      _
    %3101 = vsyncpa [#allocation3], 1
    %s3102 = scalar_lea.sflag [#allocation3], 1
    %3103 = vsyncpa %s3102, 1
    %3104 = vsyncpa [#allocation6], 1
    %3105 = vsyncpa [#allocation4], 1
    %s3106 = scalar_lea.sflag [#allocation4], 1
    %3107 = vsyncpa %s3106, 1

</llo_original>
